<compile_context>
chip_gen: v5e
topology: v5e:2x2
jax: 0.10.0
libtpu: 0.0.40
codegen_flags: <defaults>
</compile_context>

<pallas_src>
import functools

import jax
import jax.numpy as jnp
from jax.experimental import pallas as pl
from jax.experimental.pallas import tpu as pltpu


def _ctx_rnn_kernel(B, T, C, V, precision,
                    scalars_ref, ce_ref, ae_ref, tgt_ref, w2_ref,
                    logits_ref, loss_ref,
                    ctx_all_scr, z_scr):
    """Whole forward pass in one invocation (grid = ())."""
    M = T * B
    alpha = scalars_ref[0]
    beta_mult = scalars_ref[1]
    beta_power = scalars_ref[2]

    # ---------------- sequential gated context recurrence (VPU only) --------
    # Fully unrolled: T is small and every slice / store offset is static.
    ctx = jnp.zeros((B, C), jnp.float32)            # init_hidden
    for t in range(T):
        ce_t = ce_ref[t * B:(t + 1) * B, :]                           # (B, C)
        ce_n = jnp.sqrt(jnp.sum(ce_t * ce_t, axis=1, keepdims=True))  # (B, 1)
        ctx_n = jnp.sqrt(jnp.sum(ctx * ctx, axis=1, keepdims=True))   # (B, 1)
        beta = alpha * (beta_mult * (ce_n / (ce_n + ctx_n))) ** beta_power
        beta = jnp.clip(beta, 0.0, 1.0)
        ctx = (1.0 - beta) * ctx + beta * ce_t
        ctx_all_scr[t * B:(t + 1) * B, :] = ctx       # stash post-update ctx

    # ---------------- bilinear form: ONE batched MXU matmul ------------------
    # out[m, v] = sum_{c, c'} W[v*C + c, c'] * ae[m, c] * ctx[m, c']
    #           = (kron_row(ae, ctx) @ W2)[m, v],   W2[(c, c'), v] = W[v*C+c, c']
    ctx_all = ctx_all_scr[...]                        # (M, C)
    ae_all = ae_ref[...]                              # (M, C)
    for c in range(C):                                # per-row outer product (VPU)
        z_scr[:, c * C:(c + 1) * C] = ae_all[:, c:c + 1] * ctx_all
    z = z_scr[...]                                    # (M, C*C)

    out = jnp.dot(z, w2_ref[...],
                  preferred_element_type=jnp.float32,
                  precision=precision)                # (M, V)  M=T*B, K=C*C
    logits_ref[...] = out

    # ---------------- cross-entropy over all (t, b) rows at once ------------
    tgt = tgt_ref[...]                                                # (M, 1) i32
    col = jax.lax.broadcasted_iota(jnp.int32, (M, V), 1)
    tgt_logit = jnp.sum(jnp.where(col == tgt, out, 0.0),
                        axis=1, keepdims=True)                        # (M, 1)
    row_max = jnp.max(out, axis=1, keepdims=True)
    lse = row_max + jnp.log(jnp.sum(jnp.exp(out - row_max),
                                    axis=1, keepdims=True))           # (M, 1)
    loss_ref[...] = jnp.sum(lse - tgt_logit, axis=0, keepdims=True) * (1.0 / M)


def context_rnn_net_forward(x, targets, params,
                            precision=jax.lax.Precision.HIGHEST):
    """Equivalent of ContextRNNNet.forward(x, targets) -> (logits, loss).

    x:       (T, B) int32 tokens (seq-major, same as the PyTorch RNN input)
    targets: (B, T) int32
    """
    emb_ctx = params["embedding2context"].astype(jnp.float32)     # (V, C)
    emb_act = params["embedding2actionable"].astype(jnp.float32)  # (V, C)
    w_action = params["context2action_map"].astype(jnp.float32)   # (V*C, C)

    T, B = x.shape
    V, C = emb_ctx.shape
    M = T * B

    # Glue: embedding gathers, flattened (t, b) -> row m = t*B + b.
    ce_flat = jnp.take(emb_ctx, x, axis=0).reshape(M, C)
    ae_flat = jnp.take(emb_act, x, axis=0).reshape(M, C)
    # Targets as int32 indices (no (T,B,V) one-hot tensor).
    tgt_flat = targets.T.reshape(M, 1).astype(jnp.int32)

    # Bilinear weight: W2[c*C + c', v] = W[v*C + c, c']   (plain-JAX, free).
    w2 = w_action.reshape(V, C, C).transpose(1, 2, 0).reshape(C * C, V)

    scalars = jnp.array(
        [params["alpha"], params["beta_mult"], params["beta_power"]],
        dtype=jnp.float32)

    kernel = functools.partial(_ctx_rnn_kernel, B, T, C, V, precision)

    logits_flat, loss = pl.pallas_call(
        kernel,
        out_shape=(jax.ShapeDtypeStruct((M, V), jnp.float32),
                   jax.ShapeDtypeStruct((1, 1), jnp.float32)),
        in_specs=[
            pl.BlockSpec(memory_space=pltpu.MemorySpace.SMEM),   # alpha/beta scalars
            pl.BlockSpec(memory_space=pltpu.MemorySpace.VMEM),   # ce_flat  (M, C)
            pl.BlockSpec(memory_space=pltpu.MemorySpace.VMEM),   # ae_flat  (M, C)
            pl.BlockSpec(memory_space=pltpu.MemorySpace.VMEM),   # targets  (M, 1)
            pl.BlockSpec(memory_space=pltpu.MemorySpace.VMEM),   # W2 (C*C, V)
        ],
        out_specs=(
            pl.BlockSpec(memory_space=pltpu.MemorySpace.VMEM),   # logits (M, V)
            pl.BlockSpec(memory_space=pltpu.MemorySpace.VMEM),   # loss (1, 1)
        ),
        scratch_shapes=[
            pltpu.VMEM((M, C), jnp.float32),       # stacked contexts
            pltpu.VMEM((M, C * C), jnp.float32),   # kron(ae, ctx) rows
        ],
    )(scalars, ce_flat, ae_flat, tgt_flat, w2)

    return logits_flat.reshape(T, B, V), loss[0, 0]


def reference_forward(x, targets, params):
    """Pure-JAX reference mirroring the PyTorch forward exactly."""
    hp = jax.lax.Precision.HIGHEST
    emb_ctx = params["embedding2context"]
    emb_act = params["embedding2actionable"]
    w_action = params["context2action_map"]
    alpha, bmult, bpow = (params["alpha"], params["beta_mult"],
                          params["beta_power"])
    T, B = x.shape
    V, C = emb_ctx.shape
    ctx = jnp.zeros((B, C), jnp.float32)
    logits = []
    for t in range(T):
        ce = emb_ctx[x[t]]
        ae = emb_act[x[t]]
        ce_n = jnp.linalg.norm(ce, axis=1, keepdims=True)
        ctx_n = jnp.linalg.norm(ctx, axis=1, keepdims=True)
        beta = alpha * (bmult * (ce_n / (ce_n + ctx_n))) ** bpow
        beta = jnp.clip(beta, 0.0, 1.0)
        ctx = (1.0 - beta) * ctx + beta * ce
        am = jnp.dot(ctx, w_action.T, precision=hp).reshape(B, V, C)
        logits.append(jnp.einsum("bvc,bc->bv", am, ae, precision=hp))
    logits = jnp.stack(logits, axis=0)                               # (T, B, V)
    lse = jax.scipy.special.logsumexp(logits, axis=-1)               # (T, B)
    tl = jnp.take_along_axis(logits, targets.T[..., None], axis=-1)[..., 0]
    loss = jnp.mean(lse - tl)
    return logits, loss


if __name__ == "__main__":
    # Small, deterministic setup.
    CONTEXT_SIZE = 32   # C
    VOCAB_SIZE = 16     # V
    SEQ_LEN = 8         # T
    BATCH = 2           # B

    key = jax.random.PRNGKey(0)
    k_ec, k_ea, k_w, k_x, k_t = jax.random.split(key, 5)

    params = {
        # nn.Embedding(vocab, context) -> weight (V, C)
        "embedding2context": jax.random.normal(
            k_ec, (VOCAB_SIZE, CONTEXT_SIZE), dtype=jnp.float32),
        "embedding2actionable": jax.random.normal(
            k_ea, (VOCAB_SIZE, CONTEXT_SIZE), dtype=jnp.float32),
        # nn.Linear(C, C*V, bias=False) -> weight (V*C, C)
        "context2action_map": (jax.random.normal(
            k_w, (VOCAB_SIZE * CONTEXT_SIZE, CONTEXT_SIZE),
            dtype=jnp.float32) / jnp.sqrt(jnp.float32(CONTEXT_SIZE))),
        # dt=None -> alpha = 1.0 (buffer); beta params init to 1.0
        "alpha": 1.0,
        "beta_mult": 1.0,
        "beta_power": 1.0,
        # NOTE: context2context_map exists in __init__ but is unused in forward.
    }

    x = jax.random.randint(k_x, (SEQ_LEN, BATCH), 0, VOCAB_SIZE, dtype=jnp.int32)
    targets = jax.random.randint(k_t, (BATCH, SEQ_LEN), 0, VOCAB_SIZE,
                                 dtype=jnp.int32)

    logits, loss = jax.jit(context_rnn_net_forward)(x, targets, params)
    jax.block_until_ready((logits, loss))

    ref_logits, ref_loss = reference_forward(x, targets, params)
    assert logits.shape == (SEQ_LEN, BATCH, VOCAB_SIZE)
    assert jnp.allclose(logits, ref_logits, rtol=1e-3, atol=1e-3), "logits mismatch"
    assert jnp.allclose(loss, ref_loss, rtol=1e-3, atol=1e-3), "loss mismatch"

    print("KERNEL_OK")
</pallas_src>

<mosaic_0001>
module attributes {stable_mosaic.version = 11 : i64} {
  func.func @_ctx_rnn_kernel(%arg0: memref<3xf32, #tpu.memory_space<smem>>, %arg1: memref<16x32xf32, #tpu.memory_space<vmem>>, %arg2: memref<16x32xf32, #tpu.memory_space<vmem>>, %arg3: memref<16x1xi32, #tpu.memory_space<vmem>>, %arg4: memref<1024x16xf32, #tpu.memory_space<vmem>>, %arg5: memref<16x16xf32, #tpu.memory_space<vmem>>, %arg6: memref<1x1xf32, #tpu.memory_space<vmem>>, %arg7: memref<16x32xf32, #tpu.memory_space<vmem>>, %arg8: memref<16x1024xf32, #tpu.memory_space<vmem>>) attributes {dimension_semantics = [], scalar_prefetch = 0 : i64, scratch_operands = 2 : i64, tpu.core_type = #tpu.core_type<tc>} {
    %c0 = arith.constant 0 : index
    %0 = memref.load %arg0[%c0] : memref<3xf32, #tpu.memory_space<smem>>
    %c1 = arith.constant 1 : index
    %1 = memref.load %arg0[%c1] : memref<3xf32, #tpu.memory_space<smem>>
    %c2 = arith.constant 2 : index
    %2 = memref.load %arg0[%c2] : memref<3xf32, #tpu.memory_space<smem>>
    %cst = arith.constant 0.000000e+00 : f32
    %3 = vector.broadcast %cst : f32 to vector<2x32xf32>
    %c0_0 = arith.constant 0 : index
    %c0_1 = arith.constant 0 : index
    %4 = vector.load %arg1[%c0_0, %c0_1] : memref<16x32xf32, #tpu.memory_space<vmem>>, vector<2x32xf32>
    %5 = arith.mulf %4, %4 : vector<2x32xf32>
    %cst_2 = arith.constant dense<0.000000e+00> : vector<2xf32>
    %6 = vector.multi_reduction <add>, %5, %cst_2 [1] : vector<2x32xf32> to vector<2xf32>
    %7 = vector.shape_cast %6 : vector<2xf32> to vector<2x1xf32>
    %8 = math.sqrt %7 : vector<2x1xf32>
    %9 = arith.mulf %3, %3 : vector<2x32xf32>
    %cst_3 = arith.constant dense<0.000000e+00> : vector<2xf32>
    %10 = vector.multi_reduction <add>, %9, %cst_3 [1] : vector<2x32xf32> to vector<2xf32>
    %11 = vector.shape_cast %10 : vector<2xf32> to vector<2x1xf32>
    %12 = math.sqrt %11 : vector<2x1xf32>
    %13 = arith.addf %8, %12 : vector<2x1xf32>
    %14 = arith.divf %8, %13 : vector<2x1xf32>
    %15 = vector.broadcast %1 : f32 to vector<2x1xf32>
    %16 = arith.mulf %15, %14 : vector<2x1xf32>
    %17 = vector.broadcast %2 : f32 to vector<2x1xf32>
    %18 = math.powf %16, %17 : vector<2x1xf32>
    %19 = vector.broadcast %0 : f32 to vector<2x1xf32>
    %20 = arith.mulf %19, %18 : vector<2x1xf32>
    %cst_4 = arith.constant 0.000000e+00 : f32
    %cst_5 = arith.constant 1.000000e+00 : f32
    %21 = vector.broadcast %cst_4 : f32 to vector<2x1xf32>
    %22 = arith.maximumf %21, %20 : vector<2x1xf32>
    %23 = vector.broadcast %cst_5 : f32 to vector<2x1xf32>
    %24 = arith.minimumf %23, %22 : vector<2x1xf32>
    %cst_6 = arith.constant 1.000000e+00 : f32
    %25 = vector.broadcast %cst_6 : f32 to vector<2x1xf32>
    %26 = arith.subf %25, %24 : vector<2x1xf32>
    %27 = vector.broadcast %26 : vector<2x1xf32> to vector<2x32xf32>
    %28 = arith.mulf %27, %3 : vector<2x32xf32>
    %29 = vector.broadcast %24 : vector<2x1xf32> to vector<2x32xf32>
    %30 = arith.mulf %29, %4 : vector<2x32xf32>
    %31 = arith.addf %28, %30 : vector<2x32xf32>
    %c0_7 = arith.constant 0 : index
    %c0_8 = arith.constant 0 : index
    %32 = vector.load %arg7[%c0_7, %c0_8] : memref<16x32xf32, #tpu.memory_space<vmem>>, vector<2x32xf32>
    tpu.vector_store %arg7[%c0_7, %c0_8], %31 {strides = array<i32>} : memref<16x32xf32, #tpu.memory_space<vmem>>, vector<2x32xf32>,
    %c2_9 = arith.constant 2 : index
    %c0_10 = arith.constant 0 : index
    %33 = vector.load %arg1[%c2_9, %c0_10] : memref<16x32xf32, #tpu.memory_space<vmem>>, vector<2x32xf32>
    %34 = arith.mulf %33, %33 : vector<2x32xf32>
    %cst_11 = arith.constant dense<0.000000e+00> : vector<2xf32>
    %35 = vector.multi_reduction <add>, %34, %cst_11 [1] : vector<2x32xf32> to vector<2xf32>
    %36 = vector.shape_cast %35 : vector<2xf32> to vector<2x1xf32>
    %37 = math.sqrt %36 : vector<2x1xf32>
    %38 = arith.mulf %31, %31 : vector<2x32xf32>
    %cst_12 = arith.constant dense<0.000000e+00> : vector<2xf32>
    %39 = vector.multi_reduction <add>, %38, %cst_12 [1] : vector<2x32xf32> to vector<2xf32>
    %40 = vector.shape_cast %39 : vector<2xf32> to vector<2x1xf32>
    %41 = math.sqrt %40 : vector<2x1xf32>
    %42 = arith.addf %37, %41 : vector<2x1xf32>
    %43 = arith.divf %37, %42 : vector<2x1xf32>
    %44 = vector.broadcast %1 : f32 to vector<2x1xf32>
    %45 = arith.mulf %44, %43 : vector<2x1xf32>
    %46 = vector.broadcast %2 : f32 to vector<2x1xf32>
    %47 = math.powf %45, %46 : vector<2x1xf32>
    %48 = vector.broadcast %0 : f32 to vector<2x1xf32>
    %49 = arith.mulf %48, %47 : vector<2x1xf32>
    %cst_13 = arith.constant 0.000000e+00 : f32
    %cst_14 = arith.constant 1.000000e+00 : f32
    %50 = vector.broadcast %cst_13 : f32 to vector<2x1xf32>
    %51 = arith.maximumf %50, %49 : vector<2x1xf32>
    %52 = vector.broadcast %cst_14 : f32 to vector<2x1xf32>
    %53 = arith.minimumf %52, %51 : vector<2x1xf32>
    %cst_15 = arith.constant 1.000000e+00 : f32
    %54 = vector.broadcast %cst_15 : f32 to vector<2x1xf32>
    %55 = arith.subf %54, %53 : vector<2x1xf32>
    %56 = vector.broadcast %55 : vector<2x1xf32> to vector<2x32xf32>
    %57 = arith.mulf %56, %31 : vector<2x32xf32>
    %58 = vector.broadcast %53 : vector<2x1xf32> to vector<2x32xf32>
    %59 = arith.mulf %58, %33 : vector<2x32xf32>
    %60 = arith.addf %57, %59 : vector<2x32xf32>
    %c2_16 = arith.constant 2 : index
    %c0_17 = arith.constant 0 : index
    %61 = vector.load %arg7[%c2_16, %c0_17] : memref<16x32xf32, #tpu.memory_space<vmem>>, vector<2x32xf32>
    tpu.vector_store %arg7[%c2_16, %c0_17], %60 {strides = array<i32>} : memref<16x32xf32, #tpu.memory_space<vmem>>, vector<2x32xf32>,
    %c4 = arith.constant 4 : index
    %c0_18 = arith.constant 0 : index
    %62 = vector.load %arg1[%c4, %c0_18] : memref<16x32xf32, #tpu.memory_space<vmem>>, vector<2x32xf32>
    %63 = arith.mulf %62, %62 : vector<2x32xf32>
    %cst_19 = arith.constant dense<0.000000e+00> : vector<2xf32>
    %64 = vector.multi_reduction <add>, %63, %cst_19 [1] : vector<2x32xf32> to vector<2xf32>
    %65 = vector.shape_cast %64 : vector<2xf32> to vector<2x1xf32>
    %66 = math.sqrt %65 : vector<2x1xf32>
    %67 = arith.mulf %60, %60 : vector<2x32xf32>
    %cst_20 = arith.constant dense<0.000000e+00> : vector<2xf32>
    %68 = vector.multi_reduction <add>, %67, %cst_20 [1] : vector<2x32xf32> to vector<2xf32>
    %69 = vector.shape_cast %68 : vector<2xf32> to vector<2x1xf32>
    %70 = math.sqrt %69 : vector<2x1xf32>
    %71 = arith.addf %66, %70 : vector<2x1xf32>
    %72 = arith.divf %66, %71 : vector<2x1xf32>
    %73 = vector.broadcast %1 : f32 to vector<2x1xf32>
    %74 = arith.mulf %73, %72 : vector<2x1xf32>
    %75 = vector.broadcast %2 : f32 to vector<2x1xf32>
    %76 = math.powf %74, %75 : vector<2x1xf32>
    %77 = vector.broadcast %0 : f32 to vector<2x1xf32>
    %78 = arith.mulf %77, %76 : vector<2x1xf32>
    %cst_21 = arith.constant 0.000000e+00 : f32
    %cst_22 = arith.constant 1.000000e+00 : f32
    %79 = vector.broadcast %cst_21 : f32 to vector<2x1xf32>
    %80 = arith.maximumf %79, %78 : vector<2x1xf32>
    %81 = vector.broadcast %cst_22 : f32 to vector<2x1xf32>
    %82 = arith.minimumf %81, %80 : vector<2x1xf32>
    %cst_23 = arith.constant 1.000000e+00 : f32
    %83 = vector.broadcast %cst_23 : f32 to vector<2x1xf32>
    %84 = arith.subf %83, %82 : vector<2x1xf32>
    %85 = vector.broadcast %84 : vector<2x1xf32> to vector<2x32xf32>
    %86 = arith.mulf %85, %60 : vector<2x32xf32>
    %87 = vector.broadcast %82 : vector<2x1xf32> to vector<2x32xf32>
    %88 = arith.mulf %87, %62 : vector<2x32xf32>
    %89 = arith.addf %86, %88 : vector<2x32xf32>
    %c4_24 = arith.constant 4 : index
    %c0_25 = arith.constant 0 : index
    %90 = vector.load %arg7[%c4_24, %c0_25] : memref<16x32xf32, #tpu.memory_space<vmem>>, vector<2x32xf32>
    tpu.vector_store %arg7[%c4_24, %c0_25], %89 {strides = array<i32>} : memref<16x32xf32, #tpu.memory_space<vmem>>, vector<2x32xf32>,
    %c6 = arith.constant 6 : index
    %c0_26 = arith.constant 0 : index
    %91 = vector.load %arg1[%c6, %c0_26] : memref<16x32xf32, #tpu.memory_space<vmem>>, vector<2x32xf32>
    %92 = arith.mulf %91, %91 : vector<2x32xf32>
    %cst_27 = arith.constant dense<0.000000e+00> : vector<2xf32>
    %93 = vector.multi_reduction <add>, %92, %cst_27 [1] : vector<2x32xf32> to vector<2xf32>
    %94 = vector.shape_cast %93 : vector<2xf32> to vector<2x1xf32>
    %95 = math.sqrt %94 : vector<2x1xf32>
    %96 = arith.mulf %89, %89 : vector<2x32xf32>
    %cst_28 = arith.constant dense<0.000000e+00> : vector<2xf32>
    %97 = vector.multi_reduction <add>, %96, %cst_28 [1] : vector<2x32xf32> to vector<2xf32>
    %98 = vector.shape_cast %97 : vector<2xf32> to vector<2x1xf32>
    %99 = math.sqrt %98 : vector<2x1xf32>
    %100 = arith.addf %95, %99 : vector<2x1xf32>
    %101 = arith.divf %95, %100 : vector<2x1xf32>
    %102 = vector.broadcast %1 : f32 to vector<2x1xf32>
    %103 = arith.mulf %102, %101 : vector<2x1xf32>
    %104 = vector.broadcast %2 : f32 to vector<2x1xf32>
    %105 = math.powf %103, %104 : vector<2x1xf32>
    %106 = vector.broadcast %0 : f32 to vector<2x1xf32>
    %107 = arith.mulf %106, %105 : vector<2x1xf32>
    %cst_29 = arith.constant 0.000000e+00 : f32
    %cst_30 = arith.constant 1.000000e+00 : f32
    %108 = vector.broadcast %cst_29 : f32 to vector<2x1xf32>
    %109 = arith.maximumf %108, %107 : vector<2x1xf32>
    %110 = vector.broadcast %cst_30 : f32 to vector<2x1xf32>
    %111 = arith.minimumf %110, %109 : vector<2x1xf32>
    %cst_31 = arith.constant 1.000000e+00 : f32
    %112 = vector.broadcast %cst_31 : f32 to vector<2x1xf32>
    %113 = arith.subf %112, %111 : vector<2x1xf32>
    %114 = vector.broadcast %113 : vector<2x1xf32> to vector<2x32xf32>
    %115 = arith.mulf %114, %89 : vector<2x32xf32>
    %116 = vector.broadcast %111 : vector<2x1xf32> to vector<2x32xf32>
    %117 = arith.mulf %116, %91 : vector<2x32xf32>
    %118 = arith.addf %115, %117 : vector<2x32xf32>
    %c6_32 = arith.constant 6 : index
    %c0_33 = arith.constant 0 : index
    %119 = vector.load %arg7[%c6_32, %c0_33] : memref<16x32xf32, #tpu.memory_space<vmem>>, vector<2x32xf32>
    tpu.vector_store %arg7[%c6_32, %c0_33], %118 {strides = array<i32>} : memref<16x32xf32, #tpu.memory_space<vmem>>, vector<2x32xf32>,
    %c8 = arith.constant 8 : index
    %c0_34 = arith.constant 0 : index
    %120 = vector.load %arg1[%c8, %c0_34] : memref<16x32xf32, #tpu.memory_space<vmem>>, vector<2x32xf32>
    %121 = arith.mulf %120, %120 : vector<2x32xf32>
    %cst_35 = arith.constant dense<0.000000e+00> : vector<2xf32>
    %122 = vector.multi_reduction <add>, %121, %cst_35 [1] : vector<2x32xf32> to vector<2xf32>
    %123 = vector.shape_cast %122 : vector<2xf32> to vector<2x1xf32>
    %124 = math.sqrt %123 : vector<2x1xf32>
    %125 = arith.mulf %118, %118 : vector<2x32xf32>
    %cst_36 = arith.constant dense<0.000000e+00> : vector<2xf32>
    %126 = vector.multi_reduction <add>, %125, %cst_36 [1] : vector<2x32xf32> to vector<2xf32>
    %127 = vector.shape_cast %126 : vector<2xf32> to vector<2x1xf32>
    %128 = math.sqrt %127 : vector<2x1xf32>
    %129 = arith.addf %124, %128 : vector<2x1xf32>
    %130 = arith.divf %124, %129 : vector<2x1xf32>
    %131 = vector.broadcast %1 : f32 to vector<2x1xf32>
    %132 = arith.mulf %131, %130 : vector<2x1xf32>
    %133 = vector.broadcast %2 : f32 to vector<2x1xf32>
    %134 = math.powf %132, %133 : vector<2x1xf32>
    %135 = vector.broadcast %0 : f32 to vector<2x1xf32>
    %136 = arith.mulf %135, %134 : vector<2x1xf32>
    %cst_37 = arith.constant 0.000000e+00 : f32
    %cst_38 = arith.constant 1.000000e+00 : f32
    %137 = vector.broadcast %cst_37 : f32 to vector<2x1xf32>
    %138 = arith.maximumf %137, %136 : vector<2x1xf32>
    %139 = vector.broadcast %cst_38 : f32 to vector<2x1xf32>
    %140 = arith.minimumf %139, %138 : vector<2x1xf32>
    %cst_39 = arith.constant 1.000000e+00 : f32
    %141 = vector.broadcast %cst_39 : f32 to vector<2x1xf32>
    %142 = arith.subf %141, %140 : vector<2x1xf32>
    %143 = vector.broadcast %142 : vector<2x1xf32> to vector<2x32xf32>
    %144 = arith.mulf %143, %118 : vector<2x32xf32>
    %145 = vector.broadcast %140 : vector<2x1xf32> to vector<2x32xf32>
    %146 = arith.mulf %145, %120 : vector<2x32xf32>
    %147 = arith.addf %144, %146 : vector<2x32xf32>
    %c8_40 = arith.constant 8 : index
    %c0_41 = arith.constant 0 : index
    %148 = vector.load %arg7[%c8_40, %c0_41] : memref<16x32xf32, #tpu.memory_space<vmem>>, vector<2x32xf32>
    tpu.vector_store %arg7[%c8_40, %c0_41], %147 {strides = array<i32>} : memref<16x32xf32, #tpu.memory_space<vmem>>, vector<2x32xf32>,
    %c10 = arith.constant 10 : index
    %c0_42 = arith.constant 0 : index
    %149 = vector.load %arg1[%c10, %c0_42] : memref<16x32xf32, #tpu.memory_space<vmem>>, vector<2x32xf32>
    %150 = arith.mulf %149, %149 : vector<2x32xf32>
    %cst_43 = arith.constant dense<0.000000e+00> : vector<2xf32>
    %151 = vector.multi_reduction <add>, %150, %cst_43 [1] : vector<2x32xf32> to vector<2xf32>
    %152 = vector.shape_cast %151 : vector<2xf32> to vector<2x1xf32>
    %153 = math.sqrt %152 : vector<2x1xf32>
    %154 = arith.mulf %147, %147 : vector<2x32xf32>
    %cst_44 = arith.constant dense<0.000000e+00> : vector<2xf32>
    %155 = vector.multi_reduction <add>, %154, %cst_44 [1] : vector<2x32xf32> to vector<2xf32>
    %156 = vector.shape_cast %155 : vector<2xf32> to vector<2x1xf32>
    %157 = math.sqrt %156 : vector<2x1xf32>
    %158 = arith.addf %153, %157 : vector<2x1xf32>
    %159 = arith.divf %153, %158 : vector<2x1xf32>
    %160 = vector.broadcast %1 : f32 to vector<2x1xf32>
    %161 = arith.mulf %160, %159 : vector<2x1xf32>
    %162 = vector.broadcast %2 : f32 to vector<2x1xf32>
    %163 = math.powf %161, %162 : vector<2x1xf32>
    %164 = vector.broadcast %0 : f32 to vector<2x1xf32>
    %165 = arith.mulf %164, %163 : vector<2x1xf32>
    %cst_45 = arith.constant 0.000000e+00 : f32
    %cst_46 = arith.constant 1.000000e+00 : f32
    %166 = vector.broadcast %cst_45 : f32 to vector<2x1xf32>
    %167 = arith.maximumf %166, %165 : vector<2x1xf32>
    %168 = vector.broadcast %cst_46 : f32 to vector<2x1xf32>
    %169 = arith.minimumf %168, %167 : vector<2x1xf32>
    %cst_47 = arith.constant 1.000000e+00 : f32
    %170 = vector.broadcast %cst_47 : f32 to vector<2x1xf32>
    %171 = arith.subf %170, %169 : vector<2x1xf32>
    %172 = vector.broadcast %171 : vector<2x1xf32> to vector<2x32xf32>
    %173 = arith.mulf %172, %147 : vector<2x32xf32>
    %174 = vector.broadcast %169 : vector<2x1xf32> to vector<2x32xf32>
    %175 = arith.mulf %174, %149 : vector<2x32xf32>
    %176 = arith.addf %173, %175 : vector<2x32xf32>
    %c10_48 = arith.constant 10 : index
    %c0_49 = arith.constant 0 : index
    %177 = vector.load %arg7[%c10_48, %c0_49] : memref<16x32xf32, #tpu.memory_space<vmem>>, vector<2x32xf32>
    tpu.vector_store %arg7[%c10_48, %c0_49], %176 {strides = array<i32>} : memref<16x32xf32, #tpu.memory_space<vmem>>, vector<2x32xf32>,
    %c12 = arith.constant 12 : index
    %c0_50 = arith.constant 0 : index
    %178 = vector.load %arg1[%c12, %c0_50] : memref<16x32xf32, #tpu.memory_space<vmem>>, vector<2x32xf32>
    %179 = arith.mulf %178, %178 : vector<2x32xf32>
    %cst_51 = arith.constant dense<0.000000e+00> : vector<2xf32>
    %180 = vector.multi_reduction <add>, %179, %cst_51 [1] : vector<2x32xf32> to vector<2xf32>
    %181 = vector.shape_cast %180 : vector<2xf32> to vector<2x1xf32>
    %182 = math.sqrt %181 : vector<2x1xf32>
    %183 = arith.mulf %176, %176 : vector<2x32xf32>
    %cst_52 = arith.constant dense<0.000000e+00> : vector<2xf32>
    %184 = vector.multi_reduction <add>, %183, %cst_52 [1] : vector<2x32xf32> to vector<2xf32>
    %185 = vector.shape_cast %184 : vector<2xf32> to vector<2x1xf32>
    %186 = math.sqrt %185 : vector<2x1xf32>
    %187 = arith.addf %182, %186 : vector<2x1xf32>
    %188 = arith.divf %182, %187 : vector<2x1xf32>
    %189 = vector.broadcast %1 : f32 to vector<2x1xf32>
    %190 = arith.mulf %189, %188 : vector<2x1xf32>
    %191 = vector.broadcast %2 : f32 to vector<2x1xf32>
    %192 = math.powf %190, %191 : vector<2x1xf32>
    %193 = vector.broadcast %0 : f32 to vector<2x1xf32>
    %194 = arith.mulf %193, %192 : vector<2x1xf32>
    %cst_53 = arith.constant 0.000000e+00 : f32
    %cst_54 = arith.constant 1.000000e+00 : f32
    %195 = vector.broadcast %cst_53 : f32 to vector<2x1xf32>
    %196 = arith.maximumf %195, %194 : vector<2x1xf32>
    %197 = vector.broadcast %cst_54 : f32 to vector<2x1xf32>
    %198 = arith.minimumf %197, %196 : vector<2x1xf32>
    %cst_55 = arith.constant 1.000000e+00 : f32
    %199 = vector.broadcast %cst_55 : f32 to vector<2x1xf32>
    %200 = arith.subf %199, %198 : vector<2x1xf32>
    %201 = vector.broadcast %200 : vector<2x1xf32> to vector<2x32xf32>
    %202 = arith.mulf %201, %176 : vector<2x32xf32>
    %203 = vector.broadcast %198 : vector<2x1xf32> to vector<2x32xf32>
    %204 = arith.mulf %203, %178 : vector<2x32xf32>
    %205 = arith.addf %202, %204 : vector<2x32xf32>
    %c12_56 = arith.constant 12 : index
    %c0_57 = arith.constant 0 : index
    %206 = vector.load %arg7[%c12_56, %c0_57] : memref<16x32xf32, #tpu.memory_space<vmem>>, vector<2x32xf32>
    tpu.vector_store %arg7[%c12_56, %c0_57], %205 {strides = array<i32>} : memref<16x32xf32, #tpu.memory_space<vmem>>, vector<2x32xf32>,
    %c14 = arith.constant 14 : index
    %c0_58 = arith.constant 0 : index
    %207 = vector.load %arg1[%c14, %c0_58] : memref<16x32xf32, #tpu.memory_space<vmem>>, vector<2x32xf32>
    %208 = arith.mulf %207, %207 : vector<2x32xf32>
    %cst_59 = arith.constant dense<0.000000e+00> : vector<2xf32>
    %209 = vector.multi_reduction <add>, %208, %cst_59 [1] : vector<2x32xf32> to vector<2xf32>
    %210 = vector.shape_cast %209 : vector<2xf32> to vector<2x1xf32>
    %211 = math.sqrt %210 : vector<2x1xf32>
    %212 = arith.mulf %205, %205 : vector<2x32xf32>
    %cst_60 = arith.constant dense<0.000000e+00> : vector<2xf32>
    %213 = vector.multi_reduction <add>, %212, %cst_60 [1] : vector<2x32xf32> to vector<2xf32>
    %214 = vector.shape_cast %213 : vector<2xf32> to vector<2x1xf32>
    %215 = math.sqrt %214 : vector<2x1xf32>
    %216 = arith.addf %211, %215 : vector<2x1xf32>
    %217 = arith.divf %211, %216 : vector<2x1xf32>
    %218 = vector.broadcast %1 : f32 to vector<2x1xf32>
    %219 = arith.mulf %218, %217 : vector<2x1xf32>
    %220 = vector.broadcast %2 : f32 to vector<2x1xf32>
    %221 = math.powf %219, %220 : vector<2x1xf32>
    %222 = vector.broadcast %0 : f32 to vector<2x1xf32>
    %223 = arith.mulf %222, %221 : vector<2x1xf32>
    %cst_61 = arith.constant 0.000000e+00 : f32
    %cst_62 = arith.constant 1.000000e+00 : f32
    %224 = vector.broadcast %cst_61 : f32 to vector<2x1xf32>
    %225 = arith.maximumf %224, %223 : vector<2x1xf32>
    %226 = vector.broadcast %cst_62 : f32 to vector<2x1xf32>
    %227 = arith.minimumf %226, %225 : vector<2x1xf32>
    %cst_63 = arith.constant 1.000000e+00 : f32
    %228 = vector.broadcast %cst_63 : f32 to vector<2x1xf32>
    %229 = arith.subf %228, %227 : vector<2x1xf32>
    %230 = vector.broadcast %229 : vector<2x1xf32> to vector<2x32xf32>
    %231 = arith.mulf %230, %205 : vector<2x32xf32>
    %232 = vector.broadcast %227 : vector<2x1xf32> to vector<2x32xf32>
    %233 = arith.mulf %232, %207 : vector<2x32xf32>
    %234 = arith.addf %231, %233 : vector<2x32xf32>
    %c14_64 = arith.constant 14 : index
    %c0_65 = arith.constant 0 : index
    %235 = vector.load %arg7[%c14_64, %c0_65] : memref<16x32xf32, #tpu.memory_space<vmem>>, vector<2x32xf32>
    tpu.vector_store %arg7[%c14_64, %c0_65], %234 {strides = array<i32>} : memref<16x32xf32, #tpu.memory_space<vmem>>, vector<2x32xf32>,
    %c0_66 = arith.constant 0 : index
    %c0_67 = arith.constant 0 : index
    %236 = vector.load %arg7[%c0_66, %c0_67] : memref<16x32xf32, #tpu.memory_space<vmem>>, vector<16x32xf32>
    %c0_68 = arith.constant 0 : index
    %c0_69 = arith.constant 0 : index
    %237 = vector.load %arg2[%c0_68, %c0_69] : memref<16x32xf32, #tpu.memory_space<vmem>>, vector<16x32xf32>
    %238 = vector.extract_strided_slice %237 {offsets = [0, 0], sizes = [16, 1], strides = [1, 1]} : vector<16x32xf32> to vector<16x1xf32>
    %239 = vector.broadcast %238 : vector<16x1xf32> to vector<16x32xf32>
    %240 = arith.mulf %239, %236 : vector<16x32xf32>
    %c0_70 = arith.constant 0 : index
    %c0_71 = arith.constant 0 : index
    %241 = vector.load %arg8[%c0_70, %c0_71] : memref<16x1024xf32, #tpu.memory_space<vmem>>, vector<16x32xf32>
    tpu.vector_store %arg8[%c0_70, %c0_71], %240 {strides = array<i32>} : memref<16x1024xf32, #tpu.memory_space<vmem>>, vector<16x32xf32>,
    %242 = vector.extract_strided_slice %237 {offsets = [0, 1], sizes = [16, 1], strides = [1, 1]} : vector<16x32xf32> to vector<16x1xf32>
    %243 = vector.broadcast %242 : vector<16x1xf32> to vector<16x32xf32>
    %244 = arith.mulf %243, %236 : vector<16x32xf32>
    %c0_72 = arith.constant 0 : index
    %c32 = arith.constant 32 : index
    %245 = vector.load %arg8[%c0_72, %c32] : memref<16x1024xf32, #tpu.memory_space<vmem>>, vector<16x32xf32>
    tpu.vector_store %arg8[%c0_72, %c32], %244 {strides = array<i32>} : memref<16x1024xf32, #tpu.memory_space<vmem>>, vector<16x32xf32>,
    %246 = vector.extract_strided_slice %237 {offsets = [0, 2], sizes = [16, 1], strides = [1, 1]} : vector<16x32xf32> to vector<16x1xf32>
    %247 = vector.broadcast %246 : vector<16x1xf32> to vector<16x32xf32>
    %248 = arith.mulf %247, %236 : vector<16x32xf32>
    %c0_73 = arith.constant 0 : index
    %c64 = arith.constant 64 : index
    %249 = vector.load %arg8[%c0_73, %c64] : memref<16x1024xf32, #tpu.memory_space<vmem>>, vector<16x32xf32>
    tpu.vector_store %arg8[%c0_73, %c64], %248 {strides = array<i32>} : memref<16x1024xf32, #tpu.memory_space<vmem>>, vector<16x32xf32>,
    %250 = vector.extract_strided_slice %237 {offsets = [0, 3], sizes = [16, 1], strides = [1, 1]} : vector<16x32xf32> to vector<16x1xf32>
    %251 = vector.broadcast %250 : vector<16x1xf32> to vector<16x32xf32>
    %252 = arith.mulf %251, %236 : vector<16x32xf32>
    %c0_74 = arith.constant 0 : index
    %c96 = arith.constant 96 : index
    %253 = vector.load %arg8[%c0_74, %c96] : memref<16x1024xf32, #tpu.memory_space<vmem>>, vector<16x32xf32>
    tpu.vector_store %arg8[%c0_74, %c96], %252 {strides = array<i32>} : memref<16x1024xf32, #tpu.memory_space<vmem>>, vector<16x32xf32>,
    %254 = vector.extract_strided_slice %237 {offsets = [0, 4], sizes = [16, 1], strides = [1, 1]} : vector<16x32xf32> to vector<16x1xf32>
    %255 = vector.broadcast %254 : vector<16x1xf32> to vector<16x32xf32>
    %256 = arith.mulf %255, %236 : vector<16x32xf32>
    %c0_75 = arith.constant 0 : index
    %c128 = arith.constant 128 : index
    %257 = vector.load %arg8[%c0_75, %c128] : memref<16x1024xf32, #tpu.memory_space<vmem>>, vector<16x32xf32>
    tpu.vector_store %arg8[%c0_75, %c128], %256 {strides = array<i32>} : memref<16x1024xf32, #tpu.memory_space<vmem>>, vector<16x32xf32>,
    %258 = vector.extract_strided_slice %237 {offsets = [0, 5], sizes = [16, 1], strides = [1, 1]} : vector<16x32xf32> to vector<16x1xf32>
    %259 = vector.broadcast %258 : vector<16x1xf32> to vector<16x32xf32>
    %260 = arith.mulf %259, %236 : vector<16x32xf32>
    %c0_76 = arith.constant 0 : index
    %c160 = arith.constant 160 : index
    %261 = vector.load %arg8[%c0_76, %c160] : memref<16x1024xf32, #tpu.memory_space<vmem>>, vector<16x32xf32>
    tpu.vector_store %arg8[%c0_76, %c160], %260 {strides = array<i32>} : memref<16x1024xf32, #tpu.memory_space<vmem>>, vector<16x32xf32>,
    %262 = vector.extract_strided_slice %237 {offsets = [0, 6], sizes = [16, 1], strides = [1, 1]} : vector<16x32xf32> to vector<16x1xf32>
    %263 = vector.broadcast %262 : vector<16x1xf32> to vector<16x32xf32>
    %264 = arith.mulf %263, %236 : vector<16x32xf32>
    %c0_77 = arith.constant 0 : index
    %c192 = arith.constant 192 : index
    %265 = vector.load %arg8[%c0_77, %c192] : memref<16x1024xf32, #tpu.memory_space<vmem>>, vector<16x32xf32>
    tpu.vector_store %arg8[%c0_77, %c192], %264 {strides = array<i32>} : memref<16x1024xf32, #tpu.memory_space<vmem>>, vector<16x32xf32>,
    %266 = vector.extract_strided_slice %237 {offsets = [0, 7], sizes = [16, 1], strides = [1, 1]} : vector<16x32xf32> to vector<16x1xf32>
    %267 = vector.broadcast %266 : vector<16x1xf32> to vector<16x32xf32>
    %268 = arith.mulf %267, %236 : vector<16x32xf32>
    %c0_78 = arith.constant 0 : index
    %c224 = arith.constant 224 : index
    %269 = vector.load %arg8[%c0_78, %c224] : memref<16x1024xf32, #tpu.memory_space<vmem>>, vector<16x32xf32>
    tpu.vector_store %arg8[%c0_78, %c224], %268 {strides = array<i32>} : memref<16x1024xf32, #tpu.memory_space<vmem>>, vector<16x32xf32>,
    %270 = vector.extract_strided_slice %237 {offsets = [0, 8], sizes = [16, 1], strides = [1, 1]} : vector<16x32xf32> to vector<16x1xf32>
    %271 = vector.broadcast %270 : vector<16x1xf32> to vector<16x32xf32>
    %272 = arith.mulf %271, %236 : vector<16x32xf32>
    %c0_79 = arith.constant 0 : index
    %c256 = arith.constant 256 : index
    %273 = vector.load %arg8[%c0_79, %c256] : memref<16x1024xf32, #tpu.memory_space<vmem>>, vector<16x32xf32>
    tpu.vector_store %arg8[%c0_79, %c256], %272 {strides = array<i32>} : memref<16x1024xf32, #tpu.memory_space<vmem>>, vector<16x32xf32>,
    %274 = vector.extract_strided_slice %237 {offsets = [0, 9], sizes = [16, 1], strides = [1, 1]} : vector<16x32xf32> to vector<16x1xf32>
    %275 = vector.broadcast %274 : vector<16x1xf32> to vector<16x32xf32>
    %276 = arith.mulf %275, %236 : vector<16x32xf32>
    %c0_80 = arith.constant 0 : index
    %c288 = arith.constant 288 : index
    %277 = vector.load %arg8[%c0_80, %c288] : memref<16x1024xf32, #tpu.memory_space<vmem>>, vector<16x32xf32>
    tpu.vector_store %arg8[%c0_80, %c288], %276 {strides = array<i32>} : memref<16x1024xf32, #tpu.memory_space<vmem>>, vector<16x32xf32>,
    %278 = vector.extract_strided_slice %237 {offsets = [0, 10], sizes = [16, 1], strides = [1, 1]} : vector<16x32xf32> to vector<16x1xf32>
    %279 = vector.broadcast %278 : vector<16x1xf32> to vector<16x32xf32>
    %280 = arith.mulf %279, %236 : vector<16x32xf32>
    %c0_81 = arith.constant 0 : index
    %c320 = arith.constant 320 : index
    %281 = vector.load %arg8[%c0_81, %c320] : memref<16x1024xf32, #tpu.memory_space<vmem>>, vector<16x32xf32>
    tpu.vector_store %arg8[%c0_81, %c320], %280 {strides = array<i32>} : memref<16x1024xf32, #tpu.memory_space<vmem>>, vector<16x32xf32>,
    %282 = vector.extract_strided_slice %237 {offsets = [0, 11], sizes = [16, 1], strides = [1, 1]} : vector<16x32xf32> to vector<16x1xf32>
    %283 = vector.broadcast %282 : vector<16x1xf32> to vector<16x32xf32>
    %284 = arith.mulf %283, %236 : vector<16x32xf32>
    %c0_82 = arith.constant 0 : index
    %c352 = arith.constant 352 : index
    %285 = vector.load %arg8[%c0_82, %c352] : memref<16x1024xf32, #tpu.memory_space<vmem>>, vector<16x32xf32>
    tpu.vector_store %arg8[%c0_82, %c352], %284 {strides = array<i32>} : memref<16x1024xf32, #tpu.memory_space<vmem>>, vector<16x32xf32>,
    %286 = vector.extract_strided_slice %237 {offsets = [0, 12], sizes = [16, 1], strides = [1, 1]} : vector<16x32xf32> to vector<16x1xf32>
    %287 = vector.broadcast %286 : vector<16x1xf32> to vector<16x32xf32>
    %288 = arith.mulf %287, %236 : vector<16x32xf32>
    %c0_83 = arith.constant 0 : index
    %c384 = arith.constant 384 : index
    %289 = vector.load %arg8[%c0_83, %c384] : memref<16x1024xf32, #tpu.memory_space<vmem>>, vector<16x32xf32>
    tpu.vector_store %arg8[%c0_83, %c384], %288 {strides = array<i32>} : memref<16x1024xf32, #tpu.memory_space<vmem>>, vector<16x32xf32>,
    %290 = vector.extract_strided_slice %237 {offsets = [0, 13], sizes = [16, 1], strides = [1, 1]} : vector<16x32xf32> to vector<16x1xf32>
    %291 = vector.broadcast %290 : vector<16x1xf32> to vector<16x32xf32>
    %292 = arith.mulf %291, %236 : vector<16x32xf32>
    %c0_84 = arith.constant 0 : index
    %c416 = arith.constant 416 : index
    %293 = vector.load %arg8[%c0_84, %c416] : memref<16x1024xf32, #tpu.memory_space<vmem>>, vector<16x32xf32>
    tpu.vector_store %arg8[%c0_84, %c416], %292 {strides = array<i32>} : memref<16x1024xf32, #tpu.memory_space<vmem>>, vector<16x32xf32>,
    %294 = vector.extract_strided_slice %237 {offsets = [0, 14], sizes = [16, 1], strides = [1, 1]} : vector<16x32xf32> to vector<16x1xf32>
    %295 = vector.broadcast %294 : vector<16x1xf32> to vector<16x32xf32>
    %296 = arith.mulf %295, %236 : vector<16x32xf32>
    %c0_85 = arith.constant 0 : index
    %c448 = arith.constant 448 : index
    %297 = vector.load %arg8[%c0_85, %c448] : memref<16x1024xf32, #tpu.memory_space<vmem>>, vector<16x32xf32>
    tpu.vector_store %arg8[%c0_85, %c448], %296 {strides = array<i32>} : memref<16x1024xf32, #tpu.memory_space<vmem>>, vector<16x32xf32>,
    %298 = vector.extract_strided_slice %237 {offsets = [0, 15], sizes = [16, 1], strides = [1, 1]} : vector<16x32xf32> to vector<16x1xf32>
    %299 = vector.broadcast %298 : vector<16x1xf32> to vector<16x32xf32>
    %300 = arith.mulf %299, %236 : vector<16x32xf32>
    %c0_86 = arith.constant 0 : index
    %c480 = arith.constant 480 : index
    %301 = vector.load %arg8[%c0_86, %c480] : memref<16x1024xf32, #tpu.memory_space<vmem>>, vector<16x32xf32>
    tpu.vector_store %arg8[%c0_86, %c480], %300 {strides = array<i32>} : memref<16x1024xf32, #tpu.memory_space<vmem>>, vector<16x32xf32>,
    %302 = vector.extract_strided_slice %237 {offsets = [0, 16], sizes = [16, 1], strides = [1, 1]} : vector<16x32xf32> to vector<16x1xf32>
    %303 = vector.broadcast %302 : vector<16x1xf32> to vector<16x32xf32>
    %304 = arith.mulf %303, %236 : vector<16x32xf32>
    %c0_87 = arith.constant 0 : index
    %c512 = arith.constant 512 : index
    %305 = vector.load %arg8[%c0_87, %c512] : memref<16x1024xf32, #tpu.memory_space<vmem>>, vector<16x32xf32>
    tpu.vector_store %arg8[%c0_87, %c512], %304 {strides = array<i32>} : memref<16x1024xf32, #tpu.memory_space<vmem>>, vector<16x32xf32>,
    %306 = vector.extract_strided_slice %237 {offsets = [0, 17], sizes = [16, 1], strides = [1, 1]} : vector<16x32xf32> to vector<16x1xf32>
    %307 = vector.broadcast %306 : vector<16x1xf32> to vector<16x32xf32>
    %308 = arith.mulf %307, %236 : vector<16x32xf32>
    %c0_88 = arith.constant 0 : index
    %c544 = arith.constant 544 : index
    %309 = vector.load %arg8[%c0_88, %c544] : memref<16x1024xf32, #tpu.memory_space<vmem>>, vector<16x32xf32>
    tpu.vector_store %arg8[%c0_88, %c544], %308 {strides = array<i32>} : memref<16x1024xf32, #tpu.memory_space<vmem>>, vector<16x32xf32>,
    %310 = vector.extract_strided_slice %237 {offsets = [0, 18], sizes = [16, 1], strides = [1, 1]} : vector<16x32xf32> to vector<16x1xf32>
    %311 = vector.broadcast %310 : vector<16x1xf32> to vector<16x32xf32>
    %312 = arith.mulf %311, %236 : vector<16x32xf32>
    %c0_89 = arith.constant 0 : index
    %c576 = arith.constant 576 : index
    %313 = vector.load %arg8[%c0_89, %c576] : memref<16x1024xf32, #tpu.memory_space<vmem>>, vector<16x32xf32>
    tpu.vector_store %arg8[%c0_89, %c576], %312 {strides = array<i32>} : memref<16x1024xf32, #tpu.memory_space<vmem>>, vector<16x32xf32>,
    %314 = vector.extract_strided_slice %237 {offsets = [0, 19], sizes = [16, 1], strides = [1, 1]} : vector<16x32xf32> to vector<16x1xf32>
    %315 = vector.broadcast %314 : vector<16x1xf32> to vector<16x32xf32>
    %316 = arith.mulf %315, %236 : vector<16x32xf32>
    %c0_90 = arith.constant 0 : index
    %c608 = arith.constant 608 : index
    %317 = vector.load %arg8[%c0_90, %c608] : memref<16x1024xf32, #tpu.memory_space<vmem>>, vector<16x32xf32>
    tpu.vector_store %arg8[%c0_90, %c608], %316 {strides = array<i32>} : memref<16x1024xf32, #tpu.memory_space<vmem>>, vector<16x32xf32>,
    %318 = vector.extract_strided_slice %237 {offsets = [0, 20], sizes = [16, 1], strides = [1, 1]} : vector<16x32xf32> to vector<16x1xf32>
    %319 = vector.broadcast %318 : vector<16x1xf32> to vector<16x32xf32>
    %320 = arith.mulf %319, %236 : vector<16x32xf32>
    %c0_91 = arith.constant 0 : index
    %c640 = arith.constant 640 : index
    %321 = vector.load %arg8[%c0_91, %c640] : memref<16x1024xf32, #tpu.memory_space<vmem>>, vector<16x32xf32>
    tpu.vector_store %arg8[%c0_91, %c640], %320 {strides = array<i32>} : memref<16x1024xf32, #tpu.memory_space<vmem>>, vector<16x32xf32>,
    %322 = vector.extract_strided_slice %237 {offsets = [0, 21], sizes = [16, 1], strides = [1, 1]} : vector<16x32xf32> to vector<16x1xf32>
    %323 = vector.broadcast %322 : vector<16x1xf32> to vector<16x32xf32>
    %324 = arith.mulf %323, %236 : vector<16x32xf32>
    %c0_92 = arith.constant 0 : index
    %c672 = arith.constant 672 : index
    %325 = vector.load %arg8[%c0_92, %c672] : memref<16x1024xf32, #tpu.memory_space<vmem>>, vector<16x32xf32>
    tpu.vector_store %arg8[%c0_92, %c672], %324 {strides = array<i32>} : memref<16x1024xf32, #tpu.memory_space<vmem>>, vector<16x32xf32>,
    %326 = vector.extract_strided_slice %237 {offsets = [0, 22], sizes = [16, 1], strides = [1, 1]} : vector<16x32xf32> to vector<16x1xf32>
    %327 = vector.broadcast %326 : vector<16x1xf32> to vector<16x32xf32>
    %328 = arith.mulf %327, %236 : vector<16x32xf32>
    %c0_93 = arith.constant 0 : index
    %c704 = arith.constant 704 : index
    %329 = vector.load %arg8[%c0_93, %c704] : memref<16x1024xf32, #tpu.memory_space<vmem>>, vector<16x32xf32>
    tpu.vector_store %arg8[%c0_93, %c704], %328 {strides = array<i32>} : memref<16x1024xf32, #tpu.memory_space<vmem>>, vector<16x32xf32>,
    %330 = vector.extract_strided_slice %237 {offsets = [0, 23], sizes = [16, 1], strides = [1, 1]} : vector<16x32xf32> to vector<16x1xf32>
    %331 = vector.broadcast %330 : vector<16x1xf32> to vector<16x32xf32>
    %332 = arith.mulf %331, %236 : vector<16x32xf32>
    %c0_94 = arith.constant 0 : index
    %c736 = arith.constant 736 : index
    %333 = vector.load %arg8[%c0_94, %c736] : memref<16x1024xf32, #tpu.memory_space<vmem>>, vector<16x32xf32>
    tpu.vector_store %arg8[%c0_94, %c736], %332 {strides = array<i32>} : memref<16x1024xf32, #tpu.memory_space<vmem>>, vector<16x32xf32>,
    %334 = vector.extract_strided_slice %237 {offsets = [0, 24], sizes = [16, 1], strides = [1, 1]} : vector<16x32xf32> to vector<16x1xf32>
    %335 = vector.broadcast %334 : vector<16x1xf32> to vector<16x32xf32>
    %336 = arith.mulf %335, %236 : vector<16x32xf32>
    %c0_95 = arith.constant 0 : index
    %c768 = arith.constant 768 : index
    %337 = vector.load %arg8[%c0_95, %c768] : memref<16x1024xf32, #tpu.memory_space<vmem>>, vector<16x32xf32>
    tpu.vector_store %arg8[%c0_95, %c768], %336 {strides = array<i32>} : memref<16x1024xf32, #tpu.memory_space<vmem>>, vector<16x32xf32>,
    %338 = vector.extract_strided_slice %237 {offsets = [0, 25], sizes = [16, 1], strides = [1, 1]} : vector<16x32xf32> to vector<16x1xf32>
    %339 = vector.broadcast %338 : vector<16x1xf32> to vector<16x32xf32>
    %340 = arith.mulf %339, %236 : vector<16x32xf32>
    %c0_96 = arith.constant 0 : index
    %c800 = arith.constant 800 : index
    %341 = vector.load %arg8[%c0_96, %c800] : memref<16x1024xf32, #tpu.memory_space<vmem>>, vector<16x32xf32>
    tpu.vector_store %arg8[%c0_96, %c800], %340 {strides = array<i32>} : memref<16x1024xf32, #tpu.memory_space<vmem>>, vector<16x32xf32>,
    %342 = vector.extract_strided_slice %237 {offsets = [0, 26], sizes = [16, 1], strides = [1, 1]} : vector<16x32xf32> to vector<16x1xf32>
    %343 = vector.broadcast %342 : vector<16x1xf32> to vector<16x32xf32>
    %344 = arith.mulf %343, %236 : vector<16x32xf32>
    %c0_97 = arith.constant 0 : index
    %c832 = arith.constant 832 : index
    %345 = vector.load %arg8[%c0_97, %c832] : memref<16x1024xf32, #tpu.memory_space<vmem>>, vector<16x32xf32>
    tpu.vector_store %arg8[%c0_97, %c832], %344 {strides = array<i32>} : memref<16x1024xf32, #tpu.memory_space<vmem>>, vector<16x32xf32>,
    %346 = vector.extract_strided_slice %237 {offsets = [0, 27], sizes = [16, 1], strides = [1, 1]} : vector<16x32xf32> to vector<16x1xf32>
    %347 = vector.broadcast %346 : vector<16x1xf32> to vector<16x32xf32>
    %348 = arith.mulf %347, %236 : vector<16x32xf32>
    %c0_98 = arith.constant 0 : index
    %c864 = arith.constant 864 : index
    %349 = vector.load %arg8[%c0_98, %c864] : memref<16x1024xf32, #tpu.memory_space<vmem>>, vector<16x32xf32>
    tpu.vector_store %arg8[%c0_98, %c864], %348 {strides = array<i32>} : memref<16x1024xf32, #tpu.memory_space<vmem>>, vector<16x32xf32>,
    %350 = vector.extract_strided_slice %237 {offsets = [0, 28], sizes = [16, 1], strides = [1, 1]} : vector<16x32xf32> to vector<16x1xf32>
    %351 = vector.broadcast %350 : vector<16x1xf32> to vector<16x32xf32>
    %352 = arith.mulf %351, %236 : vector<16x32xf32>
    %c0_99 = arith.constant 0 : index
    %c896 = arith.constant 896 : index
    %353 = vector.load %arg8[%c0_99, %c896] : memref<16x1024xf32, #tpu.memory_space<vmem>>, vector<16x32xf32>
    tpu.vector_store %arg8[%c0_99, %c896], %352 {strides = array<i32>} : memref<16x1024xf32, #tpu.memory_space<vmem>>, vector<16x32xf32>,
    %354 = vector.extract_strided_slice %237 {offsets = [0, 29], sizes = [16, 1], strides = [1, 1]} : vector<16x32xf32> to vector<16x1xf32>
    %355 = vector.broadcast %354 : vector<16x1xf32> to vector<16x32xf32>
    %356 = arith.mulf %355, %236 : vector<16x32xf32>
    %c0_100 = arith.constant 0 : index
    %c928 = arith.constant 928 : index
    %357 = vector.load %arg8[%c0_100, %c928] : memref<16x1024xf32, #tpu.memory_space<vmem>>, vector<16x32xf32>
    tpu.vector_store %arg8[%c0_100, %c928], %356 {strides = array<i32>} : memref<16x1024xf32, #tpu.memory_space<vmem>>, vector<16x32xf32>,
    %358 = vector.extract_strided_slice %237 {offsets = [0, 30], sizes = [16, 1], strides = [1, 1]} : vector<16x32xf32> to vector<16x1xf32>
    %359 = vector.broadcast %358 : vector<16x1xf32> to vector<16x32xf32>
    %360 = arith.mulf %359, %236 : vector<16x32xf32>
    %c0_101 = arith.constant 0 : index
    %c960 = arith.constant 960 : index
    %361 = vector.load %arg8[%c0_101, %c960] : memref<16x1024xf32, #tpu.memory_space<vmem>>, vector<16x32xf32>
    tpu.vector_store %arg8[%c0_101, %c960], %360 {strides = array<i32>} : memref<16x1024xf32, #tpu.memory_space<vmem>>, vector<16x32xf32>,
    %362 = vector.extract_strided_slice %237 {offsets = [0, 31], sizes = [16, 1], strides = [1, 1]} : vector<16x32xf32> to vector<16x1xf32>
    %363 = vector.broadcast %362 : vector<16x1xf32> to vector<16x32xf32>
    %364 = arith.mulf %363, %236 : vector<16x32xf32>
    %c0_102 = arith.constant 0 : index
    %c992 = arith.constant 992 : index
    %365 = vector.load %arg8[%c0_102, %c992] : memref<16x1024xf32, #tpu.memory_space<vmem>>, vector<16x32xf32>
    tpu.vector_store %arg8[%c0_102, %c992], %364 {strides = array<i32>} : memref<16x1024xf32, #tpu.memory_space<vmem>>, vector<16x32xf32>,
    %c0_103 = arith.constant 0 : index
    %c0_104 = arith.constant 0 : index
    %366 = vector.load %arg8[%c0_103, %c0_104] : memref<16x1024xf32, #tpu.memory_space<vmem>>, vector<16x1024xf32>
    %c0_105 = arith.constant 0 : index
    %c0_106 = arith.constant 0 : index
    %367 = vector.load %arg4[%c0_105, %c0_106] : memref<1024x16xf32, #tpu.memory_space<vmem>>, vector<1024x16xf32>
    %cst_107 = arith.constant dense<0.000000e+00> : vector<16x16xf32>
    %368 = tpu.matmul %366, %367, %cst_107 {dimension_numbers = #tpu.dot_dimension_numbers<[1], [0], [0], [1], [0, 0, 1, 1], [], []>, precision = #tpu.contract_precision<fp32>} : vector<16x1024xf32>, vector<1024x16xf32>, vector<16x16xf32> -> vector<16x16xf32>
    %c0_108 = arith.constant 0 : index
    %c0_109 = arith.constant 0 : index
    %369 = vector.load %arg5[%c0_108, %c0_109] : memref<16x16xf32, #tpu.memory_space<vmem>>, vector<16x16xf32>
    tpu.vector_store %arg5[%c0_108, %c0_109], %368 {strides = array<i32>} : memref<16x16xf32, #tpu.memory_space<vmem>>, vector<16x16xf32>,
    %c0_110 = arith.constant 0 : index
    %c0_111 = arith.constant 0 : index
    %370 = vector.load %arg3[%c0_110, %c0_111] : memref<16x1xi32, #tpu.memory_space<vmem>>, vector<16x1xi32>
    %371 = tpu.iota {dimensions = array<i32: 1>} : vector<16x16xi32>
    %372 = vector.broadcast %370 : vector<16x1xi32> to vector<16x16xi32>
    %373 = arith.cmpi eq, %371, %372 : vector<16x16xi32>
    %cst_112 = arith.constant 0.000000e+00 : f32
    %374 = vector.broadcast %cst_112 : f32 to vector<16x16xf32>
    %375 = arith.select %373, %368, %374 : vector<16x16xi1>, vector<16x16xf32>
    %cst_113 = arith.constant dense<0.000000e+00> : vector<16xf32>
    %376 = vector.multi_reduction <add>, %375, %cst_113 [1] : vector<16x16xf32> to vector<16xf32>
    %377 = vector.shape_cast %376 : vector<16xf32> to vector<16x1xf32>
    %cst_114 = arith.constant dense<0xFF800000> : vector<16xf32>
    %378 = vector.multi_reduction <maximumf>, %368, %cst_114 [1] : vector<16x16xf32> to vector<16xf32>
    %379 = vector.shape_cast %378 : vector<16xf32> to vector<16x1xf32>
    %380 = vector.broadcast %379 : vector<16x1xf32> to vector<16x16xf32>
    %381 = arith.subf %368, %380 : vector<16x16xf32>
    %382 = math.exp %381 : vector<16x16xf32>
    %cst_115 = arith.constant dense<0.000000e+00> : vector<16xf32>
    %383 = vector.multi_reduction <add>, %382, %cst_115 [1] : vector<16x16xf32> to vector<16xf32>
    %384 = vector.shape_cast %383 : vector<16xf32> to vector<16x1xf32>
    %385 = math.log %384 : vector<16x1xf32>
    %386 = arith.addf %379, %385 : vector<16x1xf32>
    %387 = arith.subf %386, %377 : vector<16x1xf32>
    %cst_116 = arith.constant dense<0.000000e+00> : vector<1xf32>
    %388 = vector.multi_reduction <add>, %387, %cst_116 [0] : vector<16x1xf32> to vector<1xf32>
    %389 = vector.shape_cast %388 : vector<1xf32> to vector<1x1xf32>
    %cst_117 = arith.constant 6.250000e-02 : f32
    %390 = vector.broadcast %cst_117 : f32 to vector<1x1xf32>
    %391 = arith.mulf %389, %390 : vector<1x1xf32>
    %c0_118 = arith.constant 0 : index
    %c0_119 = arith.constant 0 : index
    %392 = vector.load %arg6[%c0_118, %c0_119] : memref<1x1xf32, #tpu.memory_space<vmem>>, vector<1x1xf32>
    tpu.vector_store %arg6[%c0_118, %c0_119], %391 {strides = array<i32>} : memref<1x1xf32, #tpu.memory_space<vmem>>, vector<1x1xf32>,
    return
  }
}

</mosaic_0001>

<llo_original>
// kernel: context_rnn_net_forward.1
$region0: #{context_rnn_net_forward.1}
  #allocation0 [shape = 'u32[]', space=smem, size = 0x4, offset = 0x4, fixed_abs, tag = 'smem constant byte address 0x4 - core index']
  #allocation1 [shape = 'u32[72,128]{1,0:T(1,128)}', space=vmem, size = 0x9000, scoped, tag = 'internal scratch']
  #allocation2 [shape = 'f32[16,32]{1,0:T(8,128)}', space=vmem, size = 0x2000, scoped, tag = 'scratch operand']
  #allocation3 [shape = 'f32[16,1024]{1,0:T(8,128)}', space=vmem, size = 0x10000, scoped, tag = 'scratch operand']
  %s0 = inlined_call_operand.vmem [shape: f32[3], index: 0, kind: input, shape index: {}]
  %s1 = inlined_call_operand.vmem [shape: f32[16,32], index: 1, kind: input, shape index: {}]
  %s2 = inlined_call_operand.vmem [shape: f32[16,32], index: 2, kind: input, shape index: {}]
  %s3 = inlined_call_operand.vmem [shape: s32[16,1], index: 3, kind: input, shape index: {}]
  %s4 = inlined_call_operand.vmem [shape: f32[1024,16], index: 4, kind: input, shape index: {}]
  %s5 = inlined_call_operand.hbm [shape: f32[16,16], index: 5, kind: output, shape index: {0}]
  %s6 = inlined_call_operand.hbm [shape: f32[1,1], index: 6, kind: output, shape index: {1}]
  %7 = xla_tuple %s5, %s6
  %s8 = sld [smem:[#allocation0]]
  $region42: #{context_rnn_net_forward.1} parent=0
    _
  %s10 = ssub.s32 1, %s8
  %s11 = scalar_select 0, %s10, %s8
  $region1: #{context_rnn_net_forward.1} parent=0
    #allocation4 [shape = 'u8[512]{0}', space=smem, size = 0x200, scoped, tag = 'input window, operand 0, single buffered']
    #allocation5 [shape = 's32[1]{0}', space=sflag, size = 0x4, scoped, tag = 'scoped memory for context_rnn_net_forward.1']
    #allocation6 [shape = 's32[1]{0}', space=sflag, size = 0x4, scoped, tag = 'scoped memory for context_rnn_net_forward.1']
    #allocation7 [shape = 'u8[8192]{0}', space=vmem, size = 0x2000, scoped, tag = 'output window, operand 0, single buffered']
    #allocation8 [shape = 'u8[512]{0}', space=vmem, size = 0x400, scoped, tag = 'output window, operand 1, single buffered']
    #allocation9 [shape = 's32[1]{0}', space=sflag, size = 0x4, scoped, tag = 'scoped memory for context_rnn_net_forward.1']
    %12 = vsyncpa [#allocation6], 0
    %13 = vsyncpa [#allocation5], 0
    %14 = vsyncpa [#allocation9], 0
    // Predicated region
    $region2: #{context_rnn_net_forward.1} parent=1 // pred_check
      _
    $region3: #{context_rnn_net_forward.1} parent=1 // pred_check_branch
      %16 = sbr.rel (0) target = $region5
    $region4: #{context_rnn_net_forward.1} parent=1 // pred_region
      %18 = vsyncadd [#allocation6], 0
      %s20 = sshll.u32 %s0, 4
      %s21 = int_to_ptr.vmem [resolvable:$true] %s20
      %23 = dma.vmem_to_smem %s21, 16, [#allocation4], [#allocation6]
    $region5: #{context_rnn_net_forward.1} parent=1 // pred_fallthru
      _
    // Predicated region
    $region6: #{context_rnn_net_forward.1} parent=1 // pred_check
      _
    $region7: #{context_rnn_net_forward.1} parent=1 // pred_check_branch
      %25 = sbr.rel (0) target = $region9
    $region8: #{context_rnn_net_forward.1} parent=1 // pred_region
      _
    $region9: #{context_rnn_net_forward.1} parent=1 // pred_fallthru
      _
    // Predicated region
    $region10: #{context_rnn_net_forward.1} parent=1 // pred_check
      _
    $region11: #{context_rnn_net_forward.1} parent=1 // pred_check_branch
      %27 = sbr.rel (0) target = $region13
    $region12: #{context_rnn_net_forward.1} parent=1 // pred_region
      _
    $region13: #{context_rnn_net_forward.1} parent=1 // pred_fallthru
      _
    // Predicated region
    $region14: #{context_rnn_net_forward.1} parent=1 // pred_check
      _
    $region15: #{context_rnn_net_forward.1} parent=1 // pred_check_branch
      %29 = sbr.rel (0) target = $region17
    $region16: #{context_rnn_net_forward.1} parent=1 // pred_region
      _
    $region17: #{context_rnn_net_forward.1} parent=1 // pred_fallthru
      _
    // Predicated region
    $region18: #{context_rnn_net_forward.1} parent=1 // pred_check
      _
    $region19: #{context_rnn_net_forward.1} parent=1 // pred_check_branch
      %31 = sbr.rel (0) target = $region21
    $region20: #{context_rnn_net_forward.1} parent=1 // pred_region
      _
    $region21: #{context_rnn_net_forward.1} parent=1 // pred_fallthru
      _
    // Predicated region
    $region22: #{context_rnn_net_forward.1} parent=1 // pred_check
      _
    $region23: #{context_rnn_net_forward.1} parent=1 // pred_check_branch
      %33 = sbr.rel (0) target = $region25
    $region24: #{context_rnn_net_forward.1} parent=1 // pred_region
      %35 = dma.done [#allocation6], 16
    $region25: #{context_rnn_net_forward.1} parent=1 // pred_fallthru
      _
    %36 = sfence
    %s37 = sld [smem:[#allocation4]]
    %s38 = sld [smem:[#allocation4 + $0x1]]
    %s39 = sld [smem:[#allocation4 + $0x2]]
    %v40 = vld [vmem:[%s1] sm:$0x3]
    %v41 = vmul.f32 %v40, %v40
    %vm42 = vcmask 254976
    %v43 = vsel %vm42, %v41, 0.0
    %44 = vadd.xlane.f32.xlu0 %v43
    %v45 = vpop.xlane.xlu0 %44
    %v46 = vrsqrt.pop %v45
    %v47 = vmul.f32 %v46, %v45
    %v48 = vmul.f32 %v47, %v46
    %v49 = vmul.f32 0.5, %v48
    %v50 = vsub.f32 1.5, %v49
    %v51 = vmul.f32 %v46, %v50
    %v52 = vmul.f32 %v45, %v51
    %vm53 = vcmp.eq.f32.partialorder %v45, inf
    %v54 = vsel %vm53, %v45, %v52
    %vm55 = vcmp.eq.f32.partialorder %v45, 0.0
    %v56 = vand.u32 %v45, 2147483648
    %v57 = vsel %vm55, %v56, %v54
    %58 = vadd.xlane.f32.xlu0 0.0
    %v59 = vpop.xlane.xlu0 %58
    %v60 = vrsqrt.pop %v59
    %v61 = vmul.f32 %v60, %v59
    %v62 = vmul.f32 %v61, %v60
    %v63 = vmul.f32 0.5, %v62
    %v64 = vsub.f32 1.5, %v63
    %v65 = vmul.f32 %v60, %v64
    %v66 = vmul.f32 %v59, %v65
    %vm67 = vcmp.eq.f32.partialorder %v59, inf
    %v68 = vsel %vm67, %v59, %v66
    %vm69 = vcmp.eq.f32.partialorder %v59, 0.0
    %v70 = vand.u32 %v59, 2147483648
    %v71 = vsel %vm69, %v70, %v68
    %v72 = vadd.f32 %v57, %v71
    %v73 = vrcp.pop %v72
    %v74 = vmul.f32 %v72, %v73
    %v75 = vsub.f32 1.0, %v74
    %v76 = vmul.f32 %v73, %v75
    %v77 = vadd.f32 %v73, %v76
    %vm78 = vweird.f32 %v72
    %vm79 = vweird.f32 %v73
    %vm80 = vmor %vm78, %vm79
    %v81 = vsel %vm80, %v73, %v77
    %v82 = vand.u32 2147483647, %v72
    %vm83 = vcmp.eq.f32.partialorder %v82, 8.507059e+37
    %v84 = vand.u32 %v72, 2147483648
    %v85 = vor.u32 1.1754944e-38, %v84
    %v86 = vsel %vm83, %v85, %v81
    %v87 = vmul.f32 %v57, %v86
    %v88 = vstv %s38
    %v89 = vmul.f32 %v88, %v87
    %v90 = vstv %s39
    %v91 = vpow.f32 %v89, %v90
    %v92 = vstv %s37
    %v93 = vmul.f32 %v92, %v91
    %v94 = vmax.f32 %v93, 0.0
    %v95 = vmin.f32 %v94, 1.0
    %v96 = vsub.f32 1.0, %v95
    %v97 = vmul.f32 %v96, 0.0
    %v98 = vmul.f32 %v95, %v40
    %v99 = vadd.f32 %v97, %v98
    %100 = vst.msk [vmem:[#allocation2] sm:$0x3] %vm42, %v99
    %v101 = vld [vmem:[%s1 + $0x2] sm:$0x3]
    %v102 = vmul.f32 %v101, %v101
    %v103 = vsel %vm42, %v102, 0.0
    %104 = vadd.xlane.f32.xlu0 %v103
    %v105 = vpop.xlane.xlu0 %104
    %v106 = vrsqrt.pop %v105
    %v107 = vmul.f32 %v106, %v105
    %v108 = vmul.f32 %v107, %v106
    %v109 = vmul.f32 0.5, %v108
    %v110 = vsub.f32 1.5, %v109
    %v111 = vmul.f32 %v106, %v110
    %v112 = vmul.f32 %v105, %v111
    %vm113 = vcmp.eq.f32.partialorder %v105, inf
    %v114 = vsel %vm113, %v105, %v112
    %vm115 = vcmp.eq.f32.partialorder %v105, 0.0
    %v116 = vand.u32 %v105, 2147483648
    %v117 = vsel %vm115, %v116, %v114
    %v118 = vmul.f32 %v99, %v99
    %v119 = vsel %vm42, %v118, 0.0
    %120 = vadd.xlane.f32.xlu0 %v119
    %v121 = vpop.xlane.xlu0 %120
    %v122 = vrsqrt.pop %v121
    %v123 = vmul.f32 %v122, %v121
    %v124 = vmul.f32 %v123, %v122
    %v125 = vmul.f32 0.5, %v124
    %v126 = vsub.f32 1.5, %v125
    %v127 = vmul.f32 %v122, %v126
    %v128 = vmul.f32 %v121, %v127
    %vm129 = vcmp.eq.f32.partialorder %v121, inf
    %v130 = vsel %vm129, %v121, %v128
    %vm131 = vcmp.eq.f32.partialorder %v121, 0.0
    %v132 = vand.u32 %v121, 2147483648
    %v133 = vsel %vm131, %v132, %v130
    %v134 = vadd.f32 %v117, %v133
    %v135 = vrcp.pop %v134
    %v136 = vmul.f32 %v134, %v135
    %v137 = vsub.f32 1.0, %v136
    %v138 = vmul.f32 %v135, %v137
    %v139 = vadd.f32 %v135, %v138
    %vm140 = vweird.f32 %v134
    %vm141 = vweird.f32 %v135
    %vm142 = vmor %vm140, %vm141
    %v143 = vsel %vm142, %v135, %v139
    %v144 = vand.u32 2147483647, %v134
    %vm145 = vcmp.eq.f32.partialorder %v144, 8.507059e+37
    %v146 = vand.u32 %v134, 2147483648
    %v147 = vor.u32 1.1754944e-38, %v146
    %v148 = vsel %vm145, %v147, %v143
    %v149 = vmul.f32 %v117, %v148
    %v150 = vmul.f32 %v88, %v149
    %v151 = vpow.f32 %v150, %v90
    %v152 = vmul.f32 %v92, %v151
    %v153 = vmax.f32 %v152, 0.0
    %v154 = vmin.f32 %v153, 1.0
    %v155 = vsub.f32 1.0, %v154
    %v156 = vmul.f32 %v155, %v99
    %v157 = vmul.f32 %v154, %v101
    %v158 = vadd.f32 %v156, %v157
    %159 = vst.msk [vmem:[#allocation2 + $0x2] sm:$0x3] %vm42, %v158
    %v160 = vld [vmem:[%s1 + $0x4] sm:$0x3]
    %v161 = vmul.f32 %v160, %v160
    %v162 = vsel %vm42, %v161, 0.0
    %163 = vadd.xlane.f32.xlu0 %v162
    %v164 = vpop.xlane.xlu0 %163
    %v165 = vrsqrt.pop %v164
    %v166 = vmul.f32 %v165, %v164
    %v167 = vmul.f32 %v166, %v165
    %v168 = vmul.f32 0.5, %v167
    %v169 = vsub.f32 1.5, %v168
    %v170 = vmul.f32 %v165, %v169
    %v171 = vmul.f32 %v164, %v170
    %vm172 = vcmp.eq.f32.partialorder %v164, inf
    %v173 = vsel %vm172, %v164, %v171
    %vm174 = vcmp.eq.f32.partialorder %v164, 0.0
    %v175 = vand.u32 %v164, 2147483648
    %v176 = vsel %vm174, %v175, %v173
    %v177 = vmul.f32 %v158, %v158
    %v178 = vsel %vm42, %v177, 0.0
    %179 = vadd.xlane.f32.xlu0 %v178
    %v180 = vpop.xlane.xlu0 %179
    %v181 = vrsqrt.pop %v180
    %v182 = vmul.f32 %v181, %v180
    %v183 = vmul.f32 %v182, %v181
    %v184 = vmul.f32 0.5, %v183
    %v185 = vsub.f32 1.5, %v184
    %v186 = vmul.f32 %v181, %v185
    %v187 = vmul.f32 %v180, %v186
    %vm188 = vcmp.eq.f32.partialorder %v180, inf
    %v189 = vsel %vm188, %v180, %v187
    %vm190 = vcmp.eq.f32.partialorder %v180, 0.0
    %v191 = vand.u32 %v180, 2147483648
    %v192 = vsel %vm190, %v191, %v189
    %v193 = vadd.f32 %v176, %v192
    %v194 = vrcp.pop %v193
    %v195 = vmul.f32 %v193, %v194
    %v196 = vsub.f32 1.0, %v195
    %v197 = vmul.f32 %v194, %v196
    %v198 = vadd.f32 %v194, %v197
    %vm199 = vweird.f32 %v193
    %vm200 = vweird.f32 %v194
    %vm201 = vmor %vm199, %vm200
    %v202 = vsel %vm201, %v194, %v198
    %v203 = vand.u32 2147483647, %v193
    %vm204 = vcmp.eq.f32.partialorder %v203, 8.507059e+37
    %v205 = vand.u32 %v193, 2147483648
    %v206 = vor.u32 1.1754944e-38, %v205
    %v207 = vsel %vm204, %v206, %v202
    %v208 = vmul.f32 %v176, %v207
    %v209 = vmul.f32 %v88, %v208
    %v210 = vpow.f32 %v209, %v90
    %v211 = vmul.f32 %v92, %v210
    %v212 = vmax.f32 %v211, 0.0
    %v213 = vmin.f32 %v212, 1.0
    %v214 = vsub.f32 1.0, %v213
    %v215 = vmul.f32 %v214, %v158
    %v216 = vmul.f32 %v213, %v160
    %v217 = vadd.f32 %v215, %v216
    %218 = vst.msk [vmem:[#allocation2 + $0x4] sm:$0x3] %vm42, %v217
    %v219 = vld [vmem:[%s1 + $0x6] sm:$0x3]
    %v220 = vmul.f32 %v219, %v219
    %v221 = vsel %vm42, %v220, 0.0
    %222 = vadd.xlane.f32.xlu0 %v221
    %v223 = vpop.xlane.xlu0 %222
    %v224 = vrsqrt.pop %v223
    %v225 = vmul.f32 %v224, %v223
    %v226 = vmul.f32 %v225, %v224
    %v227 = vmul.f32 0.5, %v226
    %v228 = vsub.f32 1.5, %v227
    %v229 = vmul.f32 %v224, %v228
    %v230 = vmul.f32 %v223, %v229
    %vm231 = vcmp.eq.f32.partialorder %v223, inf
    %v232 = vsel %vm231, %v223, %v230
    %vm233 = vcmp.eq.f32.partialorder %v223, 0.0
    %v234 = vand.u32 %v223, 2147483648
    %v235 = vsel %vm233, %v234, %v232
    %v236 = vmul.f32 %v217, %v217
    %v237 = vsel %vm42, %v236, 0.0
    %238 = vadd.xlane.f32.xlu0 %v237
    %v239 = vpop.xlane.xlu0 %238
    %v240 = vrsqrt.pop %v239
    %v241 = vmul.f32 %v240, %v239
    %v242 = vmul.f32 %v241, %v240
    %v243 = vmul.f32 0.5, %v242
    %v244 = vsub.f32 1.5, %v243
    %v245 = vmul.f32 %v240, %v244
    %v246 = vmul.f32 %v239, %v245
    %vm247 = vcmp.eq.f32.partialorder %v239, inf
    %v248 = vsel %vm247, %v239, %v246
    %vm249 = vcmp.eq.f32.partialorder %v239, 0.0
    %v250 = vand.u32 %v239, 2147483648
    %v251 = vsel %vm249, %v250, %v248
    %v252 = vadd.f32 %v235, %v251
    %v253 = vrcp.pop %v252
    %v254 = vmul.f32 %v252, %v253
    %v255 = vsub.f32 1.0, %v254
    %v256 = vmul.f32 %v253, %v255
    %v257 = vadd.f32 %v253, %v256
    %vm258 = vweird.f32 %v252
    %vm259 = vweird.f32 %v253
    %vm260 = vmor %vm258, %vm259
    %v261 = vsel %vm260, %v253, %v257
    %v262 = vand.u32 2147483647, %v252
    %vm263 = vcmp.eq.f32.partialorder %v262, 8.507059e+37
    %v264 = vand.u32 %v252, 2147483648
    %v265 = vor.u32 1.1754944e-38, %v264
    %v266 = vsel %vm263, %v265, %v261
    %v267 = vmul.f32 %v235, %v266
    %v268 = vmul.f32 %v88, %v267
    %v269 = vpow.f32 %v268, %v90
    %v270 = vmul.f32 %v92, %v269
    %v271 = vmax.f32 %v270, 0.0
    %v272 = vmin.f32 %v271, 1.0
    %v273 = vsub.f32 1.0, %v272
    %v274 = vmul.f32 %v273, %v217
    %v275 = vmul.f32 %v272, %v219
    %v276 = vadd.f32 %v274, %v275
    %277 = vst.msk [vmem:[#allocation2 + $0x6] sm:$0x3] %vm42, %v276
    %v278 = vld [vmem:[%s1 + $0x8] sm:$0x3]
    %v279 = vmul.f32 %v278, %v278
    %v280 = vsel %vm42, %v279, 0.0
    %281 = vadd.xlane.f32.xlu0 %v280
    %v282 = vpop.xlane.xlu0 %281
    %v283 = vrsqrt.pop %v282
    %v284 = vmul.f32 %v283, %v282
    %v285 = vmul.f32 %v284, %v283
    %v286 = vmul.f32 0.5, %v285
    %v287 = vsub.f32 1.5, %v286
    %v288 = vmul.f32 %v283, %v287
    %v289 = vmul.f32 %v282, %v288
    %vm290 = vcmp.eq.f32.partialorder %v282, inf
    %v291 = vsel %vm290, %v282, %v289
    %vm292 = vcmp.eq.f32.partialorder %v282, 0.0
    %v293 = vand.u32 %v282, 2147483648
    %v294 = vsel %vm292, %v293, %v291
    %v295 = vmul.f32 %v276, %v276
    %v296 = vsel %vm42, %v295, 0.0
    %297 = vadd.xlane.f32.xlu0 %v296
    %v298 = vpop.xlane.xlu0 %297
    %v299 = vrsqrt.pop %v298
    %v300 = vmul.f32 %v299, %v298
    %v301 = vmul.f32 %v300, %v299
    %v302 = vmul.f32 0.5, %v301
    %v303 = vsub.f32 1.5, %v302
    %v304 = vmul.f32 %v299, %v303
    %v305 = vmul.f32 %v298, %v304
    %vm306 = vcmp.eq.f32.partialorder %v298, inf
    %v307 = vsel %vm306, %v298, %v305
    %vm308 = vcmp.eq.f32.partialorder %v298, 0.0
    %v309 = vand.u32 %v298, 2147483648
    %v310 = vsel %vm308, %v309, %v307
    %v311 = vadd.f32 %v294, %v310
    %v312 = vrcp.pop %v311
    %v313 = vmul.f32 %v311, %v312
    %v314 = vsub.f32 1.0, %v313
    %v315 = vmul.f32 %v312, %v314
    %v316 = vadd.f32 %v312, %v315
    %vm317 = vweird.f32 %v311
    %vm318 = vweird.f32 %v312
    %vm319 = vmor %vm317, %vm318
    %v320 = vsel %vm319, %v312, %v316
    %v321 = vand.u32 2147483647, %v311
    %vm322 = vcmp.eq.f32.partialorder %v321, 8.507059e+37
    %v323 = vand.u32 %v311, 2147483648
    %v324 = vor.u32 1.1754944e-38, %v323
    %v325 = vsel %vm322, %v324, %v320
    %v326 = vmul.f32 %v294, %v325
    %v327 = vmul.f32 %v88, %v326
    %v328 = vpow.f32 %v327, %v90
    %v329 = vmul.f32 %v92, %v328
    %v330 = vmax.f32 %v329, 0.0
    %v331 = vmin.f32 %v330, 1.0
    %v332 = vsub.f32 1.0, %v331
    %v333 = vmul.f32 %v332, %v276
    %v334 = vmul.f32 %v331, %v278
    %v335 = vadd.f32 %v333, %v334
    %336 = vst.msk [vmem:[#allocation2 + $0x8] sm:$0x3] %vm42, %v335
    %v337 = vld [vmem:[%s1 + $0xa] sm:$0x3]
    %v338 = vmul.f32 %v337, %v337
    %v339 = vsel %vm42, %v338, 0.0
    %340 = vadd.xlane.f32.xlu0 %v339
    %v341 = vpop.xlane.xlu0 %340
    %v342 = vrsqrt.pop %v341
    %v343 = vmul.f32 %v342, %v341
    %v344 = vmul.f32 %v343, %v342
    %v345 = vmul.f32 0.5, %v344
    %v346 = vsub.f32 1.5, %v345
    %v347 = vmul.f32 %v342, %v346
    %v348 = vmul.f32 %v341, %v347
    %vm349 = vcmp.eq.f32.partialorder %v341, inf
    %v350 = vsel %vm349, %v341, %v348
    %vm351 = vcmp.eq.f32.partialorder %v341, 0.0
    %v352 = vand.u32 %v341, 2147483648
    %v353 = vsel %vm351, %v352, %v350
    %v354 = vmul.f32 %v335, %v335
    %v355 = vsel %vm42, %v354, 0.0
    %356 = vadd.xlane.f32.xlu0 %v355
    %v357 = vpop.xlane.xlu0 %356
    %v358 = vrsqrt.pop %v357
    %v359 = vmul.f32 %v358, %v357
    %v360 = vmul.f32 %v359, %v358
    %v361 = vmul.f32 0.5, %v360
    %v362 = vsub.f32 1.5, %v361
    %v363 = vmul.f32 %v358, %v362
    %v364 = vmul.f32 %v357, %v363
    %vm365 = vcmp.eq.f32.partialorder %v357, inf
    %v366 = vsel %vm365, %v357, %v364
    %vm367 = vcmp.eq.f32.partialorder %v357, 0.0
    %v368 = vand.u32 %v357, 2147483648
    %v369 = vsel %vm367, %v368, %v366
    %v370 = vadd.f32 %v353, %v369
    %v371 = vrcp.pop %v370
    %v372 = vmul.f32 %v370, %v371
    %v373 = vsub.f32 1.0, %v372
    %v374 = vmul.f32 %v371, %v373
    %v375 = vadd.f32 %v371, %v374
    %vm376 = vweird.f32 %v370
    %vm377 = vweird.f32 %v371
    %vm378 = vmor %vm376, %vm377
    %v379 = vsel %vm378, %v371, %v375
    %v380 = vand.u32 2147483647, %v370
    %vm381 = vcmp.eq.f32.partialorder %v380, 8.507059e+37
    %v382 = vand.u32 %v370, 2147483648
    %v383 = vor.u32 1.1754944e-38, %v382
    %v384 = vsel %vm381, %v383, %v379
    %v385 = vmul.f32 %v353, %v384
    %v386 = vmul.f32 %v88, %v385
    %v387 = vpow.f32 %v386, %v90
    %v388 = vmul.f32 %v92, %v387
    %v389 = vmax.f32 %v388, 0.0
    %v390 = vmin.f32 %v389, 1.0
    %v391 = vsub.f32 1.0, %v390
    %v392 = vmul.f32 %v391, %v335
    %v393 = vmul.f32 %v390, %v337
    %v394 = vadd.f32 %v392, %v393
    %395 = vst.msk [vmem:[#allocation2 + $0xa] sm:$0x3] %vm42, %v394
    %v396 = vld [vmem:[%s1 + $0xc] sm:$0x3]
    %v397 = vmul.f32 %v396, %v396
    %v398 = vsel %vm42, %v397, 0.0
    %399 = vadd.xlane.f32.xlu0 %v398
    %v400 = vpop.xlane.xlu0 %399
    %v401 = vrsqrt.pop %v400
    %v402 = vmul.f32 %v401, %v400
    %v403 = vmul.f32 %v402, %v401
    %v404 = vmul.f32 0.5, %v403
    %v405 = vsub.f32 1.5, %v404
    %v406 = vmul.f32 %v401, %v405
    %v407 = vmul.f32 %v400, %v406
    %vm408 = vcmp.eq.f32.partialorder %v400, inf
    %v409 = vsel %vm408, %v400, %v407
    %vm410 = vcmp.eq.f32.partialorder %v400, 0.0
    %v411 = vand.u32 %v400, 2147483648
    %v412 = vsel %vm410, %v411, %v409
    %v413 = vmul.f32 %v394, %v394
    %v414 = vsel %vm42, %v413, 0.0
    %415 = vadd.xlane.f32.xlu0 %v414
    %v416 = vpop.xlane.xlu0 %415
    %v417 = vrsqrt.pop %v416
    %v418 = vmul.f32 %v417, %v416
    %v419 = vmul.f32 %v418, %v417
    %v420 = vmul.f32 0.5, %v419
    %v421 = vsub.f32 1.5, %v420
    %v422 = vmul.f32 %v417, %v421
    %v423 = vmul.f32 %v416, %v422
    %vm424 = vcmp.eq.f32.partialorder %v416, inf
    %v425 = vsel %vm424, %v416, %v423
    %vm426 = vcmp.eq.f32.partialorder %v416, 0.0
    %v427 = vand.u32 %v416, 2147483648
    %v428 = vsel %vm426, %v427, %v425
    %v429 = vadd.f32 %v412, %v428
    %v430 = vrcp.pop %v429
    %v431 = vmul.f32 %v429, %v430
    %v432 = vsub.f32 1.0, %v431
    %v433 = vmul.f32 %v430, %v432
    %v434 = vadd.f32 %v430, %v433
    %vm435 = vweird.f32 %v429
    %vm436 = vweird.f32 %v430
    %vm437 = vmor %vm435, %vm436
    %v438 = vsel %vm437, %v430, %v434
    %v439 = vand.u32 2147483647, %v429
    %vm440 = vcmp.eq.f32.partialorder %v439, 8.507059e+37
    %v441 = vand.u32 %v429, 2147483648
    %v442 = vor.u32 1.1754944e-38, %v441
    %v443 = vsel %vm440, %v442, %v438
    %v444 = vmul.f32 %v412, %v443
    %v445 = vmul.f32 %v88, %v444
    %v446 = vpow.f32 %v445, %v90
    %v447 = vmul.f32 %v92, %v446
    %v448 = vmax.f32 %v447, 0.0
    %v449 = vmin.f32 %v448, 1.0
    %v450 = vsub.f32 1.0, %v449
    %v451 = vmul.f32 %v450, %v394
    %v452 = vmul.f32 %v449, %v396
    %v453 = vadd.f32 %v451, %v452
    %454 = vst.msk [vmem:[#allocation2 + $0xc] sm:$0x3] %vm42, %v453
    %v455 = vld [vmem:[%s1 + $0xe] sm:$0x3]
    %v456 = vmul.f32 %v455, %v455
    %v457 = vsel %vm42, %v456, 0.0
    %458 = vadd.xlane.f32.xlu0 %v457
    %v459 = vpop.xlane.xlu0 %458
    %v460 = vrsqrt.pop %v459
    %v461 = vmul.f32 %v460, %v459
    %v462 = vmul.f32 %v461, %v460
    %v463 = vmul.f32 0.5, %v462
    %v464 = vsub.f32 1.5, %v463
    %v465 = vmul.f32 %v460, %v464
    %v466 = vmul.f32 %v459, %v465
    %vm467 = vcmp.eq.f32.partialorder %v459, inf
    %v468 = vsel %vm467, %v459, %v466
    %vm469 = vcmp.eq.f32.partialorder %v459, 0.0
    %v470 = vand.u32 %v459, 2147483648
    %v471 = vsel %vm469, %v470, %v468
    %v472 = vmul.f32 %v453, %v453
    %v473 = vsel %vm42, %v472, 0.0
    %474 = vadd.xlane.f32.xlu0 %v473
    %v475 = vpop.xlane.xlu0 %474
    %v476 = vrsqrt.pop %v475
    %v477 = vmul.f32 %v476, %v475
    %v478 = vmul.f32 %v477, %v476
    %v479 = vmul.f32 0.5, %v478
    %v480 = vsub.f32 1.5, %v479
    %v481 = vmul.f32 %v476, %v480
    %v482 = vmul.f32 %v475, %v481
    %vm483 = vcmp.eq.f32.partialorder %v475, inf
    %v484 = vsel %vm483, %v475, %v482
    %vm485 = vcmp.eq.f32.partialorder %v475, 0.0
    %v486 = vand.u32 %v475, 2147483648
    %v487 = vsel %vm485, %v486, %v484
    %v488 = vadd.f32 %v471, %v487
    %v489 = vrcp.pop %v488
    %v490 = vmul.f32 %v488, %v489
    %v491 = vsub.f32 1.0, %v490
    %v492 = vmul.f32 %v489, %v491
    %v493 = vadd.f32 %v489, %v492
    %vm494 = vweird.f32 %v488
    %vm495 = vweird.f32 %v489
    %vm496 = vmor %vm494, %vm495
    %v497 = vsel %vm496, %v489, %v493
    %v498 = vand.u32 2147483647, %v488
    %vm499 = vcmp.eq.f32.partialorder %v498, 8.507059e+37
    %v500 = vand.u32 %v488, 2147483648
    %v501 = vor.u32 1.1754944e-38, %v500
    %v502 = vsel %vm499, %v501, %v497
    %v503 = vmul.f32 %v471, %v502
    %v504 = vmul.f32 %v88, %v503
    %v505 = vpow.f32 %v504, %v90
    %v506 = vmul.f32 %v92, %v505
    %v507 = vmax.f32 %v506, 0.0
    %v508 = vmin.f32 %v507, 1.0
    %v509 = vsub.f32 1.0, %v508
    %v510 = vmul.f32 %v509, %v453
    %v511 = vmul.f32 %v508, %v455
    %v512 = vadd.f32 %v510, %v511
    %513 = vst.msk [vmem:[#allocation2 + $0xe] sm:$0x3] %vm42, %v512
    %v514 = vld [vmem:[#allocation2] sm:$0xff]
    %v515 = vld [vmem:[#allocation2 + $0x8] sm:$0xff]
    %v516 = vld [vmem:[%s2] sm:$0xff]
    %v517 = vld [vmem:[%s2 + $0x8] sm:$0xff]
    %519 = vset.pattern.permute.xlu0 0
    %520 = vperm.xlu0 %519, %v516
    %v521 = vpop.permute.xlu0 %520
    %524 = vset.pattern.permute.xlu0 0
    %525 = vperm.xlu0 %524, %v517
    %v526 = vpop.permute.xlu0 %525
    %v528 = vmul.f32 %v521, %v514
    %v529 = vmul.f32 %v526, %v515
    %vm530 = vcmask 261120
    %531 = vst.msk [vmem:[#allocation3] sm:$0xff] %vm530, %v528
    %532 = vst.msk [vmem:[#allocation3 + $0x40] sm:$0xff] %vm530, %v529
    %533 = vset.pattern.permute.xlu0 1
    %534 = vperm.xlu0 %533, %v516
    %v535 = vpop.permute.xlu0 %534
    %537 = vset.pattern.permute.xlu0 1
    %538 = vperm.xlu0 %537, %v517
    %v539 = vpop.permute.xlu0 %538
    %v541 = vmul.f32 %v535, %v514
    %v542 = vmul.f32 %v539, %v515
    %545 = vrot.lane.b32.xlu0 %v541, 32
    %v546 = vpop.permute.xlu0 %545
    %547 = vrot.lane.b32.xlu0 %v542, 32
    %v548 = vpop.permute.xlu0 %547
    %vm551 = vcmask 523520
    %552 = vst.msk [vmem:[#allocation3] sm:$0xff] %vm551, %v546
    %553 = vst.msk [vmem:[#allocation3 + $0x40] sm:$0xff] %vm551, %v548
    %554 = vset.pattern.permute.xlu0 2
    %555 = vperm.xlu0 %554, %v516
    %v556 = vpop.permute.xlu0 %555
    %558 = vset.pattern.permute.xlu0 2
    %559 = vperm.xlu0 %558, %v517
    %v560 = vpop.permute.xlu0 %559
    %v562 = vmul.f32 %v556, %v514
    %v563 = vmul.f32 %v560, %v515
    %566 = vrot.lane.b32.xlu0 %v562, 64
    %v567 = vpop.permute.xlu0 %566
    %568 = vrot.lane.b32.xlu0 %v563, 64
    %v569 = vpop.permute.xlu0 %568
    %vm572 = vcmask 785920
    %573 = vst.msk [vmem:[#allocation3] sm:$0xff] %vm572, %v567
    %574 = vst.msk [vmem:[#allocation3 + $0x40] sm:$0xff] %vm572, %v569
    %575 = vset.pattern.permute.xlu0 3
    %576 = vperm.xlu0 %575, %v516
    %v577 = vpop.permute.xlu0 %576
    %579 = vset.pattern.permute.xlu0 3
    %580 = vperm.xlu0 %579, %v517
    %v581 = vpop.permute.xlu0 %580
    %v583 = vmul.f32 %v577, %v514
    %v584 = vmul.f32 %v581, %v515
    %587 = vrot.lane.b32.xlu0 %v583, 96
    %v588 = vpop.permute.xlu0 %587
    %589 = vrot.lane.b32.xlu0 %v584, 96
    %v590 = vpop.permute.xlu0 %589
    %vm593 = vcmask 1048320
    %594 = vst.msk [vmem:[#allocation3] sm:$0xff] %vm593, %v588
    %595 = vst.msk [vmem:[#allocation3 + $0x40] sm:$0xff] %vm593, %v590
    %596 = vset.pattern.permute.xlu0 4
    %597 = vperm.xlu0 %596, %v516
    %v598 = vpop.permute.xlu0 %597
    %600 = vset.pattern.permute.xlu0 4
    %601 = vperm.xlu0 %600, %v517
    %v602 = vpop.permute.xlu0 %601
    %v604 = vmul.f32 %v598, %v514
    %v605 = vmul.f32 %v602, %v515
    %606 = vst.msk [vmem:[#allocation3 + $0x8] sm:$0xff] %vm530, %v604
    %607 = vst.msk [vmem:[#allocation3 + $0x48] sm:$0xff] %vm530, %v605
    %608 = vset.pattern.permute.xlu0 5
    %609 = vperm.xlu0 %608, %v516
    %v610 = vpop.permute.xlu0 %609
    %612 = vset.pattern.permute.xlu0 5
    %613 = vperm.xlu0 %612, %v517
    %v614 = vpop.permute.xlu0 %613
    %v616 = vmul.f32 %v610, %v514
    %v617 = vmul.f32 %v614, %v515
    %620 = vrot.lane.b32.xlu0 %v616, 32
    %v621 = vpop.permute.xlu0 %620
    %622 = vrot.lane.b32.xlu0 %v617, 32
    %v623 = vpop.permute.xlu0 %622
    %626 = vst.msk [vmem:[#allocation3 + $0x8] sm:$0xff] %vm551, %v621
    %627 = vst.msk [vmem:[#allocation3 + $0x48] sm:$0xff] %vm551, %v623
    %628 = vset.pattern.permute.xlu0 6
    %629 = vperm.xlu0 %628, %v516
    %v630 = vpop.permute.xlu0 %629
    %632 = vset.pattern.permute.xlu0 6
    %633 = vperm.xlu0 %632, %v517
    %v634 = vpop.permute.xlu0 %633
    %v636 = vmul.f32 %v630, %v514
    %v637 = vmul.f32 %v634, %v515
    %640 = vrot.lane.b32.xlu0 %v636, 64
    %v641 = vpop.permute.xlu0 %640
    %642 = vrot.lane.b32.xlu0 %v637, 64
    %v643 = vpop.permute.xlu0 %642
    %646 = vst.msk [vmem:[#allocation3 + $0x8] sm:$0xff] %vm572, %v641
    %647 = vst.msk [vmem:[#allocation3 + $0x48] sm:$0xff] %vm572, %v643
    %648 = vset.pattern.permute.xlu0 7
    %649 = vperm.xlu0 %648, %v516
    %v650 = vpop.permute.xlu0 %649
    %652 = vset.pattern.permute.xlu0 7
    %653 = vperm.xlu0 %652, %v517
    %v654 = vpop.permute.xlu0 %653
    %v656 = vmul.f32 %v650, %v514
    %v657 = vmul.f32 %v654, %v515
    %660 = vrot.lane.b32.xlu0 %v656, 96
    %v661 = vpop.permute.xlu0 %660
    %662 = vrot.lane.b32.xlu0 %v657, 96
    %v663 = vpop.permute.xlu0 %662
    %666 = vst.msk [vmem:[#allocation3 + $0x8] sm:$0xff] %vm593, %v661
    %667 = vst.msk [vmem:[#allocation3 + $0x48] sm:$0xff] %vm593, %v663
    %668 = vset.pattern.permute.xlu0 8
    %669 = vperm.xlu0 %668, %v516
    %v670 = vpop.permute.xlu0 %669
    %672 = vset.pattern.permute.xlu0 8
    %673 = vperm.xlu0 %672, %v517
    %v674 = vpop.permute.xlu0 %673
    %v676 = vmul.f32 %v670, %v514
    %v677 = vmul.f32 %v674, %v515
    %678 = vst.msk [vmem:[#allocation3 + $0x10] sm:$0xff] %vm530, %v676
    %679 = vst.msk [vmem:[#allocation3 + $0x50] sm:$0xff] %vm530, %v677
    %680 = vset.pattern.permute.xlu0 9
    %681 = vperm.xlu0 %680, %v516
    %v682 = vpop.permute.xlu0 %681
    %684 = vset.pattern.permute.xlu0 9
    %685 = vperm.xlu0 %684, %v517
    %v686 = vpop.permute.xlu0 %685
    %v688 = vmul.f32 %v682, %v514
    %v689 = vmul.f32 %v686, %v515
    %692 = vrot.lane.b32.xlu0 %v688, 32
    %v693 = vpop.permute.xlu0 %692
    %694 = vrot.lane.b32.xlu0 %v689, 32
    %v695 = vpop.permute.xlu0 %694
    %698 = vst.msk [vmem:[#allocation3 + $0x10] sm:$0xff] %vm551, %v693
    %699 = vst.msk [vmem:[#allocation3 + $0x50] sm:$0xff] %vm551, %v695
    %700 = vset.pattern.permute.xlu0 10
    %701 = vperm.xlu0 %700, %v516
    %v702 = vpop.permute.xlu0 %701
    %704 = vset.pattern.permute.xlu0 10
    %705 = vperm.xlu0 %704, %v517
    %v706 = vpop.permute.xlu0 %705
    %v708 = vmul.f32 %v702, %v514
    %v709 = vmul.f32 %v706, %v515
    %712 = vrot.lane.b32.xlu0 %v708, 64
    %v713 = vpop.permute.xlu0 %712
    %714 = vrot.lane.b32.xlu0 %v709, 64
    %v715 = vpop.permute.xlu0 %714
    %718 = vst.msk [vmem:[#allocation3 + $0x10] sm:$0xff] %vm572, %v713
    %719 = vst.msk [vmem:[#allocation3 + $0x50] sm:$0xff] %vm572, %v715
    %720 = vset.pattern.permute.xlu0 11
    %721 = vperm.xlu0 %720, %v516
    %v722 = vpop.permute.xlu0 %721
    %724 = vset.pattern.permute.xlu0 11
    %725 = vperm.xlu0 %724, %v517
    %v726 = vpop.permute.xlu0 %725
    %v728 = vmul.f32 %v722, %v514
    %v729 = vmul.f32 %v726, %v515
    %732 = vrot.lane.b32.xlu0 %v728, 96
    %v733 = vpop.permute.xlu0 %732
    %734 = vrot.lane.b32.xlu0 %v729, 96
    %v735 = vpop.permute.xlu0 %734
    %738 = vst.msk [vmem:[#allocation3 + $0x10] sm:$0xff] %vm593, %v733
    %739 = vst.msk [vmem:[#allocation3 + $0x50] sm:$0xff] %vm593, %v735
    %740 = vset.pattern.permute.xlu0 12
    %741 = vperm.xlu0 %740, %v516
    %v742 = vpop.permute.xlu0 %741
    %744 = vset.pattern.permute.xlu0 12
    %745 = vperm.xlu0 %744, %v517
    %v746 = vpop.permute.xlu0 %745
    %v748 = vmul.f32 %v742, %v514
    %v749 = vmul.f32 %v746, %v515
    %750 = vst.msk [vmem:[#allocation3 + $0x18] sm:$0xff] %vm530, %v748
    %751 = vst.msk [vmem:[#allocation3 + $0x58] sm:$0xff] %vm530, %v749
    %752 = vset.pattern.permute.xlu0 13
    %753 = vperm.xlu0 %752, %v516
    %v754 = vpop.permute.xlu0 %753
    %756 = vset.pattern.permute.xlu0 13
    %757 = vperm.xlu0 %756, %v517
    %v758 = vpop.permute.xlu0 %757
    %v760 = vmul.f32 %v754, %v514
    %v761 = vmul.f32 %v758, %v515
    %764 = vrot.lane.b32.xlu0 %v760, 32
    %v765 = vpop.permute.xlu0 %764
    %766 = vrot.lane.b32.xlu0 %v761, 32
    %v767 = vpop.permute.xlu0 %766
    %770 = vst.msk [vmem:[#allocation3 + $0x18] sm:$0xff] %vm551, %v765
    %771 = vst.msk [vmem:[#allocation3 + $0x58] sm:$0xff] %vm551, %v767
    %772 = vset.pattern.permute.xlu0 14
    %773 = vperm.xlu0 %772, %v516
    %v774 = vpop.permute.xlu0 %773
    %776 = vset.pattern.permute.xlu0 14
    %777 = vperm.xlu0 %776, %v517
    %v778 = vpop.permute.xlu0 %777
    %v780 = vmul.f32 %v774, %v514
    %v781 = vmul.f32 %v778, %v515
    %784 = vrot.lane.b32.xlu0 %v780, 64
    %v785 = vpop.permute.xlu0 %784
    %786 = vrot.lane.b32.xlu0 %v781, 64
    %v787 = vpop.permute.xlu0 %786
    %790 = vst.msk [vmem:[#allocation3 + $0x18] sm:$0xff] %vm572, %v785
    %791 = vst.msk [vmem:[#allocation3 + $0x58] sm:$0xff] %vm572, %v787
    %792 = vset.pattern.permute.xlu0 15
    %793 = vperm.xlu0 %792, %v516
    %v794 = vpop.permute.xlu0 %793
    %796 = vset.pattern.permute.xlu0 15
    %797 = vperm.xlu0 %796, %v517
    %v798 = vpop.permute.xlu0 %797
    %v800 = vmul.f32 %v794, %v514
    %v801 = vmul.f32 %v798, %v515
    %804 = vrot.lane.b32.xlu0 %v800, 96
    %v805 = vpop.permute.xlu0 %804
    %806 = vrot.lane.b32.xlu0 %v801, 96
    %v807 = vpop.permute.xlu0 %806
    %810 = vst.msk [vmem:[#allocation3 + $0x18] sm:$0xff] %vm593, %v805
    %811 = vst.msk [vmem:[#allocation3 + $0x58] sm:$0xff] %vm593, %v807
    %812 = vset.pattern.permute.xlu0 16
    %813 = vperm.xlu0 %812, %v516
    %v814 = vpop.permute.xlu0 %813
    %816 = vset.pattern.permute.xlu0 16
    %817 = vperm.xlu0 %816, %v517
    %v818 = vpop.permute.xlu0 %817
    %v820 = vmul.f32 %v814, %v514
    %v821 = vmul.f32 %v818, %v515
    %822 = vst.msk [vmem:[#allocation3 + $0x20] sm:$0xff] %vm530, %v820
    %823 = vst.msk [vmem:[#allocation3 + $0x60] sm:$0xff] %vm530, %v821
    %824 = vset.pattern.permute.xlu0 17
    %825 = vperm.xlu0 %824, %v516
    %v826 = vpop.permute.xlu0 %825
    %828 = vset.pattern.permute.xlu0 17
    %829 = vperm.xlu0 %828, %v517
    %v830 = vpop.permute.xlu0 %829
    %v832 = vmul.f32 %v826, %v514
    %v833 = vmul.f32 %v830, %v515
    %836 = vrot.lane.b32.xlu0 %v832, 32
    %v837 = vpop.permute.xlu0 %836
    %838 = vrot.lane.b32.xlu0 %v833, 32
    %v839 = vpop.permute.xlu0 %838
    %842 = vst.msk [vmem:[#allocation3 + $0x20] sm:$0xff] %vm551, %v837
    %843 = vst.msk [vmem:[#allocation3 + $0x60] sm:$0xff] %vm551, %v839
    %844 = vset.pattern.permute.xlu0 18
    %845 = vperm.xlu0 %844, %v516
    %v846 = vpop.permute.xlu0 %845
    %848 = vset.pattern.permute.xlu0 18
    %849 = vperm.xlu0 %848, %v517
    %v850 = vpop.permute.xlu0 %849
    %v852 = vmul.f32 %v846, %v514
    %v853 = vmul.f32 %v850, %v515
    %856 = vrot.lane.b32.xlu0 %v852, 64
    %v857 = vpop.permute.xlu0 %856
    %858 = vrot.lane.b32.xlu0 %v853, 64
    %v859 = vpop.permute.xlu0 %858
    %862 = vst.msk [vmem:[#allocation3 + $0x20] sm:$0xff] %vm572, %v857
    %863 = vst.msk [vmem:[#allocation3 + $0x60] sm:$0xff] %vm572, %v859
    %864 = vset.pattern.permute.xlu0 19
    %865 = vperm.xlu0 %864, %v516
    %v866 = vpop.permute.xlu0 %865
    %868 = vset.pattern.permute.xlu0 19
    %869 = vperm.xlu0 %868, %v517
    %v870 = vpop.permute.xlu0 %869
    %v872 = vmul.f32 %v866, %v514
    %v873 = vmul.f32 %v870, %v515
    %876 = vrot.lane.b32.xlu0 %v872, 96
    %v877 = vpop.permute.xlu0 %876
    %878 = vrot.lane.b32.xlu0 %v873, 96
    %v879 = vpop.permute.xlu0 %878
    %882 = vst.msk [vmem:[#allocation3 + $0x20] sm:$0xff] %vm593, %v877
    %883 = vst.msk [vmem:[#allocation3 + $0x60] sm:$0xff] %vm593, %v879
    %884 = vset.pattern.permute.xlu0 20
    %885 = vperm.xlu0 %884, %v516
    %v886 = vpop.permute.xlu0 %885
    %888 = vset.pattern.permute.xlu0 20
    %889 = vperm.xlu0 %888, %v517
    %v890 = vpop.permute.xlu0 %889
    %v892 = vmul.f32 %v886, %v514
    %v893 = vmul.f32 %v890, %v515
    %894 = vst.msk [vmem:[#allocation3 + $0x28] sm:$0xff] %vm530, %v892
    %895 = vst.msk [vmem:[#allocation3 + $0x68] sm:$0xff] %vm530, %v893
    %896 = vset.pattern.permute.xlu0 21
    %897 = vperm.xlu0 %896, %v516
    %v898 = vpop.permute.xlu0 %897
    %900 = vset.pattern.permute.xlu0 21
    %901 = vperm.xlu0 %900, %v517
    %v902 = vpop.permute.xlu0 %901
    %v904 = vmul.f32 %v898, %v514
    %v905 = vmul.f32 %v902, %v515
    %908 = vrot.lane.b32.xlu0 %v904, 32
    %v909 = vpop.permute.xlu0 %908
    %910 = vrot.lane.b32.xlu0 %v905, 32
    %v911 = vpop.permute.xlu0 %910
    %914 = vst.msk [vmem:[#allocation3 + $0x28] sm:$0xff] %vm551, %v909
    %915 = vst.msk [vmem:[#allocation3 + $0x68] sm:$0xff] %vm551, %v911
    %916 = vset.pattern.permute.xlu0 22
    %917 = vperm.xlu0 %916, %v516
    %v918 = vpop.permute.xlu0 %917
    %920 = vset.pattern.permute.xlu0 22
    %921 = vperm.xlu0 %920, %v517
    %v922 = vpop.permute.xlu0 %921
    %v924 = vmul.f32 %v918, %v514
    %v925 = vmul.f32 %v922, %v515
    %928 = vrot.lane.b32.xlu0 %v924, 64
    %v929 = vpop.permute.xlu0 %928
    %930 = vrot.lane.b32.xlu0 %v925, 64
    %v931 = vpop.permute.xlu0 %930
    %934 = vst.msk [vmem:[#allocation3 + $0x28] sm:$0xff] %vm572, %v929
    %935 = vst.msk [vmem:[#allocation3 + $0x68] sm:$0xff] %vm572, %v931
    %936 = vset.pattern.permute.xlu0 23
    %937 = vperm.xlu0 %936, %v516
    %v938 = vpop.permute.xlu0 %937
    %940 = vset.pattern.permute.xlu0 23
    %941 = vperm.xlu0 %940, %v517
    %v942 = vpop.permute.xlu0 %941
    %v944 = vmul.f32 %v938, %v514
    %v945 = vmul.f32 %v942, %v515
    %948 = vrot.lane.b32.xlu0 %v944, 96
    %v949 = vpop.permute.xlu0 %948
    %950 = vrot.lane.b32.xlu0 %v945, 96
    %v951 = vpop.permute.xlu0 %950
    %954 = vst.msk [vmem:[#allocation3 + $0x28] sm:$0xff] %vm593, %v949
    %955 = vst.msk [vmem:[#allocation3 + $0x68] sm:$0xff] %vm593, %v951
    %956 = vset.pattern.permute.xlu0 24
    %957 = vperm.xlu0 %956, %v516
    %v958 = vpop.permute.xlu0 %957
    %960 = vset.pattern.permute.xlu0 24
    %961 = vperm.xlu0 %960, %v517
    %v962 = vpop.permute.xlu0 %961
    %v964 = vmul.f32 %v958, %v514
    %v965 = vmul.f32 %v962, %v515
    %966 = vst.msk [vmem:[#allocation3 + $0x30] sm:$0xff] %vm530, %v964
    %967 = vst.msk [vmem:[#allocation3 + $0x70] sm:$0xff] %vm530, %v965
    %968 = vset.pattern.permute.xlu0 25
    %969 = vperm.xlu0 %968, %v516
    %v970 = vpop.permute.xlu0 %969
    %972 = vset.pattern.permute.xlu0 25
    %973 = vperm.xlu0 %972, %v517
    %v974 = vpop.permute.xlu0 %973
    %v976 = vmul.f32 %v970, %v514
    %v977 = vmul.f32 %v974, %v515
    %980 = vrot.lane.b32.xlu0 %v976, 32
    %v981 = vpop.permute.xlu0 %980
    %982 = vrot.lane.b32.xlu0 %v977, 32
    %v983 = vpop.permute.xlu0 %982
    %986 = vst.msk [vmem:[#allocation3 + $0x30] sm:$0xff] %vm551, %v981
    %987 = vst.msk [vmem:[#allocation3 + $0x70] sm:$0xff] %vm551, %v983
    %988 = vset.pattern.permute.xlu0 26
    %989 = vperm.xlu0 %988, %v516
    %v990 = vpop.permute.xlu0 %989
    %992 = vset.pattern.permute.xlu0 26
    %993 = vperm.xlu0 %992, %v517
    %v994 = vpop.permute.xlu0 %993
    %v996 = vmul.f32 %v990, %v514
    %v997 = vmul.f32 %v994, %v515
    %1000 = vrot.lane.b32.xlu0 %v996, 64
    %v1001 = vpop.permute.xlu0 %1000
    %1002 = vrot.lane.b32.xlu0 %v997, 64
    %v1003 = vpop.permute.xlu0 %1002
    %1006 = vst.msk [vmem:[#allocation3 + $0x30] sm:$0xff] %vm572, %v1001
    %1007 = vst.msk [vmem:[#allocation3 + $0x70] sm:$0xff] %vm572, %v1003
    %1008 = vset.pattern.permute.xlu0 27
    %1009 = vperm.xlu0 %1008, %v516
    %v1010 = vpop.permute.xlu0 %1009
    %1012 = vset.pattern.permute.xlu0 27
    %1013 = vperm.xlu0 %1012, %v517
    %v1014 = vpop.permute.xlu0 %1013
    %v1016 = vmul.f32 %v1010, %v514
    %v1017 = vmul.f32 %v1014, %v515
    %1020 = vrot.lane.b32.xlu0 %v1016, 96
    %v1021 = vpop.permute.xlu0 %1020
    %1022 = vrot.lane.b32.xlu0 %v1017, 96
    %v1023 = vpop.permute.xlu0 %1022
    %1026 = vst.msk [vmem:[#allocation3 + $0x30] sm:$0xff] %vm593, %v1021
    %1027 = vst.msk [vmem:[#allocation3 + $0x70] sm:$0xff] %vm593, %v1023
    %1028 = vset.pattern.permute.xlu0 28
    %1029 = vperm.xlu0 %1028, %v516
    %v1030 = vpop.permute.xlu0 %1029
    %1032 = vset.pattern.permute.xlu0 28
    %1033 = vperm.xlu0 %1032, %v517
    %v1034 = vpop.permute.xlu0 %1033
    %v1036 = vmul.f32 %v1030, %v514
    %v1037 = vmul.f32 %v1034, %v515
    %1038 = vst.msk [vmem:[#allocation3 + $0x38] sm:$0xff] %vm530, %v1036
    %1039 = vst.msk [vmem:[#allocation3 + $0x78] sm:$0xff] %vm530, %v1037
    %1040 = vset.pattern.permute.xlu0 29
    %1041 = vperm.xlu0 %1040, %v516
    %v1042 = vpop.permute.xlu0 %1041
    %1044 = vset.pattern.permute.xlu0 29
    %1045 = vperm.xlu0 %1044, %v517
    %v1046 = vpop.permute.xlu0 %1045
    %v1048 = vmul.f32 %v1042, %v514
    %v1049 = vmul.f32 %v1046, %v515
    %1052 = vrot.lane.b32.xlu0 %v1048, 32
    %v1053 = vpop.permute.xlu0 %1052
    %1054 = vrot.lane.b32.xlu0 %v1049, 32
    %v1055 = vpop.permute.xlu0 %1054
    %1058 = vst.msk [vmem:[#allocation3 + $0x38] sm:$0xff] %vm551, %v1053
    %1059 = vst.msk [vmem:[#allocation3 + $0x78] sm:$0xff] %vm551, %v1055
    %1060 = vset.pattern.permute.xlu0 30
    %1061 = vperm.xlu0 %1060, %v516
    %v1062 = vpop.permute.xlu0 %1061
    %1064 = vset.pattern.permute.xlu0 30
    %1065 = vperm.xlu0 %1064, %v517
    %v1066 = vpop.permute.xlu0 %1065
    %v1068 = vmul.f32 %v1062, %v514
    %v1069 = vmul.f32 %v1066, %v515
    %1072 = vrot.lane.b32.xlu0 %v1068, 64
    %v1073 = vpop.permute.xlu0 %1072
    %1074 = vrot.lane.b32.xlu0 %v1069, 64
    %v1075 = vpop.permute.xlu0 %1074
    %1078 = vst.msk [vmem:[#allocation3 + $0x38] sm:$0xff] %vm572, %v1073
    %1079 = vst.msk [vmem:[#allocation3 + $0x78] sm:$0xff] %vm572, %v1075
    %1080 = vset.pattern.permute.xlu0 31
    %1081 = vperm.xlu0 %1080, %v516
    %v1082 = vpop.permute.xlu0 %1081
    %1084 = vset.pattern.permute.xlu0 31
    %1085 = vperm.xlu0 %1084, %v517
    %v1086 = vpop.permute.xlu0 %1085
    %v1088 = vmul.f32 %v1082, %v514
    %v1089 = vmul.f32 %v1086, %v515
    %1092 = vrot.lane.b32.xlu0 %v1088, 96
    %v1093 = vpop.permute.xlu0 %1092
    %1094 = vrot.lane.b32.xlu0 %v1089, 96
    %v1095 = vpop.permute.xlu0 %1094
    %1098 = vst.msk [vmem:[#allocation3 + $0x38] sm:$0xff] %vm593, %v1093
    %1099 = vst.msk [vmem:[#allocation3 + $0x78] sm:$0xff] %vm593, %v1095
    %v1100 = vld [vmem:[#allocation3] sm:$0xff]
    %v1101 = vld [vmem:[#allocation3 + $0x8] sm:$0xff]
    %v1102 = vld [vmem:[#allocation3 + $0x10] sm:$0xff]
    %v1103 = vld [vmem:[#allocation3 + $0x18] sm:$0xff]
    %v1104 = vld [vmem:[#allocation3 + $0x20] sm:$0xff]
    %v1105 = vld [vmem:[#allocation3 + $0x28] sm:$0xff]
    %v1106 = vld [vmem:[#allocation3 + $0x30] sm:$0xff]
    %v1107 = vld [vmem:[#allocation3 + $0x38] sm:$0xff]
    %v1108 = vld [vmem:[#allocation3 + $0x40] sm:$0xff]
    %v1109 = vld [vmem:[#allocation3 + $0x48] sm:$0xff]
    %v1110 = vld [vmem:[#allocation3 + $0x50] sm:$0xff]
    %v1111 = vld [vmem:[#allocation3 + $0x58] sm:$0xff]
    %v1112 = vld [vmem:[#allocation3 + $0x60] sm:$0xff]
    %v1113 = vld [vmem:[#allocation3 + $0x68] sm:$0xff]
    %v1114 = vld [vmem:[#allocation3 + $0x70] sm:$0xff]
    %v1115 = vld [vmem:[#allocation3 + $0x78] sm:$0xff]
    %v1116 = vld [vmem:[%s4] sm:$0xff]
    %v1117 = vld [vmem:[%s4 + $0x8] sm:$0xff]
    %v1118 = vld [vmem:[%s4 + $0x10] sm:$0xff]
    %v1119 = vld [vmem:[%s4 + $0x18] sm:$0xff]
    %v1120 = vld [vmem:[%s4 + $0x20] sm:$0xff]
    %v1121 = vld [vmem:[%s4 + $0x28] sm:$0xff]
    %v1122 = vld [vmem:[%s4 + $0x30] sm:$0xff]
    %v1123 = vld [vmem:[%s4 + $0x38] sm:$0xff]
    %v1124 = vld [vmem:[%s4 + $0x40] sm:$0xff]
    %v1125 = vld [vmem:[%s4 + $0x48] sm:$0xff]
    %v1126 = vld [vmem:[%s4 + $0x50] sm:$0xff]
    %v1127 = vld [vmem:[%s4 + $0x58] sm:$0xff]
    %v1128 = vld [vmem:[%s4 + $0x60] sm:$0xff]
    %v1129 = vld [vmem:[%s4 + $0x68] sm:$0xff]
    %v1130 = vld [vmem:[%s4 + $0x70] sm:$0xff]
    %v1131 = vld [vmem:[%s4 + $0x78] sm:$0xff]
    %v1132 = vld [vmem:[%s4 + $0x80] sm:$0xff]
    %v1133 = vld [vmem:[%s4 + $0x88] sm:$0xff]
    %v1134 = vld [vmem:[%s4 + $0x90] sm:$0xff]
    %v1135 = vld [vmem:[%s4 + $0x98] sm:$0xff]
    %v1136 = vld [vmem:[%s4 + $0xa0] sm:$0xff]
    %v1137 = vld [vmem:[%s4 + $0xa8] sm:$0xff]
    %v1138 = vld [vmem:[%s4 + $0xb0] sm:$0xff]
    %v1139 = vld [vmem:[%s4 + $0xb8] sm:$0xff]
    %v1140 = vld [vmem:[%s4 + $0xc0] sm:$0xff]
    %v1141 = vld [vmem:[%s4 + $0xc8] sm:$0xff]
    %v1142 = vld [vmem:[%s4 + $0xd0] sm:$0xff]
    %v1143 = vld [vmem:[%s4 + $0xd8] sm:$0xff]
    %v1144 = vld [vmem:[%s4 + $0xe0] sm:$0xff]
    %v1145 = vld [vmem:[%s4 + $0xe8] sm:$0xff]
    %v1146 = vld [vmem:[%s4 + $0xf0] sm:$0xff]
    %v1147 = vld [vmem:[%s4 + $0xf8] sm:$0xff]
    %v1148 = vld [vmem:[%s4 + $0x100] sm:$0xff]
    %v1149 = vld [vmem:[%s4 + $0x108] sm:$0xff]
    %v1150 = vld [vmem:[%s4 + $0x110] sm:$0xff]
    %v1151 = vld [vmem:[%s4 + $0x118] sm:$0xff]
    %v1152 = vld [vmem:[%s4 + $0x120] sm:$0xff]
    %v1153 = vld [vmem:[%s4 + $0x128] sm:$0xff]
    %v1154 = vld [vmem:[%s4 + $0x130] sm:$0xff]
    %v1155 = vld [vmem:[%s4 + $0x138] sm:$0xff]
    %v1156 = vld [vmem:[%s4 + $0x140] sm:$0xff]
    %v1157 = vld [vmem:[%s4 + $0x148] sm:$0xff]
    %v1158 = vld [vmem:[%s4 + $0x150] sm:$0xff]
    %v1159 = vld [vmem:[%s4 + $0x158] sm:$0xff]
    %v1160 = vld [vmem:[%s4 + $0x160] sm:$0xff]
    %v1161 = vld [vmem:[%s4 + $0x168] sm:$0xff]
    %v1162 = vld [vmem:[%s4 + $0x170] sm:$0xff]
    %v1163 = vld [vmem:[%s4 + $0x178] sm:$0xff]
    %v1164 = vld [vmem:[%s4 + $0x180] sm:$0xff]
    %v1165 = vld [vmem:[%s4 + $0x188] sm:$0xff]
    %v1166 = vld [vmem:[%s4 + $0x190] sm:$0xff]
    %v1167 = vld [vmem:[%s4 + $0x198] sm:$0xff]
    %v1168 = vld [vmem:[%s4 + $0x1a0] sm:$0xff]
    %v1169 = vld [vmem:[%s4 + $0x1a8] sm:$0xff]
    %v1170 = vld [vmem:[%s4 + $0x1b0] sm:$0xff]
    %v1171 = vld [vmem:[%s4 + $0x1b8] sm:$0xff]
    %v1172 = vld [vmem:[%s4 + $0x1c0] sm:$0xff]
    %v1173 = vld [vmem:[%s4 + $0x1c8] sm:$0xff]
    %v1174 = vld [vmem:[%s4 + $0x1d0] sm:$0xff]
    %v1175 = vld [vmem:[%s4 + $0x1d8] sm:$0xff]
    %v1176 = vld [vmem:[%s4 + $0x1e0] sm:$0xff]
    %v1177 = vld [vmem:[%s4 + $0x1e8] sm:$0xff]
    %v1178 = vld [vmem:[%s4 + $0x1f0] sm:$0xff]
    %v1179 = vld [vmem:[%s4 + $0x1f8] sm:$0xff]
    %v1180 = vld [vmem:[%s4 + $0x200] sm:$0xff]
    %v1181 = vld [vmem:[%s4 + $0x208] sm:$0xff]
    %v1182 = vld [vmem:[%s4 + $0x210] sm:$0xff]
    %v1183 = vld [vmem:[%s4 + $0x218] sm:$0xff]
    %v1184 = vld [vmem:[%s4 + $0x220] sm:$0xff]
    %v1185 = vld [vmem:[%s4 + $0x228] sm:$0xff]
    %v1186 = vld [vmem:[%s4 + $0x230] sm:$0xff]
    %v1187 = vld [vmem:[%s4 + $0x238] sm:$0xff]
    %v1188 = vld [vmem:[%s4 + $0x240] sm:$0xff]
    %v1189 = vld [vmem:[%s4 + $0x248] sm:$0xff]
    %v1190 = vld [vmem:[%s4 + $0x250] sm:$0xff]
    %v1191 = vld [vmem:[%s4 + $0x258] sm:$0xff]
    %v1192 = vld [vmem:[%s4 + $0x260] sm:$0xff]
    %v1193 = vld [vmem:[%s4 + $0x268] sm:$0xff]
    %v1194 = vld [vmem:[%s4 + $0x270] sm:$0xff]
    %v1195 = vld [vmem:[%s4 + $0x278] sm:$0xff]
    %v1196 = vld [vmem:[%s4 + $0x280] sm:$0xff]
    %v1197 = vld [vmem:[%s4 + $0x288] sm:$0xff]
    %v1198 = vld [vmem:[%s4 + $0x290] sm:$0xff]
    %v1199 = vld [vmem:[%s4 + $0x298] sm:$0xff]
    %v1200 = vld [vmem:[%s4 + $0x2a0] sm:$0xff]
    %v1201 = vld [vmem:[%s4 + $0x2a8] sm:$0xff]
    %v1202 = vld [vmem:[%s4 + $0x2b0] sm:$0xff]
    %v1203 = vld [vmem:[%s4 + $0x2b8] sm:$0xff]
    %v1204 = vld [vmem:[%s4 + $0x2c0] sm:$0xff]
    %v1205 = vld [vmem:[%s4 + $0x2c8] sm:$0xff]
    %v1206 = vld [vmem:[%s4 + $0x2d0] sm:$0xff]
    %v1207 = vld [vmem:[%s4 + $0x2d8] sm:$0xff]
    %v1208 = vld [vmem:[%s4 + $0x2e0] sm:$0xff]
    %v1209 = vld [vmem:[%s4 + $0x2e8] sm:$0xff]
    %v1210 = vld [vmem:[%s4 + $0x2f0] sm:$0xff]
    %v1211 = vld [vmem:[%s4 + $0x2f8] sm:$0xff]
    %v1212 = vld [vmem:[%s4 + $0x300] sm:$0xff]
    %v1213 = vld [vmem:[%s4 + $0x308] sm:$0xff]
    %v1214 = vld [vmem:[%s4 + $0x310] sm:$0xff]
    %v1215 = vld [vmem:[%s4 + $0x318] sm:$0xff]
    %v1216 = vld [vmem:[%s4 + $0x320] sm:$0xff]
    %v1217 = vld [vmem:[%s4 + $0x328] sm:$0xff]
    %v1218 = vld [vmem:[%s4 + $0x330] sm:$0xff]
    %v1219 = vld [vmem:[%s4 + $0x338] sm:$0xff]
    %v1220 = vld [vmem:[%s4 + $0x340] sm:$0xff]
    %v1221 = vld [vmem:[%s4 + $0x348] sm:$0xff]
    %v1222 = vld [vmem:[%s4 + $0x350] sm:$0xff]
    %v1223 = vld [vmem:[%s4 + $0x358] sm:$0xff]
    %v1224 = vld [vmem:[%s4 + $0x360] sm:$0xff]
    %v1225 = vld [vmem:[%s4 + $0x368] sm:$0xff]
    %v1226 = vld [vmem:[%s4 + $0x370] sm:$0xff]
    %v1227 = vld [vmem:[%s4 + $0x378] sm:$0xff]
    %v1228 = vld [vmem:[%s4 + $0x380] sm:$0xff]
    %v1229 = vld [vmem:[%s4 + $0x388] sm:$0xff]
    %v1230 = vld [vmem:[%s4 + $0x390] sm:$0xff]
    %v1231 = vld [vmem:[%s4 + $0x398] sm:$0xff]
    %v1232 = vld [vmem:[%s4 + $0x3a0] sm:$0xff]
    %v1233 = vld [vmem:[%s4 + $0x3a8] sm:$0xff]
    %v1234 = vld [vmem:[%s4 + $0x3b0] sm:$0xff]
    %v1235 = vld [vmem:[%s4 + $0x3b8] sm:$0xff]
    %v1236 = vld [vmem:[%s4 + $0x3c0] sm:$0xff]
    %v1237 = vld [vmem:[%s4 + $0x3c8] sm:$0xff]
    %v1238 = vld [vmem:[%s4 + $0x3d0] sm:$0xff]
    %v1239 = vld [vmem:[%s4 + $0x3d8] sm:$0xff]
    %v1240 = vld [vmem:[%s4 + $0x3e0] sm:$0xff]
    %v1241 = vld [vmem:[%s4 + $0x3e8] sm:$0xff]
    %v1242 = vld [vmem:[%s4 + $0x3f0] sm:$0xff]
    %v1243 = vld [vmem:[%s4 + $0x3f8] sm:$0xff]
    %v1244 = vand.u32 %v1131, 4294901760
    %1245 = vmatpush.msra.mxu0 %v1244
    %v1246 = vand.u32 %v1130, 4294901760
    %1247 = vmatpush.msra.mxu0 %v1246
    %v1248 = vand.u32 %v1129, 4294901760
    %1249 = vmatpush.msra.mxu0 %v1248
    %v1250 = vand.u32 %v1128, 4294901760
    %1251 = vmatpush.msra.mxu0 %v1250
    %v1252 = vand.u32 %v1127, 4294901760
    %1253 = vmatpush.msra.mxu0 %v1252
    %v1254 = vand.u32 %v1126, 4294901760
    %1255 = vmatpush.msra.mxu0 %v1254
    %v1256 = vand.u32 %v1125, 4294901760
    %1257 = vmatpush.msra.mxu0 %v1256
    %v1258 = vand.u32 %v1124, 4294901760
    %1259 = vmatpush.msra.mxu0 %v1258
    %v1260 = vand.u32 %v1123, 4294901760
    %1261 = vmatpush.msra.mxu0 %v1260
    %v1262 = vand.u32 %v1122, 4294901760
    %1263 = vmatpush.msra.mxu0 %v1262
    %v1264 = vand.u32 %v1121, 4294901760
    %1265 = vmatpush.msra.mxu0 %v1264
    %v1266 = vand.u32 %v1120, 4294901760
    %1267 = vmatpush.msra.mxu0 %v1266
    %v1268 = vand.u32 %v1119, 4294901760
    %1269 = vmatpush.msra.mxu0 %v1268
    %v1270 = vand.u32 %v1118, 4294901760
    %1271 = vmatpush.msra.mxu0 %v1270
    %v1272 = vand.u32 %v1117, 4294901760
    %1273 = vmatpush.msra.mxu0 %v1272
    %v1274 = vand.u32 %v1116, 4294901760
    %1275 = vmatpush.msra.mxu0 %v1274
    %v1276 = vand.u32 %v1100, 4294901760
    %v1277 = vsub.f32 %v1100, %v1276
    %v1278 = vand.u32 %v1277, 4294901760
    %v1279 = vsub.f32 %v1277, %v1278
    %v1280 = vand.u32 %v1279, 4294901760
    %1281 = vmatmul.f32.gmra.mxu0 %v1280
    %v1282 = vpop.f32.mrf.mxu0
    %v1283 = vadd.f32 0.0, %v1282
    %v1284 = vand.u32 %v1108, 4294901760
    %v1285 = vsub.f32 %v1108, %v1284
    %v1286 = vand.u32 %v1285, 4294901760
    %v1287 = vsub.f32 %v1285, %v1286
    %v1288 = vand.u32 %v1287, 4294901760
    %1289 = vmatmul.f32.gmra.mxu0 %v1288
    %v1290 = vpop.f32.mrf.mxu0
    %v1291 = vadd.f32 0.0, %v1290
    %1292 = vdwg.mxu0
    %v1293 = vand.u32 %v1131, 4294901760
    %v1294 = vsub.f32 %v1131, %v1293
    %v1295 = vand.u32 %v1294, 4294901760
    %v1296 = vsub.f32 %v1294, %v1295
    %v1297 = vand.u32 %v1296, 4294901760
    %1298 = vmatpush.msra.mxu0 %v1297
    %v1299 = vand.u32 %v1130, 4294901760
    %v1300 = vsub.f32 %v1130, %v1299
    %v1301 = vand.u32 %v1300, 4294901760
    %v1302 = vsub.f32 %v1300, %v1301
    %v1303 = vand.u32 %v1302, 4294901760
    %1304 = vmatpush.msra.mxu0 %v1303
    %v1305 = vand.u32 %v1129, 4294901760
    %v1306 = vsub.f32 %v1129, %v1305
    %v1307 = vand.u32 %v1306, 4294901760
    %v1308 = vsub.f32 %v1306, %v1307
    %v1309 = vand.u32 %v1308, 4294901760
    %1310 = vmatpush.msra.mxu0 %v1309
    %v1311 = vand.u32 %v1128, 4294901760
    %v1312 = vsub.f32 %v1128, %v1311
    %v1313 = vand.u32 %v1312, 4294901760
    %v1314 = vsub.f32 %v1312, %v1313
    %v1315 = vand.u32 %v1314, 4294901760
    %1316 = vmatpush.msra.mxu0 %v1315
    %v1317 = vand.u32 %v1127, 4294901760
    %v1318 = vsub.f32 %v1127, %v1317
    %v1319 = vand.u32 %v1318, 4294901760
    %v1320 = vsub.f32 %v1318, %v1319
    %v1321 = vand.u32 %v1320, 4294901760
    %1322 = vmatpush.msra.mxu0 %v1321
    %v1323 = vand.u32 %v1126, 4294901760
    %v1324 = vsub.f32 %v1126, %v1323
    %v1325 = vand.u32 %v1324, 4294901760
    %v1326 = vsub.f32 %v1324, %v1325
    %v1327 = vand.u32 %v1326, 4294901760
    %1328 = vmatpush.msra.mxu0 %v1327
    %v1329 = vand.u32 %v1125, 4294901760
    %v1330 = vsub.f32 %v1125, %v1329
    %v1331 = vand.u32 %v1330, 4294901760
    %v1332 = vsub.f32 %v1330, %v1331
    %v1333 = vand.u32 %v1332, 4294901760
    %1334 = vmatpush.msra.mxu0 %v1333
    %v1335 = vand.u32 %v1124, 4294901760
    %v1336 = vsub.f32 %v1124, %v1335
    %v1337 = vand.u32 %v1336, 4294901760
    %v1338 = vsub.f32 %v1336, %v1337
    %v1339 = vand.u32 %v1338, 4294901760
    %1340 = vmatpush.msra.mxu0 %v1339
    %v1341 = vand.u32 %v1123, 4294901760
    %v1342 = vsub.f32 %v1123, %v1341
    %v1343 = vand.u32 %v1342, 4294901760
    %v1344 = vsub.f32 %v1342, %v1343
    %v1345 = vand.u32 %v1344, 4294901760
    %1346 = vmatpush.msra.mxu0 %v1345
    %v1347 = vand.u32 %v1122, 4294901760
    %v1348 = vsub.f32 %v1122, %v1347
    %v1349 = vand.u32 %v1348, 4294901760
    %v1350 = vsub.f32 %v1348, %v1349
    %v1351 = vand.u32 %v1350, 4294901760
    %1352 = vmatpush.msra.mxu0 %v1351
    %v1353 = vand.u32 %v1121, 4294901760
    %v1354 = vsub.f32 %v1121, %v1353
    %v1355 = vand.u32 %v1354, 4294901760
    %v1356 = vsub.f32 %v1354, %v1355
    %v1357 = vand.u32 %v1356, 4294901760
    %1358 = vmatpush.msra.mxu0 %v1357
    %v1359 = vand.u32 %v1120, 4294901760
    %v1360 = vsub.f32 %v1120, %v1359
    %v1361 = vand.u32 %v1360, 4294901760
    %v1362 = vsub.f32 %v1360, %v1361
    %v1363 = vand.u32 %v1362, 4294901760
    %1364 = vmatpush.msra.mxu0 %v1363
    %v1365 = vand.u32 %v1119, 4294901760
    %v1366 = vsub.f32 %v1119, %v1365
    %v1367 = vand.u32 %v1366, 4294901760
    %v1368 = vsub.f32 %v1366, %v1367
    %v1369 = vand.u32 %v1368, 4294901760
    %1370 = vmatpush.msra.mxu0 %v1369
    %v1371 = vand.u32 %v1118, 4294901760
    %v1372 = vsub.f32 %v1118, %v1371
    %v1373 = vand.u32 %v1372, 4294901760
    %v1374 = vsub.f32 %v1372, %v1373
    %v1375 = vand.u32 %v1374, 4294901760
    %1376 = vmatpush.msra.mxu0 %v1375
    %v1377 = vand.u32 %v1117, 4294901760
    %v1378 = vsub.f32 %v1117, %v1377
    %v1379 = vand.u32 %v1378, 4294901760
    %v1380 = vsub.f32 %v1378, %v1379
    %v1381 = vand.u32 %v1380, 4294901760
    %1382 = vmatpush.msra.mxu0 %v1381
    %v1383 = vand.u32 %v1116, 4294901760
    %v1384 = vsub.f32 %v1116, %v1383
    %v1385 = vand.u32 %v1384, 4294901760
    %v1386 = vsub.f32 %v1384, %v1385
    %v1387 = vand.u32 %v1386, 4294901760
    %1388 = vmatpush.msra.mxu0 %v1387
    %v1389 = vand.u32 %v1100, 4294901760
    %1390 = vmatmul.f32.gmra.mxu0 %v1389
    %v1391 = vpop.f32.mrf.mxu0
    %v1392 = vadd.f32 %v1283, %v1391
    %v1393 = vand.u32 %v1108, 4294901760
    %1394 = vmatmul.f32.gmra.mxu0 %v1393
    %v1395 = vpop.f32.mrf.mxu0
    %v1396 = vadd.f32 %v1291, %v1395
    %1397 = vdwg.mxu0
    %v1398 = vand.u32 %v1131, 4294901760
    %v1399 = vsub.f32 %v1131, %v1398
    %1400 = vmatpush.msra.mxu0 %v1399
    %v1401 = vand.u32 %v1130, 4294901760
    %v1402 = vsub.f32 %v1130, %v1401
    %1403 = vmatpush.msra.mxu0 %v1402
    %v1404 = vand.u32 %v1129, 4294901760
    %v1405 = vsub.f32 %v1129, %v1404
    %1406 = vmatpush.msra.mxu0 %v1405
    %v1407 = vand.u32 %v1128, 4294901760
    %v1408 = vsub.f32 %v1128, %v1407
    %1409 = vmatpush.msra.mxu0 %v1408
    %v1410 = vand.u32 %v1127, 4294901760
    %v1411 = vsub.f32 %v1127, %v1410
    %1412 = vmatpush.msra.mxu0 %v1411
    %v1413 = vand.u32 %v1126, 4294901760
    %v1414 = vsub.f32 %v1126, %v1413
    %1415 = vmatpush.msra.mxu0 %v1414
    %v1416 = vand.u32 %v1125, 4294901760
    %v1417 = vsub.f32 %v1125, %v1416
    %1418 = vmatpush.msra.mxu0 %v1417
    %v1419 = vand.u32 %v1124, 4294901760
    %v1420 = vsub.f32 %v1124, %v1419
    %1421 = vmatpush.msra.mxu0 %v1420
    %v1422 = vand.u32 %v1123, 4294901760
    %v1423 = vsub.f32 %v1123, %v1422
    %1424 = vmatpush.msra.mxu0 %v1423
    %v1425 = vand.u32 %v1122, 4294901760
    %v1426 = vsub.f32 %v1122, %v1425
    %1427 = vmatpush.msra.mxu0 %v1426
    %v1428 = vand.u32 %v1121, 4294901760
    %v1429 = vsub.f32 %v1121, %v1428
    %1430 = vmatpush.msra.mxu0 %v1429
    %v1431 = vand.u32 %v1120, 4294901760
    %v1432 = vsub.f32 %v1120, %v1431
    %1433 = vmatpush.msra.mxu0 %v1432
    %v1434 = vand.u32 %v1119, 4294901760
    %v1435 = vsub.f32 %v1119, %v1434
    %1436 = vmatpush.msra.mxu0 %v1435
    %v1437 = vand.u32 %v1118, 4294901760
    %v1438 = vsub.f32 %v1118, %v1437
    %1439 = vmatpush.msra.mxu0 %v1438
    %v1440 = vand.u32 %v1117, 4294901760
    %v1441 = vsub.f32 %v1117, %v1440
    %1442 = vmatpush.msra.mxu0 %v1441
    %v1443 = vand.u32 %v1116, 4294901760
    %v1444 = vsub.f32 %v1116, %v1443
    %1445 = vmatpush.msra.mxu0 %v1444
    %v1446 = vand.u32 %v1100, 4294901760
    %v1447 = vsub.f32 %v1100, %v1446
    %1448 = vmatmul.f32.gmra.mxu0 %v1447
    %v1449 = vpop.f32.mrf.mxu0
    %v1450 = vadd.f32 %v1392, %v1449
    %v1451 = vand.u32 %v1108, 4294901760
    %v1452 = vsub.f32 %v1108, %v1451
    %1453 = vmatmul.f32.gmra.mxu0 %v1452
    %v1454 = vpop.f32.mrf.mxu0
    %v1455 = vadd.f32 %v1396, %v1454
    %1456 = vdwg.mxu0
    %v1457 = vand.u32 %v1131, 4294901760
    %1458 = vmatpush.msra.mxu0 %v1457
    %v1459 = vand.u32 %v1130, 4294901760
    %1460 = vmatpush.msra.mxu0 %v1459
    %v1461 = vand.u32 %v1129, 4294901760
    %1462 = vmatpush.msra.mxu0 %v1461
    %v1463 = vand.u32 %v1128, 4294901760
    %1464 = vmatpush.msra.mxu0 %v1463
    %v1465 = vand.u32 %v1127, 4294901760
    %1466 = vmatpush.msra.mxu0 %v1465
    %v1467 = vand.u32 %v1126, 4294901760
    %1468 = vmatpush.msra.mxu0 %v1467
    %v1469 = vand.u32 %v1125, 4294901760
    %1470 = vmatpush.msra.mxu0 %v1469
    %v1471 = vand.u32 %v1124, 4294901760
    %1472 = vmatpush.msra.mxu0 %v1471
    %v1473 = vand.u32 %v1123, 4294901760
    %1474 = vmatpush.msra.mxu0 %v1473
    %v1475 = vand.u32 %v1122, 4294901760
    %1476 = vmatpush.msra.mxu0 %v1475
    %v1477 = vand.u32 %v1121, 4294901760
    %1478 = vmatpush.msra.mxu0 %v1477
    %v1479 = vand.u32 %v1120, 4294901760
    %1480 = vmatpush.msra.mxu0 %v1479
    %v1481 = vand.u32 %v1119, 4294901760
    %1482 = vmatpush.msra.mxu0 %v1481
    %v1483 = vand.u32 %v1118, 4294901760
    %1484 = vmatpush.msra.mxu0 %v1483
    %v1485 = vand.u32 %v1117, 4294901760
    %1486 = vmatpush.msra.mxu0 %v1485
    %v1487 = vand.u32 %v1116, 4294901760
    %1488 = vmatpush.msra.mxu0 %v1487
    %v1489 = vand.u32 %v1100, 4294901760
    %v1490 = vsub.f32 %v1100, %v1489
    %v1491 = vand.u32 %v1490, 4294901760
    %1492 = vmatmul.f32.gmra.mxu0 %v1491
    %v1493 = vpop.f32.mrf.mxu0
    %v1494 = vadd.f32 %v1450, %v1493
    %v1495 = vand.u32 %v1108, 4294901760
    %v1496 = vsub.f32 %v1108, %v1495
    %v1497 = vand.u32 %v1496, 4294901760
    %1498 = vmatmul.f32.gmra.mxu0 %v1497
    %v1499 = vpop.f32.mrf.mxu0
    %v1500 = vadd.f32 %v1455, %v1499
    %1501 = vdwg.mxu0
    %v1502 = vand.u32 %v1131, 4294901760
    %v1503 = vsub.f32 %v1131, %v1502
    %v1504 = vand.u32 %v1503, 4294901760
    %1505 = vmatpush.msra.mxu0 %v1504
    %v1506 = vand.u32 %v1130, 4294901760
    %v1507 = vsub.f32 %v1130, %v1506
    %v1508 = vand.u32 %v1507, 4294901760
    %1509 = vmatpush.msra.mxu0 %v1508
    %v1510 = vand.u32 %v1129, 4294901760
    %v1511 = vsub.f32 %v1129, %v1510
    %v1512 = vand.u32 %v1511, 4294901760
    %1513 = vmatpush.msra.mxu0 %v1512
    %v1514 = vand.u32 %v1128, 4294901760
    %v1515 = vsub.f32 %v1128, %v1514
    %v1516 = vand.u32 %v1515, 4294901760
    %1517 = vmatpush.msra.mxu0 %v1516
    %v1518 = vand.u32 %v1127, 4294901760
    %v1519 = vsub.f32 %v1127, %v1518
    %v1520 = vand.u32 %v1519, 4294901760
    %1521 = vmatpush.msra.mxu0 %v1520
    %v1522 = vand.u32 %v1126, 4294901760
    %v1523 = vsub.f32 %v1126, %v1522
    %v1524 = vand.u32 %v1523, 4294901760
    %1525 = vmatpush.msra.mxu0 %v1524
    %v1526 = vand.u32 %v1125, 4294901760
    %v1527 = vsub.f32 %v1125, %v1526
    %v1528 = vand.u32 %v1527, 4294901760
    %1529 = vmatpush.msra.mxu0 %v1528
    %v1530 = vand.u32 %v1124, 4294901760
    %v1531 = vsub.f32 %v1124, %v1530
    %v1532 = vand.u32 %v1531, 4294901760
    %1533 = vmatpush.msra.mxu0 %v1532
    %v1534 = vand.u32 %v1123, 4294901760
    %v1535 = vsub.f32 %v1123, %v1534
    %v1536 = vand.u32 %v1535, 4294901760
    %1537 = vmatpush.msra.mxu0 %v1536
    %v1538 = vand.u32 %v1122, 4294901760
    %v1539 = vsub.f32 %v1122, %v1538
    %v1540 = vand.u32 %v1539, 4294901760
    %1541 = vmatpush.msra.mxu0 %v1540
    %v1542 = vand.u32 %v1121, 4294901760
    %v1543 = vsub.f32 %v1121, %v1542
    %v1544 = vand.u32 %v1543, 4294901760
    %1545 = vmatpush.msra.mxu0 %v1544
    %v1546 = vand.u32 %v1120, 4294901760
    %v1547 = vsub.f32 %v1120, %v1546
    %v1548 = vand.u32 %v1547, 4294901760
    %1549 = vmatpush.msra.mxu0 %v1548
    %v1550 = vand.u32 %v1119, 4294901760
    %v1551 = vsub.f32 %v1119, %v1550
    %v1552 = vand.u32 %v1551, 4294901760
    %1553 = vmatpush.msra.mxu0 %v1552
    %v1554 = vand.u32 %v1118, 4294901760
    %v1555 = vsub.f32 %v1118, %v1554
    %v1556 = vand.u32 %v1555, 4294901760
    %1557 = vmatpush.msra.mxu0 %v1556
    %v1558 = vand.u32 %v1117, 4294901760
    %v1559 = vsub.f32 %v1117, %v1558
    %v1560 = vand.u32 %v1559, 4294901760
    %1561 = vmatpush.msra.mxu0 %v1560
    %v1562 = vand.u32 %v1116, 4294901760
    %v1563 = vsub.f32 %v1116, %v1562
    %v1564 = vand.u32 %v1563, 4294901760
    %1565 = vmatpush.msra.mxu0 %v1564
    %v1566 = vand.u32 %v1100, 4294901760
    %1567 = vmatmul.f32.gmra.mxu0 %v1566
    %v1568 = vpop.f32.mrf.mxu0
    %v1569 = vadd.f32 %v1494, %v1568
    %v1570 = vand.u32 %v1108, 4294901760
    %1571 = vmatmul.f32.gmra.mxu0 %v1570
    %v1572 = vpop.f32.mrf.mxu0
    %v1573 = vadd.f32 %v1500, %v1572
    %1574 = vdwg.mxu0
    %v1575 = vand.u32 %v1131, 4294901760
    %1576 = vmatpush.msra.mxu0 %v1575
    %v1577 = vand.u32 %v1130, 4294901760
    %1578 = vmatpush.msra.mxu0 %v1577
    %v1579 = vand.u32 %v1129, 4294901760
    %1580 = vmatpush.msra.mxu0 %v1579
    %v1581 = vand.u32 %v1128, 4294901760
    %1582 = vmatpush.msra.mxu0 %v1581
    %v1583 = vand.u32 %v1127, 4294901760
    %1584 = vmatpush.msra.mxu0 %v1583
    %v1585 = vand.u32 %v1126, 4294901760
    %1586 = vmatpush.msra.mxu0 %v1585
    %v1587 = vand.u32 %v1125, 4294901760
    %1588 = vmatpush.msra.mxu0 %v1587
    %v1589 = vand.u32 %v1124, 4294901760
    %1590 = vmatpush.msra.mxu0 %v1589
    %v1591 = vand.u32 %v1123, 4294901760
    %1592 = vmatpush.msra.mxu0 %v1591
    %v1593 = vand.u32 %v1122, 4294901760
    %1594 = vmatpush.msra.mxu0 %v1593
    %v1595 = vand.u32 %v1121, 4294901760
    %1596 = vmatpush.msra.mxu0 %v1595
    %v1597 = vand.u32 %v1120, 4294901760
    %1598 = vmatpush.msra.mxu0 %v1597
    %v1599 = vand.u32 %v1119, 4294901760
    %1600 = vmatpush.msra.mxu0 %v1599
    %v1601 = vand.u32 %v1118, 4294901760
    %1602 = vmatpush.msra.mxu0 %v1601
    %v1603 = vand.u32 %v1117, 4294901760
    %1604 = vmatpush.msra.mxu0 %v1603
    %v1605 = vand.u32 %v1116, 4294901760
    %1606 = vmatpush.msra.mxu0 %v1605
    %v1607 = vand.u32 %v1100, 4294901760
    %1608 = vmatmul.f32.gmra.mxu0 %v1607
    %v1609 = vpop.f32.mrf.mxu0
    %v1610 = vadd.f32 %v1569, %v1609
    %v1611 = vand.u32 %v1108, 4294901760
    %1612 = vmatmul.f32.gmra.mxu0 %v1611
    %v1613 = vpop.f32.mrf.mxu0
    %v1614 = vadd.f32 %v1573, %v1613
    %1615 = vdwg.mxu0
    %v1616 = vand.u32 %v1147, 4294901760
    %1617 = vmatpush.msra.mxu0 %v1616
    %v1618 = vand.u32 %v1146, 4294901760
    %1619 = vmatpush.msra.mxu0 %v1618
    %v1620 = vand.u32 %v1145, 4294901760
    %1621 = vmatpush.msra.mxu0 %v1620
    %v1622 = vand.u32 %v1144, 4294901760
    %1623 = vmatpush.msra.mxu0 %v1622
    %v1624 = vand.u32 %v1143, 4294901760
    %1625 = vmatpush.msra.mxu0 %v1624
    %v1626 = vand.u32 %v1142, 4294901760
    %1627 = vmatpush.msra.mxu0 %v1626
    %v1628 = vand.u32 %v1141, 4294901760
    %1629 = vmatpush.msra.mxu0 %v1628
    %v1630 = vand.u32 %v1140, 4294901760
    %1631 = vmatpush.msra.mxu0 %v1630
    %v1632 = vand.u32 %v1139, 4294901760
    %1633 = vmatpush.msra.mxu0 %v1632
    %v1634 = vand.u32 %v1138, 4294901760
    %1635 = vmatpush.msra.mxu0 %v1634
    %v1636 = vand.u32 %v1137, 4294901760
    %1637 = vmatpush.msra.mxu0 %v1636
    %v1638 = vand.u32 %v1136, 4294901760
    %1639 = vmatpush.msra.mxu0 %v1638
    %v1640 = vand.u32 %v1135, 4294901760
    %1641 = vmatpush.msra.mxu0 %v1640
    %v1642 = vand.u32 %v1134, 4294901760
    %1643 = vmatpush.msra.mxu0 %v1642
    %v1644 = vand.u32 %v1133, 4294901760
    %1645 = vmatpush.msra.mxu0 %v1644
    %v1646 = vand.u32 %v1132, 4294901760
    %1647 = vmatpush.msra.mxu0 %v1646
    %v1648 = vand.u32 %v1101, 4294901760
    %v1649 = vsub.f32 %v1101, %v1648
    %v1650 = vand.u32 %v1649, 4294901760
    %v1651 = vsub.f32 %v1649, %v1650
    %v1652 = vand.u32 %v1651, 4294901760
    %1653 = vmatmul.f32.gmra.mxu0 %v1652
    %v1654 = vpop.f32.mrf.mxu0
    %v1655 = vadd.f32 %v1610, %v1654
    %v1656 = vand.u32 %v1109, 4294901760
    %v1657 = vsub.f32 %v1109, %v1656
    %v1658 = vand.u32 %v1657, 4294901760
    %v1659 = vsub.f32 %v1657, %v1658
    %v1660 = vand.u32 %v1659, 4294901760
    %1661 = vmatmul.f32.gmra.mxu0 %v1660
    %v1662 = vpop.f32.mrf.mxu0
    %v1663 = vadd.f32 %v1614, %v1662
    %1664 = vdwg.mxu0
    %v1665 = vand.u32 %v1147, 4294901760
    %v1666 = vsub.f32 %v1147, %v1665
    %v1667 = vand.u32 %v1666, 4294901760
    %v1668 = vsub.f32 %v1666, %v1667
    %v1669 = vand.u32 %v1668, 4294901760
    %1670 = vmatpush.msra.mxu0 %v1669
    %v1671 = vand.u32 %v1146, 4294901760
    %v1672 = vsub.f32 %v1146, %v1671
    %v1673 = vand.u32 %v1672, 4294901760
    %v1674 = vsub.f32 %v1672, %v1673
    %v1675 = vand.u32 %v1674, 4294901760
    %1676 = vmatpush.msra.mxu0 %v1675
    %v1677 = vand.u32 %v1145, 4294901760
    %v1678 = vsub.f32 %v1145, %v1677
    %v1679 = vand.u32 %v1678, 4294901760
    %v1680 = vsub.f32 %v1678, %v1679
    %v1681 = vand.u32 %v1680, 4294901760
    %1682 = vmatpush.msra.mxu0 %v1681
    %v1683 = vand.u32 %v1144, 4294901760
    %v1684 = vsub.f32 %v1144, %v1683
    %v1685 = vand.u32 %v1684, 4294901760
    %v1686 = vsub.f32 %v1684, %v1685
    %v1687 = vand.u32 %v1686, 4294901760
    %1688 = vmatpush.msra.mxu0 %v1687
    %v1689 = vand.u32 %v1143, 4294901760
    %v1690 = vsub.f32 %v1143, %v1689
    %v1691 = vand.u32 %v1690, 4294901760
    %v1692 = vsub.f32 %v1690, %v1691
    %v1693 = vand.u32 %v1692, 4294901760
    %1694 = vmatpush.msra.mxu0 %v1693
    %v1695 = vand.u32 %v1142, 4294901760
    %v1696 = vsub.f32 %v1142, %v1695
    %v1697 = vand.u32 %v1696, 4294901760
    %v1698 = vsub.f32 %v1696, %v1697
    %v1699 = vand.u32 %v1698, 4294901760
    %1700 = vmatpush.msra.mxu0 %v1699
    %v1701 = vand.u32 %v1141, 4294901760
    %v1702 = vsub.f32 %v1141, %v1701
    %v1703 = vand.u32 %v1702, 4294901760
    %v1704 = vsub.f32 %v1702, %v1703
    %v1705 = vand.u32 %v1704, 4294901760
    %1706 = vmatpush.msra.mxu0 %v1705
    %v1707 = vand.u32 %v1140, 4294901760
    %v1708 = vsub.f32 %v1140, %v1707
    %v1709 = vand.u32 %v1708, 4294901760
    %v1710 = vsub.f32 %v1708, %v1709
    %v1711 = vand.u32 %v1710, 4294901760
    %1712 = vmatpush.msra.mxu0 %v1711
    %v1713 = vand.u32 %v1139, 4294901760
    %v1714 = vsub.f32 %v1139, %v1713
    %v1715 = vand.u32 %v1714, 4294901760
    %v1716 = vsub.f32 %v1714, %v1715
    %v1717 = vand.u32 %v1716, 4294901760
    %1718 = vmatpush.msra.mxu0 %v1717
    %v1719 = vand.u32 %v1138, 4294901760
    %v1720 = vsub.f32 %v1138, %v1719
    %v1721 = vand.u32 %v1720, 4294901760
    %v1722 = vsub.f32 %v1720, %v1721
    %v1723 = vand.u32 %v1722, 4294901760
    %1724 = vmatpush.msra.mxu0 %v1723
    %v1725 = vand.u32 %v1137, 4294901760
    %v1726 = vsub.f32 %v1137, %v1725
    %v1727 = vand.u32 %v1726, 4294901760
    %v1728 = vsub.f32 %v1726, %v1727
    %v1729 = vand.u32 %v1728, 4294901760
    %1730 = vmatpush.msra.mxu0 %v1729
    %v1731 = vand.u32 %v1136, 4294901760
    %v1732 = vsub.f32 %v1136, %v1731
    %v1733 = vand.u32 %v1732, 4294901760
    %v1734 = vsub.f32 %v1732, %v1733
    %v1735 = vand.u32 %v1734, 4294901760
    %1736 = vmatpush.msra.mxu0 %v1735
    %v1737 = vand.u32 %v1135, 4294901760
    %v1738 = vsub.f32 %v1135, %v1737
    %v1739 = vand.u32 %v1738, 4294901760
    %v1740 = vsub.f32 %v1738, %v1739
    %v1741 = vand.u32 %v1740, 4294901760
    %1742 = vmatpush.msra.mxu0 %v1741
    %v1743 = vand.u32 %v1134, 4294901760
    %v1744 = vsub.f32 %v1134, %v1743
    %v1745 = vand.u32 %v1744, 4294901760
    %v1746 = vsub.f32 %v1744, %v1745
    %v1747 = vand.u32 %v1746, 4294901760
    %1748 = vmatpush.msra.mxu0 %v1747
    %v1749 = vand.u32 %v1133, 4294901760
    %v1750 = vsub.f32 %v1133, %v1749
    %v1751 = vand.u32 %v1750, 4294901760
    %v1752 = vsub.f32 %v1750, %v1751
    %v1753 = vand.u32 %v1752, 4294901760
    %1754 = vmatpush.msra.mxu0 %v1753
    %v1755 = vand.u32 %v1132, 4294901760
    %v1756 = vsub.f32 %v1132, %v1755
    %v1757 = vand.u32 %v1756, 4294901760
    %v1758 = vsub.f32 %v1756, %v1757
    %v1759 = vand.u32 %v1758, 4294901760
    %1760 = vmatpush.msra.mxu0 %v1759
    %v1761 = vand.u32 %v1101, 4294901760
    %1762 = vmatmul.f32.gmra.mxu0 %v1761
    %v1763 = vpop.f32.mrf.mxu0
    %v1764 = vadd.f32 %v1655, %v1763
    %v1765 = vand.u32 %v1109, 4294901760
    %1766 = vmatmul.f32.gmra.mxu0 %v1765
    %v1767 = vpop.f32.mrf.mxu0
    %v1768 = vadd.f32 %v1663, %v1767
    %1769 = vdwg.mxu0
    %v1770 = vand.u32 %v1147, 4294901760
    %v1771 = vsub.f32 %v1147, %v1770
    %1772 = vmatpush.msra.mxu0 %v1771
    %v1773 = vand.u32 %v1146, 4294901760
    %v1774 = vsub.f32 %v1146, %v1773
    %1775 = vmatpush.msra.mxu0 %v1774
    %v1776 = vand.u32 %v1145, 4294901760
    %v1777 = vsub.f32 %v1145, %v1776
    %1778 = vmatpush.msra.mxu0 %v1777
    %v1779 = vand.u32 %v1144, 4294901760
    %v1780 = vsub.f32 %v1144, %v1779
    %1781 = vmatpush.msra.mxu0 %v1780
    %v1782 = vand.u32 %v1143, 4294901760
    %v1783 = vsub.f32 %v1143, %v1782
    %1784 = vmatpush.msra.mxu0 %v1783
    %v1785 = vand.u32 %v1142, 4294901760
    %v1786 = vsub.f32 %v1142, %v1785
    %1787 = vmatpush.msra.mxu0 %v1786
    %v1788 = vand.u32 %v1141, 4294901760
    %v1789 = vsub.f32 %v1141, %v1788
    %1790 = vmatpush.msra.mxu0 %v1789
    %v1791 = vand.u32 %v1140, 4294901760
    %v1792 = vsub.f32 %v1140, %v1791
    %1793 = vmatpush.msra.mxu0 %v1792
    %v1794 = vand.u32 %v1139, 4294901760
    %v1795 = vsub.f32 %v1139, %v1794
    %1796 = vmatpush.msra.mxu0 %v1795
    %v1797 = vand.u32 %v1138, 4294901760
    %v1798 = vsub.f32 %v1138, %v1797
    %1799 = vmatpush.msra.mxu0 %v1798
    %v1800 = vand.u32 %v1137, 4294901760
    %v1801 = vsub.f32 %v1137, %v1800
    %1802 = vmatpush.msra.mxu0 %v1801
    %v1803 = vand.u32 %v1136, 4294901760
    %v1804 = vsub.f32 %v1136, %v1803
    %1805 = vmatpush.msra.mxu0 %v1804
    %v1806 = vand.u32 %v1135, 4294901760
    %v1807 = vsub.f32 %v1135, %v1806
    %1808 = vmatpush.msra.mxu0 %v1807
    %v1809 = vand.u32 %v1134, 4294901760
    %v1810 = vsub.f32 %v1134, %v1809
    %1811 = vmatpush.msra.mxu0 %v1810
    %v1812 = vand.u32 %v1133, 4294901760
    %v1813 = vsub.f32 %v1133, %v1812
    %1814 = vmatpush.msra.mxu0 %v1813
    %v1815 = vand.u32 %v1132, 4294901760
    %v1816 = vsub.f32 %v1132, %v1815
    %1817 = vmatpush.msra.mxu0 %v1816
    %v1818 = vand.u32 %v1101, 4294901760
    %v1819 = vsub.f32 %v1101, %v1818
    %1820 = vmatmul.f32.gmra.mxu0 %v1819
    %v1821 = vpop.f32.mrf.mxu0
    %v1822 = vadd.f32 %v1764, %v1821
    %v1823 = vand.u32 %v1109, 4294901760
    %v1824 = vsub.f32 %v1109, %v1823
    %1825 = vmatmul.f32.gmra.mxu0 %v1824
    %v1826 = vpop.f32.mrf.mxu0
    %v1827 = vadd.f32 %v1768, %v1826
    %1828 = vdwg.mxu0
    %v1829 = vand.u32 %v1147, 4294901760
    %1830 = vmatpush.msra.mxu0 %v1829
    %v1831 = vand.u32 %v1146, 4294901760
    %1832 = vmatpush.msra.mxu0 %v1831
    %v1833 = vand.u32 %v1145, 4294901760
    %1834 = vmatpush.msra.mxu0 %v1833
    %v1835 = vand.u32 %v1144, 4294901760
    %1836 = vmatpush.msra.mxu0 %v1835
    %v1837 = vand.u32 %v1143, 4294901760
    %1838 = vmatpush.msra.mxu0 %v1837
    %v1839 = vand.u32 %v1142, 4294901760
    %1840 = vmatpush.msra.mxu0 %v1839
    %v1841 = vand.u32 %v1141, 4294901760
    %1842 = vmatpush.msra.mxu0 %v1841
    %v1843 = vand.u32 %v1140, 4294901760
    %1844 = vmatpush.msra.mxu0 %v1843
    %v1845 = vand.u32 %v1139, 4294901760
    %1846 = vmatpush.msra.mxu0 %v1845
    %v1847 = vand.u32 %v1138, 4294901760
    %1848 = vmatpush.msra.mxu0 %v1847
    %v1849 = vand.u32 %v1137, 4294901760
    %1850 = vmatpush.msra.mxu0 %v1849
    %v1851 = vand.u32 %v1136, 4294901760
    %1852 = vmatpush.msra.mxu0 %v1851
    %v1853 = vand.u32 %v1135, 4294901760
    %1854 = vmatpush.msra.mxu0 %v1853
    %v1855 = vand.u32 %v1134, 4294901760
    %1856 = vmatpush.msra.mxu0 %v1855
    %v1857 = vand.u32 %v1133, 4294901760
    %1858 = vmatpush.msra.mxu0 %v1857
    %v1859 = vand.u32 %v1132, 4294901760
    %1860 = vmatpush.msra.mxu0 %v1859
    %v1861 = vand.u32 %v1101, 4294901760
    %v1862 = vsub.f32 %v1101, %v1861
    %v1863 = vand.u32 %v1862, 4294901760
    %1864 = vmatmul.f32.gmra.mxu0 %v1863
    %v1865 = vpop.f32.mrf.mxu0
    %v1866 = vadd.f32 %v1822, %v1865
    %v1867 = vand.u32 %v1109, 4294901760
    %v1868 = vsub.f32 %v1109, %v1867
    %v1869 = vand.u32 %v1868, 4294901760
    %1870 = vmatmul.f32.gmra.mxu0 %v1869
    %v1871 = vpop.f32.mrf.mxu0
    %v1872 = vadd.f32 %v1827, %v1871
    %1873 = vdwg.mxu0
    %v1874 = vand.u32 %v1147, 4294901760
    %v1875 = vsub.f32 %v1147, %v1874
    %v1876 = vand.u32 %v1875, 4294901760
    %1877 = vmatpush.msra.mxu0 %v1876
    %v1878 = vand.u32 %v1146, 4294901760
    %v1879 = vsub.f32 %v1146, %v1878
    %v1880 = vand.u32 %v1879, 4294901760
    %1881 = vmatpush.msra.mxu0 %v1880
    %v1882 = vand.u32 %v1145, 4294901760
    %v1883 = vsub.f32 %v1145, %v1882
    %v1884 = vand.u32 %v1883, 4294901760
    %1885 = vmatpush.msra.mxu0 %v1884
    %v1886 = vand.u32 %v1144, 4294901760
    %v1887 = vsub.f32 %v1144, %v1886
    %v1888 = vand.u32 %v1887, 4294901760
    %1889 = vmatpush.msra.mxu0 %v1888
    %v1890 = vand.u32 %v1143, 4294901760
    %v1891 = vsub.f32 %v1143, %v1890
    %v1892 = vand.u32 %v1891, 4294901760
    %1893 = vmatpush.msra.mxu0 %v1892
    %v1894 = vand.u32 %v1142, 4294901760
    %v1895 = vsub.f32 %v1142, %v1894
    %v1896 = vand.u32 %v1895, 4294901760
    %1897 = vmatpush.msra.mxu0 %v1896
    %v1898 = vand.u32 %v1141, 4294901760
    %v1899 = vsub.f32 %v1141, %v1898
    %v1900 = vand.u32 %v1899, 4294901760
    %1901 = vmatpush.msra.mxu0 %v1900
    %v1902 = vand.u32 %v1140, 4294901760
    %v1903 = vsub.f32 %v1140, %v1902
    %v1904 = vand.u32 %v1903, 4294901760
    %1905 = vmatpush.msra.mxu0 %v1904
    %v1906 = vand.u32 %v1139, 4294901760
    %v1907 = vsub.f32 %v1139, %v1906
    %v1908 = vand.u32 %v1907, 4294901760
    %1909 = vmatpush.msra.mxu0 %v1908
    %v1910 = vand.u32 %v1138, 4294901760
    %v1911 = vsub.f32 %v1138, %v1910
    %v1912 = vand.u32 %v1911, 4294901760
    %1913 = vmatpush.msra.mxu0 %v1912
    %v1914 = vand.u32 %v1137, 4294901760
    %v1915 = vsub.f32 %v1137, %v1914
    %v1916 = vand.u32 %v1915, 4294901760
    %1917 = vmatpush.msra.mxu0 %v1916
    %v1918 = vand.u32 %v1136, 4294901760
    %v1919 = vsub.f32 %v1136, %v1918
    %v1920 = vand.u32 %v1919, 4294901760
    %1921 = vmatpush.msra.mxu0 %v1920
    %v1922 = vand.u32 %v1135, 4294901760
    %v1923 = vsub.f32 %v1135, %v1922
    %v1924 = vand.u32 %v1923, 4294901760
    %1925 = vmatpush.msra.mxu0 %v1924
    %v1926 = vand.u32 %v1134, 4294901760
    %v1927 = vsub.f32 %v1134, %v1926
    %v1928 = vand.u32 %v1927, 4294901760
    %1929 = vmatpush.msra.mxu0 %v1928
    %v1930 = vand.u32 %v1133, 4294901760
    %v1931 = vsub.f32 %v1133, %v1930
    %v1932 = vand.u32 %v1931, 4294901760
    %1933 = vmatpush.msra.mxu0 %v1932
    %v1934 = vand.u32 %v1132, 4294901760
    %v1935 = vsub.f32 %v1132, %v1934
    %v1936 = vand.u32 %v1935, 4294901760
    %1937 = vmatpush.msra.mxu0 %v1936
    %v1938 = vand.u32 %v1101, 4294901760
    %1939 = vmatmul.f32.gmra.mxu0 %v1938
    %v1940 = vpop.f32.mrf.mxu0
    %v1941 = vadd.f32 %v1866, %v1940
    %v1942 = vand.u32 %v1109, 4294901760
    %1943 = vmatmul.f32.gmra.mxu0 %v1942
    %v1944 = vpop.f32.mrf.mxu0
    %v1945 = vadd.f32 %v1872, %v1944
    %1946 = vdwg.mxu0
    %v1947 = vand.u32 %v1147, 4294901760
    %1948 = vmatpush.msra.mxu0 %v1947
    %v1949 = vand.u32 %v1146, 4294901760
    %1950 = vmatpush.msra.mxu0 %v1949
    %v1951 = vand.u32 %v1145, 4294901760
    %1952 = vmatpush.msra.mxu0 %v1951
    %v1953 = vand.u32 %v1144, 4294901760
    %1954 = vmatpush.msra.mxu0 %v1953
    %v1955 = vand.u32 %v1143, 4294901760
    %1956 = vmatpush.msra.mxu0 %v1955
    %v1957 = vand.u32 %v1142, 4294901760
    %1958 = vmatpush.msra.mxu0 %v1957
    %v1959 = vand.u32 %v1141, 4294901760
    %1960 = vmatpush.msra.mxu0 %v1959
    %v1961 = vand.u32 %v1140, 4294901760
    %1962 = vmatpush.msra.mxu0 %v1961
    %v1963 = vand.u32 %v1139, 4294901760
    %1964 = vmatpush.msra.mxu0 %v1963
    %v1965 = vand.u32 %v1138, 4294901760
    %1966 = vmatpush.msra.mxu0 %v1965
    %v1967 = vand.u32 %v1137, 4294901760
    %1968 = vmatpush.msra.mxu0 %v1967
    %v1969 = vand.u32 %v1136, 4294901760
    %1970 = vmatpush.msra.mxu0 %v1969
    %v1971 = vand.u32 %v1135, 4294901760
    %1972 = vmatpush.msra.mxu0 %v1971
    %v1973 = vand.u32 %v1134, 4294901760
    %1974 = vmatpush.msra.mxu0 %v1973
    %v1975 = vand.u32 %v1133, 4294901760
    %1976 = vmatpush.msra.mxu0 %v1975
    %v1977 = vand.u32 %v1132, 4294901760
    %1978 = vmatpush.msra.mxu0 %v1977
    %v1979 = vand.u32 %v1101, 4294901760
    %1980 = vmatmul.f32.gmra.mxu0 %v1979
    %v1981 = vpop.f32.mrf.mxu0
    %v1982 = vadd.f32 %v1941, %v1981
    %v1983 = vand.u32 %v1109, 4294901760
    %1984 = vmatmul.f32.gmra.mxu0 %v1983
    %v1985 = vpop.f32.mrf.mxu0
    %v1986 = vadd.f32 %v1945, %v1985
    %1987 = vdwg.mxu0
    %v1988 = vand.u32 %v1163, 4294901760
    %1989 = vmatpush.msra.mxu0 %v1988
    %v1990 = vand.u32 %v1162, 4294901760
    %1991 = vmatpush.msra.mxu0 %v1990
    %v1992 = vand.u32 %v1161, 4294901760
    %1993 = vmatpush.msra.mxu0 %v1992
    %v1994 = vand.u32 %v1160, 4294901760
    %1995 = vmatpush.msra.mxu0 %v1994
    %v1996 = vand.u32 %v1159, 4294901760
    %1997 = vmatpush.msra.mxu0 %v1996
    %v1998 = vand.u32 %v1158, 4294901760
    %1999 = vmatpush.msra.mxu0 %v1998
    %v2000 = vand.u32 %v1157, 4294901760
    %2001 = vmatpush.msra.mxu0 %v2000
    %v2002 = vand.u32 %v1156, 4294901760
    %2003 = vmatpush.msra.mxu0 %v2002
    %v2004 = vand.u32 %v1155, 4294901760
    %2005 = vmatpush.msra.mxu0 %v2004
    %v2006 = vand.u32 %v1154, 4294901760
    %2007 = vmatpush.msra.mxu0 %v2006
    %v2008 = vand.u32 %v1153, 4294901760
    %2009 = vmatpush.msra.mxu0 %v2008
    %v2010 = vand.u32 %v1152, 4294901760
    %2011 = vmatpush.msra.mxu0 %v2010
    %v2012 = vand.u32 %v1151, 4294901760
    %2013 = vmatpush.msra.mxu0 %v2012
    %v2014 = vand.u32 %v1150, 4294901760
    %2015 = vmatpush.msra.mxu0 %v2014
    %v2016 = vand.u32 %v1149, 4294901760
    %2017 = vmatpush.msra.mxu0 %v2016
    %v2018 = vand.u32 %v1148, 4294901760
    %2019 = vmatpush.msra.mxu0 %v2018
    %v2020 = vand.u32 %v1102, 4294901760
    %v2021 = vsub.f32 %v1102, %v2020
    %v2022 = vand.u32 %v2021, 4294901760
    %v2023 = vsub.f32 %v2021, %v2022
    %v2024 = vand.u32 %v2023, 4294901760
    %2025 = vmatmul.f32.gmra.mxu0 %v2024
    %v2026 = vpop.f32.mrf.mxu0
    %v2027 = vadd.f32 %v1982, %v2026
    %v2028 = vand.u32 %v1110, 4294901760
    %v2029 = vsub.f32 %v1110, %v2028
    %v2030 = vand.u32 %v2029, 4294901760
    %v2031 = vsub.f32 %v2029, %v2030
    %v2032 = vand.u32 %v2031, 4294901760
    %2033 = vmatmul.f32.gmra.mxu0 %v2032
    %v2034 = vpop.f32.mrf.mxu0
    %v2035 = vadd.f32 %v1986, %v2034
    %2036 = vdwg.mxu0
    %v2037 = vand.u32 %v1163, 4294901760
    %v2038 = vsub.f32 %v1163, %v2037
    %v2039 = vand.u32 %v2038, 4294901760
    %v2040 = vsub.f32 %v2038, %v2039
    %v2041 = vand.u32 %v2040, 4294901760
    %2042 = vmatpush.msra.mxu0 %v2041
    %v2043 = vand.u32 %v1162, 4294901760
    %v2044 = vsub.f32 %v1162, %v2043
    %v2045 = vand.u32 %v2044, 4294901760
    %v2046 = vsub.f32 %v2044, %v2045
    %v2047 = vand.u32 %v2046, 4294901760
    %2048 = vmatpush.msra.mxu0 %v2047
    %v2049 = vand.u32 %v1161, 4294901760
    %v2050 = vsub.f32 %v1161, %v2049
    %v2051 = vand.u32 %v2050, 4294901760
    %v2052 = vsub.f32 %v2050, %v2051
    %v2053 = vand.u32 %v2052, 4294901760
    %2054 = vmatpush.msra.mxu0 %v2053
    %v2055 = vand.u32 %v1160, 4294901760
    %v2056 = vsub.f32 %v1160, %v2055
    %v2057 = vand.u32 %v2056, 4294901760
    %v2058 = vsub.f32 %v2056, %v2057
    %v2059 = vand.u32 %v2058, 4294901760
    %2060 = vmatpush.msra.mxu0 %v2059
    %v2061 = vand.u32 %v1159, 4294901760
    %v2062 = vsub.f32 %v1159, %v2061
    %v2063 = vand.u32 %v2062, 4294901760
    %v2064 = vsub.f32 %v2062, %v2063
    %v2065 = vand.u32 %v2064, 4294901760
    %2066 = vmatpush.msra.mxu0 %v2065
    %v2067 = vand.u32 %v1158, 4294901760
    %v2068 = vsub.f32 %v1158, %v2067
    %v2069 = vand.u32 %v2068, 4294901760
    %v2070 = vsub.f32 %v2068, %v2069
    %v2071 = vand.u32 %v2070, 4294901760
    %2072 = vmatpush.msra.mxu0 %v2071
    %v2073 = vand.u32 %v1157, 4294901760
    %v2074 = vsub.f32 %v1157, %v2073
    %v2075 = vand.u32 %v2074, 4294901760
    %v2076 = vsub.f32 %v2074, %v2075
    %v2077 = vand.u32 %v2076, 4294901760
    %2078 = vmatpush.msra.mxu0 %v2077
    %v2079 = vand.u32 %v1156, 4294901760
    %v2080 = vsub.f32 %v1156, %v2079
    %v2081 = vand.u32 %v2080, 4294901760
    %v2082 = vsub.f32 %v2080, %v2081
    %v2083 = vand.u32 %v2082, 4294901760
    %2084 = vmatpush.msra.mxu0 %v2083
    %v2085 = vand.u32 %v1155, 4294901760
    %v2086 = vsub.f32 %v1155, %v2085
    %v2087 = vand.u32 %v2086, 4294901760
    %v2088 = vsub.f32 %v2086, %v2087
    %v2089 = vand.u32 %v2088, 4294901760
    %2090 = vmatpush.msra.mxu0 %v2089
    %v2091 = vand.u32 %v1154, 4294901760
    %v2092 = vsub.f32 %v1154, %v2091
    %v2093 = vand.u32 %v2092, 4294901760
    %v2094 = vsub.f32 %v2092, %v2093
    %v2095 = vand.u32 %v2094, 4294901760
    %2096 = vmatpush.msra.mxu0 %v2095
    %v2097 = vand.u32 %v1153, 4294901760
    %v2098 = vsub.f32 %v1153, %v2097
    %v2099 = vand.u32 %v2098, 4294901760
    %v2100 = vsub.f32 %v2098, %v2099
    %v2101 = vand.u32 %v2100, 4294901760
    %2102 = vmatpush.msra.mxu0 %v2101
    %v2103 = vand.u32 %v1152, 4294901760
    %v2104 = vsub.f32 %v1152, %v2103
    %v2105 = vand.u32 %v2104, 4294901760
    %v2106 = vsub.f32 %v2104, %v2105
    %v2107 = vand.u32 %v2106, 4294901760
    %2108 = vmatpush.msra.mxu0 %v2107
    %v2109 = vand.u32 %v1151, 4294901760
    %v2110 = vsub.f32 %v1151, %v2109
    %v2111 = vand.u32 %v2110, 4294901760
    %v2112 = vsub.f32 %v2110, %v2111
    %v2113 = vand.u32 %v2112, 4294901760
    %2114 = vmatpush.msra.mxu0 %v2113
    %v2115 = vand.u32 %v1150, 4294901760
    %v2116 = vsub.f32 %v1150, %v2115
    %v2117 = vand.u32 %v2116, 4294901760
    %v2118 = vsub.f32 %v2116, %v2117
    %v2119 = vand.u32 %v2118, 4294901760
    %2120 = vmatpush.msra.mxu0 %v2119
    %v2121 = vand.u32 %v1149, 4294901760
    %v2122 = vsub.f32 %v1149, %v2121
    %v2123 = vand.u32 %v2122, 4294901760
    %v2124 = vsub.f32 %v2122, %v2123
    %v2125 = vand.u32 %v2124, 4294901760
    %2126 = vmatpush.msra.mxu0 %v2125
    %v2127 = vand.u32 %v1148, 4294901760
    %v2128 = vsub.f32 %v1148, %v2127
    %v2129 = vand.u32 %v2128, 4294901760
    %v2130 = vsub.f32 %v2128, %v2129
    %v2131 = vand.u32 %v2130, 4294901760
    %2132 = vmatpush.msra.mxu0 %v2131
    %v2133 = vand.u32 %v1102, 4294901760
    %2134 = vmatmul.f32.gmra.mxu0 %v2133
    %v2135 = vpop.f32.mrf.mxu0
    %v2136 = vadd.f32 %v2027, %v2135
    %v2137 = vand.u32 %v1110, 4294901760
    %2138 = vmatmul.f32.gmra.mxu0 %v2137
    %v2139 = vpop.f32.mrf.mxu0
    %v2140 = vadd.f32 %v2035, %v2139
    %2141 = vdwg.mxu0
    %v2142 = vand.u32 %v1163, 4294901760
    %v2143 = vsub.f32 %v1163, %v2142
    %2144 = vmatpush.msra.mxu0 %v2143
    %v2145 = vand.u32 %v1162, 4294901760
    %v2146 = vsub.f32 %v1162, %v2145
    %2147 = vmatpush.msra.mxu0 %v2146
    %v2148 = vand.u32 %v1161, 4294901760
    %v2149 = vsub.f32 %v1161, %v2148
    %2150 = vmatpush.msra.mxu0 %v2149
    %v2151 = vand.u32 %v1160, 4294901760
    %v2152 = vsub.f32 %v1160, %v2151
    %2153 = vmatpush.msra.mxu0 %v2152
    %v2154 = vand.u32 %v1159, 4294901760
    %v2155 = vsub.f32 %v1159, %v2154
    %2156 = vmatpush.msra.mxu0 %v2155
    %v2157 = vand.u32 %v1158, 4294901760
    %v2158 = vsub.f32 %v1158, %v2157
    %2159 = vmatpush.msra.mxu0 %v2158
    %v2160 = vand.u32 %v1157, 4294901760
    %v2161 = vsub.f32 %v1157, %v2160
    %2162 = vmatpush.msra.mxu0 %v2161
    %v2163 = vand.u32 %v1156, 4294901760
    %v2164 = vsub.f32 %v1156, %v2163
    %2165 = vmatpush.msra.mxu0 %v2164
    %v2166 = vand.u32 %v1155, 4294901760
    %v2167 = vsub.f32 %v1155, %v2166
    %2168 = vmatpush.msra.mxu0 %v2167
    %v2169 = vand.u32 %v1154, 4294901760
    %v2170 = vsub.f32 %v1154, %v2169
    %2171 = vmatpush.msra.mxu0 %v2170
    %v2172 = vand.u32 %v1153, 4294901760
    %v2173 = vsub.f32 %v1153, %v2172
    %2174 = vmatpush.msra.mxu0 %v2173
    %v2175 = vand.u32 %v1152, 4294901760
    %v2176 = vsub.f32 %v1152, %v2175
    %2177 = vmatpush.msra.mxu0 %v2176
    %v2178 = vand.u32 %v1151, 4294901760
    %v2179 = vsub.f32 %v1151, %v2178
    %2180 = vmatpush.msra.mxu0 %v2179
    %v2181 = vand.u32 %v1150, 4294901760
    %v2182 = vsub.f32 %v1150, %v2181
    %2183 = vmatpush.msra.mxu0 %v2182
    %v2184 = vand.u32 %v1149, 4294901760
    %v2185 = vsub.f32 %v1149, %v2184
    %2186 = vmatpush.msra.mxu0 %v2185
    %v2187 = vand.u32 %v1148, 4294901760
    %v2188 = vsub.f32 %v1148, %v2187
    %2189 = vmatpush.msra.mxu0 %v2188
    %v2190 = vand.u32 %v1102, 4294901760
    %v2191 = vsub.f32 %v1102, %v2190
    %2192 = vmatmul.f32.gmra.mxu0 %v2191
    %v2193 = vpop.f32.mrf.mxu0
    %v2194 = vadd.f32 %v2136, %v2193
    %v2195 = vand.u32 %v1110, 4294901760
    %v2196 = vsub.f32 %v1110, %v2195
    %2197 = vmatmul.f32.gmra.mxu0 %v2196
    %v2198 = vpop.f32.mrf.mxu0
    %v2199 = vadd.f32 %v2140, %v2198
    %2200 = vdwg.mxu0
    %v2201 = vand.u32 %v1163, 4294901760
    %2202 = vmatpush.msra.mxu0 %v2201
    %v2203 = vand.u32 %v1162, 4294901760
    %2204 = vmatpush.msra.mxu0 %v2203
    %v2205 = vand.u32 %v1161, 4294901760
    %2206 = vmatpush.msra.mxu0 %v2205
    %v2207 = vand.u32 %v1160, 4294901760
    %2208 = vmatpush.msra.mxu0 %v2207
    %v2209 = vand.u32 %v1159, 4294901760
    %2210 = vmatpush.msra.mxu0 %v2209
    %v2211 = vand.u32 %v1158, 4294901760
    %2212 = vmatpush.msra.mxu0 %v2211
    %v2213 = vand.u32 %v1157, 4294901760
    %2214 = vmatpush.msra.mxu0 %v2213
    %v2215 = vand.u32 %v1156, 4294901760
    %2216 = vmatpush.msra.mxu0 %v2215
    %v2217 = vand.u32 %v1155, 4294901760
    %2218 = vmatpush.msra.mxu0 %v2217
    %v2219 = vand.u32 %v1154, 4294901760
    %2220 = vmatpush.msra.mxu0 %v2219
    %v2221 = vand.u32 %v1153, 4294901760
    %2222 = vmatpush.msra.mxu0 %v2221
    %v2223 = vand.u32 %v1152, 4294901760
    %2224 = vmatpush.msra.mxu0 %v2223
    %v2225 = vand.u32 %v1151, 4294901760
    %2226 = vmatpush.msra.mxu0 %v2225
    %v2227 = vand.u32 %v1150, 4294901760
    %2228 = vmatpush.msra.mxu0 %v2227
    %v2229 = vand.u32 %v1149, 4294901760
    %2230 = vmatpush.msra.mxu0 %v2229
    %v2231 = vand.u32 %v1148, 4294901760
    %2232 = vmatpush.msra.mxu0 %v2231
    %v2233 = vand.u32 %v1102, 4294901760
    %v2234 = vsub.f32 %v1102, %v2233
    %v2235 = vand.u32 %v2234, 4294901760
    %2236 = vmatmul.f32.gmra.mxu0 %v2235
    %v2237 = vpop.f32.mrf.mxu0
    %v2238 = vadd.f32 %v2194, %v2237
    %v2239 = vand.u32 %v1110, 4294901760
    %v2240 = vsub.f32 %v1110, %v2239
    %v2241 = vand.u32 %v2240, 4294901760
    %2242 = vmatmul.f32.gmra.mxu0 %v2241
    %v2243 = vpop.f32.mrf.mxu0
    %v2244 = vadd.f32 %v2199, %v2243
    %2245 = vdwg.mxu0
    %v2246 = vand.u32 %v1163, 4294901760
    %v2247 = vsub.f32 %v1163, %v2246
    %v2248 = vand.u32 %v2247, 4294901760
    %2249 = vmatpush.msra.mxu0 %v2248
    %v2250 = vand.u32 %v1162, 4294901760
    %v2251 = vsub.f32 %v1162, %v2250
    %v2252 = vand.u32 %v2251, 4294901760
    %2253 = vmatpush.msra.mxu0 %v2252
    %v2254 = vand.u32 %v1161, 4294901760
    %v2255 = vsub.f32 %v1161, %v2254
    %v2256 = vand.u32 %v2255, 4294901760
    %2257 = vmatpush.msra.mxu0 %v2256
    %v2258 = vand.u32 %v1160, 4294901760
    %v2259 = vsub.f32 %v1160, %v2258
    %v2260 = vand.u32 %v2259, 4294901760
    %2261 = vmatpush.msra.mxu0 %v2260
    %v2262 = vand.u32 %v1159, 4294901760
    %v2263 = vsub.f32 %v1159, %v2262
    %v2264 = vand.u32 %v2263, 4294901760
    %2265 = vmatpush.msra.mxu0 %v2264
    %v2266 = vand.u32 %v1158, 4294901760
    %v2267 = vsub.f32 %v1158, %v2266
    %v2268 = vand.u32 %v2267, 4294901760
    %2269 = vmatpush.msra.mxu0 %v2268
    %v2270 = vand.u32 %v1157, 4294901760
    %v2271 = vsub.f32 %v1157, %v2270
    %v2272 = vand.u32 %v2271, 4294901760
    %2273 = vmatpush.msra.mxu0 %v2272
    %v2274 = vand.u32 %v1156, 4294901760
    %v2275 = vsub.f32 %v1156, %v2274
    %v2276 = vand.u32 %v2275, 4294901760
    %2277 = vmatpush.msra.mxu0 %v2276
    %v2278 = vand.u32 %v1155, 4294901760
    %v2279 = vsub.f32 %v1155, %v2278
    %v2280 = vand.u32 %v2279, 4294901760
    %2281 = vmatpush.msra.mxu0 %v2280
    %v2282 = vand.u32 %v1154, 4294901760
    %v2283 = vsub.f32 %v1154, %v2282
    %v2284 = vand.u32 %v2283, 4294901760
    %2285 = vmatpush.msra.mxu0 %v2284
    %v2286 = vand.u32 %v1153, 4294901760
    %v2287 = vsub.f32 %v1153, %v2286
    %v2288 = vand.u32 %v2287, 4294901760
    %2289 = vmatpush.msra.mxu0 %v2288
    %v2290 = vand.u32 %v1152, 4294901760
    %v2291 = vsub.f32 %v1152, %v2290
    %v2292 = vand.u32 %v2291, 4294901760
    %2293 = vmatpush.msra.mxu0 %v2292
    %v2294 = vand.u32 %v1151, 4294901760
    %v2295 = vsub.f32 %v1151, %v2294
    %v2296 = vand.u32 %v2295, 4294901760
    %2297 = vmatpush.msra.mxu0 %v2296
    %v2298 = vand.u32 %v1150, 4294901760
    %v2299 = vsub.f32 %v1150, %v2298
    %v2300 = vand.u32 %v2299, 4294901760
    %2301 = vmatpush.msra.mxu0 %v2300
    %v2302 = vand.u32 %v1149, 4294901760
    %v2303 = vsub.f32 %v1149, %v2302
    %v2304 = vand.u32 %v2303, 4294901760
    %2305 = vmatpush.msra.mxu0 %v2304
    %v2306 = vand.u32 %v1148, 4294901760
    %v2307 = vsub.f32 %v1148, %v2306
    %v2308 = vand.u32 %v2307, 4294901760
    %2309 = vmatpush.msra.mxu0 %v2308
    %v2310 = vand.u32 %v1102, 4294901760
    %2311 = vmatmul.f32.gmra.mxu0 %v2310
    %v2312 = vpop.f32.mrf.mxu0
    %v2313 = vadd.f32 %v2238, %v2312
    %v2314 = vand.u32 %v1110, 4294901760
    %2315 = vmatmul.f32.gmra.mxu0 %v2314
    %v2316 = vpop.f32.mrf.mxu0
    %v2317 = vadd.f32 %v2244, %v2316
    %2318 = vdwg.mxu0
    %v2319 = vand.u32 %v1163, 4294901760
    %2320 = vmatpush.msra.mxu0 %v2319
    %v2321 = vand.u32 %v1162, 4294901760
    %2322 = vmatpush.msra.mxu0 %v2321
    %v2323 = vand.u32 %v1161, 4294901760
    %2324 = vmatpush.msra.mxu0 %v2323
    %v2325 = vand.u32 %v1160, 4294901760
    %2326 = vmatpush.msra.mxu0 %v2325
    %v2327 = vand.u32 %v1159, 4294901760
    %2328 = vmatpush.msra.mxu0 %v2327
    %v2329 = vand.u32 %v1158, 4294901760
    %2330 = vmatpush.msra.mxu0 %v2329
    %v2331 = vand.u32 %v1157, 4294901760
    %2332 = vmatpush.msra.mxu0 %v2331
    %v2333 = vand.u32 %v1156, 4294901760
    %2334 = vmatpush.msra.mxu0 %v2333
    %v2335 = vand.u32 %v1155, 4294901760
    %2336 = vmatpush.msra.mxu0 %v2335
    %v2337 = vand.u32 %v1154, 4294901760
    %2338 = vmatpush.msra.mxu0 %v2337
    %v2339 = vand.u32 %v1153, 4294901760
    %2340 = vmatpush.msra.mxu0 %v2339
    %v2341 = vand.u32 %v1152, 4294901760
    %2342 = vmatpush.msra.mxu0 %v2341
    %v2343 = vand.u32 %v1151, 4294901760
    %2344 = vmatpush.msra.mxu0 %v2343
    %v2345 = vand.u32 %v1150, 4294901760
    %2346 = vmatpush.msra.mxu0 %v2345
    %v2347 = vand.u32 %v1149, 4294901760
    %2348 = vmatpush.msra.mxu0 %v2347
    %v2349 = vand.u32 %v1148, 4294901760
    %2350 = vmatpush.msra.mxu0 %v2349
    %v2351 = vand.u32 %v1102, 4294901760
    %2352 = vmatmul.f32.gmra.mxu0 %v2351
    %v2353 = vpop.f32.mrf.mxu0
    %v2354 = vadd.f32 %v2313, %v2353
    %v2355 = vand.u32 %v1110, 4294901760
    %2356 = vmatmul.f32.gmra.mxu0 %v2355
    %v2357 = vpop.f32.mrf.mxu0
    %v2358 = vadd.f32 %v2317, %v2357
    %2359 = vdwg.mxu0
    %v2360 = vand.u32 %v1179, 4294901760
    %2361 = vmatpush.msra.mxu0 %v2360
    %v2362 = vand.u32 %v1178, 4294901760
    %2363 = vmatpush.msra.mxu0 %v2362
    %v2364 = vand.u32 %v1177, 4294901760
    %2365 = vmatpush.msra.mxu0 %v2364
    %v2366 = vand.u32 %v1176, 4294901760
    %2367 = vmatpush.msra.mxu0 %v2366
    %v2368 = vand.u32 %v1175, 4294901760
    %2369 = vmatpush.msra.mxu0 %v2368
    %v2370 = vand.u32 %v1174, 4294901760
    %2371 = vmatpush.msra.mxu0 %v2370
    %v2372 = vand.u32 %v1173, 4294901760
    %2373 = vmatpush.msra.mxu0 %v2372
    %v2374 = vand.u32 %v1172, 4294901760
    %2375 = vmatpush.msra.mxu0 %v2374
    %v2376 = vand.u32 %v1171, 4294901760
    %2377 = vmatpush.msra.mxu0 %v2376
    %v2378 = vand.u32 %v1170, 4294901760
    %2379 = vmatpush.msra.mxu0 %v2378
    %v2380 = vand.u32 %v1169, 4294901760
    %2381 = vmatpush.msra.mxu0 %v2380
    %v2382 = vand.u32 %v1168, 4294901760
    %2383 = vmatpush.msra.mxu0 %v2382
    %v2384 = vand.u32 %v1167, 4294901760
    %2385 = vmatpush.msra.mxu0 %v2384
    %v2386 = vand.u32 %v1166, 4294901760
    %2387 = vmatpush.msra.mxu0 %v2386
    %v2388 = vand.u32 %v1165, 4294901760
    %2389 = vmatpush.msra.mxu0 %v2388
    %v2390 = vand.u32 %v1164, 4294901760
    %2391 = vmatpush.msra.mxu0 %v2390
    %v2392 = vand.u32 %v1103, 4294901760
    %v2393 = vsub.f32 %v1103, %v2392
    %v2394 = vand.u32 %v2393, 4294901760
    %v2395 = vsub.f32 %v2393, %v2394
    %v2396 = vand.u32 %v2395, 4294901760
    %2397 = vmatmul.f32.gmra.mxu0 %v2396
    %v2398 = vpop.f32.mrf.mxu0
    %v2399 = vadd.f32 %v2354, %v2398
    %v2400 = vand.u32 %v1111, 4294901760
    %v2401 = vsub.f32 %v1111, %v2400
    %v2402 = vand.u32 %v2401, 4294901760
    %v2403 = vsub.f32 %v2401, %v2402
    %v2404 = vand.u32 %v2403, 4294901760
    %2405 = vmatmul.f32.gmra.mxu0 %v2404
    %v2406 = vpop.f32.mrf.mxu0
    %v2407 = vadd.f32 %v2358, %v2406
    %2408 = vdwg.mxu0
    %v2409 = vand.u32 %v1179, 4294901760
    %v2410 = vsub.f32 %v1179, %v2409
    %v2411 = vand.u32 %v2410, 4294901760
    %v2412 = vsub.f32 %v2410, %v2411
    %v2413 = vand.u32 %v2412, 4294901760
    %2414 = vmatpush.msra.mxu0 %v2413
    %v2415 = vand.u32 %v1178, 4294901760
    %v2416 = vsub.f32 %v1178, %v2415
    %v2417 = vand.u32 %v2416, 4294901760
    %v2418 = vsub.f32 %v2416, %v2417
    %v2419 = vand.u32 %v2418, 4294901760
    %2420 = vmatpush.msra.mxu0 %v2419
    %v2421 = vand.u32 %v1177, 4294901760
    %v2422 = vsub.f32 %v1177, %v2421
    %v2423 = vand.u32 %v2422, 4294901760
    %v2424 = vsub.f32 %v2422, %v2423
    %v2425 = vand.u32 %v2424, 4294901760
    %2426 = vmatpush.msra.mxu0 %v2425
    %v2427 = vand.u32 %v1176, 4294901760
    %v2428 = vsub.f32 %v1176, %v2427
    %v2429 = vand.u32 %v2428, 4294901760
    %v2430 = vsub.f32 %v2428, %v2429
    %v2431 = vand.u32 %v2430, 4294901760
    %2432 = vmatpush.msra.mxu0 %v2431
    %v2433 = vand.u32 %v1175, 4294901760
    %v2434 = vsub.f32 %v1175, %v2433
    %v2435 = vand.u32 %v2434, 4294901760
    %v2436 = vsub.f32 %v2434, %v2435
    %v2437 = vand.u32 %v2436, 4294901760
    %2438 = vmatpush.msra.mxu0 %v2437
    %v2439 = vand.u32 %v1174, 4294901760
    %v2440 = vsub.f32 %v1174, %v2439
    %v2441 = vand.u32 %v2440, 4294901760
    %v2442 = vsub.f32 %v2440, %v2441
    %v2443 = vand.u32 %v2442, 4294901760
    %2444 = vmatpush.msra.mxu0 %v2443
    %v2445 = vand.u32 %v1173, 4294901760
    %v2446 = vsub.f32 %v1173, %v2445
    %v2447 = vand.u32 %v2446, 4294901760
    %v2448 = vsub.f32 %v2446, %v2447
    %v2449 = vand.u32 %v2448, 4294901760
    %2450 = vmatpush.msra.mxu0 %v2449
    %v2451 = vand.u32 %v1172, 4294901760
    %v2452 = vsub.f32 %v1172, %v2451
    %v2453 = vand.u32 %v2452, 4294901760
    %v2454 = vsub.f32 %v2452, %v2453
    %v2455 = vand.u32 %v2454, 4294901760
    %2456 = vmatpush.msra.mxu0 %v2455
    %v2457 = vand.u32 %v1171, 4294901760
    %v2458 = vsub.f32 %v1171, %v2457
    %v2459 = vand.u32 %v2458, 4294901760
    %v2460 = vsub.f32 %v2458, %v2459
    %v2461 = vand.u32 %v2460, 4294901760
    %2462 = vmatpush.msra.mxu0 %v2461
    %v2463 = vand.u32 %v1170, 4294901760
    %v2464 = vsub.f32 %v1170, %v2463
    %v2465 = vand.u32 %v2464, 4294901760
    %v2466 = vsub.f32 %v2464, %v2465
    %v2467 = vand.u32 %v2466, 4294901760
    %2468 = vmatpush.msra.mxu0 %v2467
    %v2469 = vand.u32 %v1169, 4294901760
    %v2470 = vsub.f32 %v1169, %v2469
    %v2471 = vand.u32 %v2470, 4294901760
    %v2472 = vsub.f32 %v2470, %v2471
    %v2473 = vand.u32 %v2472, 4294901760
    %2474 = vmatpush.msra.mxu0 %v2473
    %v2475 = vand.u32 %v1168, 4294901760
    %v2476 = vsub.f32 %v1168, %v2475
    %v2477 = vand.u32 %v2476, 4294901760
    %v2478 = vsub.f32 %v2476, %v2477
    %v2479 = vand.u32 %v2478, 4294901760
    %2480 = vmatpush.msra.mxu0 %v2479
    %v2481 = vand.u32 %v1167, 4294901760
    %v2482 = vsub.f32 %v1167, %v2481
    %v2483 = vand.u32 %v2482, 4294901760
    %v2484 = vsub.f32 %v2482, %v2483
    %v2485 = vand.u32 %v2484, 4294901760
    %2486 = vmatpush.msra.mxu0 %v2485
    %v2487 = vand.u32 %v1166, 4294901760
    %v2488 = vsub.f32 %v1166, %v2487
    %v2489 = vand.u32 %v2488, 4294901760
    %v2490 = vsub.f32 %v2488, %v2489
    %v2491 = vand.u32 %v2490, 4294901760
    %2492 = vmatpush.msra.mxu0 %v2491
    %v2493 = vand.u32 %v1165, 4294901760
    %v2494 = vsub.f32 %v1165, %v2493
    %v2495 = vand.u32 %v2494, 4294901760
    %v2496 = vsub.f32 %v2494, %v2495
    %v2497 = vand.u32 %v2496, 4294901760
    %2498 = vmatpush.msra.mxu0 %v2497
    %v2499 = vand.u32 %v1164, 4294901760
    %v2500 = vsub.f32 %v1164, %v2499
    %v2501 = vand.u32 %v2500, 4294901760
    %v2502 = vsub.f32 %v2500, %v2501
    %v2503 = vand.u32 %v2502, 4294901760
    %2504 = vmatpush.msra.mxu0 %v2503
    %v2505 = vand.u32 %v1103, 4294901760
    %2506 = vmatmul.f32.gmra.mxu0 %v2505
    %v2507 = vpop.f32.mrf.mxu0
    %v2508 = vadd.f32 %v2399, %v2507
    %v2509 = vand.u32 %v1111, 4294901760
    %2510 = vmatmul.f32.gmra.mxu0 %v2509
    %v2511 = vpop.f32.mrf.mxu0
    %v2512 = vadd.f32 %v2407, %v2511
    %2513 = vdwg.mxu0
    %v2514 = vand.u32 %v1179, 4294901760
    %v2515 = vsub.f32 %v1179, %v2514
    %2516 = vmatpush.msra.mxu0 %v2515
    %v2517 = vand.u32 %v1178, 4294901760
    %v2518 = vsub.f32 %v1178, %v2517
    %2519 = vmatpush.msra.mxu0 %v2518
    %v2520 = vand.u32 %v1177, 4294901760
    %v2521 = vsub.f32 %v1177, %v2520
    %2522 = vmatpush.msra.mxu0 %v2521
    %v2523 = vand.u32 %v1176, 4294901760
    %v2524 = vsub.f32 %v1176, %v2523
    %2525 = vmatpush.msra.mxu0 %v2524
    %v2526 = vand.u32 %v1175, 4294901760
    %v2527 = vsub.f32 %v1175, %v2526
    %2528 = vmatpush.msra.mxu0 %v2527
    %v2529 = vand.u32 %v1174, 4294901760
    %v2530 = vsub.f32 %v1174, %v2529
    %2531 = vmatpush.msra.mxu0 %v2530
    %v2532 = vand.u32 %v1173, 4294901760
    %v2533 = vsub.f32 %v1173, %v2532
    %2534 = vmatpush.msra.mxu0 %v2533
    %v2535 = vand.u32 %v1172, 4294901760
    %v2536 = vsub.f32 %v1172, %v2535
    %2537 = vmatpush.msra.mxu0 %v2536
    %v2538 = vand.u32 %v1171, 4294901760
    %v2539 = vsub.f32 %v1171, %v2538
    %2540 = vmatpush.msra.mxu0 %v2539
    %v2541 = vand.u32 %v1170, 4294901760
    %v2542 = vsub.f32 %v1170, %v2541
    %2543 = vmatpush.msra.mxu0 %v2542
    %v2544 = vand.u32 %v1169, 4294901760
    %v2545 = vsub.f32 %v1169, %v2544
    %2546 = vmatpush.msra.mxu0 %v2545
    %v2547 = vand.u32 %v1168, 4294901760
    %v2548 = vsub.f32 %v1168, %v2547
    %2549 = vmatpush.msra.mxu0 %v2548
    %v2550 = vand.u32 %v1167, 4294901760
    %v2551 = vsub.f32 %v1167, %v2550
    %2552 = vmatpush.msra.mxu0 %v2551
    %v2553 = vand.u32 %v1166, 4294901760
    %v2554 = vsub.f32 %v1166, %v2553
    %2555 = vmatpush.msra.mxu0 %v2554
    %v2556 = vand.u32 %v1165, 4294901760
    %v2557 = vsub.f32 %v1165, %v2556
    %2558 = vmatpush.msra.mxu0 %v2557
    %v2559 = vand.u32 %v1164, 4294901760
    %v2560 = vsub.f32 %v1164, %v2559
    %2561 = vmatpush.msra.mxu0 %v2560
    %v2562 = vand.u32 %v1103, 4294901760
    %v2563 = vsub.f32 %v1103, %v2562
    %2564 = vmatmul.f32.gmra.mxu0 %v2563
    %v2565 = vpop.f32.mrf.mxu0
    %v2566 = vadd.f32 %v2508, %v2565
    %v2567 = vand.u32 %v1111, 4294901760
    %v2568 = vsub.f32 %v1111, %v2567
    %2569 = vmatmul.f32.gmra.mxu0 %v2568
    %v2570 = vpop.f32.mrf.mxu0
    %v2571 = vadd.f32 %v2512, %v2570
    %2572 = vdwg.mxu0
    %v2573 = vand.u32 %v1179, 4294901760
    %2574 = vmatpush.msra.mxu0 %v2573
    %v2575 = vand.u32 %v1178, 4294901760
    %2576 = vmatpush.msra.mxu0 %v2575
    %v2577 = vand.u32 %v1177, 4294901760
    %2578 = vmatpush.msra.mxu0 %v2577
    %v2579 = vand.u32 %v1176, 4294901760
    %2580 = vmatpush.msra.mxu0 %v2579
    %v2581 = vand.u32 %v1175, 4294901760
    %2582 = vmatpush.msra.mxu0 %v2581
    %v2583 = vand.u32 %v1174, 4294901760
    %2584 = vmatpush.msra.mxu0 %v2583
    %v2585 = vand.u32 %v1173, 4294901760
    %2586 = vmatpush.msra.mxu0 %v2585
    %v2587 = vand.u32 %v1172, 4294901760
    %2588 = vmatpush.msra.mxu0 %v2587
    %v2589 = vand.u32 %v1171, 4294901760
    %2590 = vmatpush.msra.mxu0 %v2589
    %v2591 = vand.u32 %v1170, 4294901760
    %2592 = vmatpush.msra.mxu0 %v2591
    %v2593 = vand.u32 %v1169, 4294901760
    %2594 = vmatpush.msra.mxu0 %v2593
    %v2595 = vand.u32 %v1168, 4294901760
    %2596 = vmatpush.msra.mxu0 %v2595
    %v2597 = vand.u32 %v1167, 4294901760
    %2598 = vmatpush.msra.mxu0 %v2597
    %v2599 = vand.u32 %v1166, 4294901760
    %2600 = vmatpush.msra.mxu0 %v2599
    %v2601 = vand.u32 %v1165, 4294901760
    %2602 = vmatpush.msra.mxu0 %v2601
    %v2603 = vand.u32 %v1164, 4294901760
    %2604 = vmatpush.msra.mxu0 %v2603
    %v2605 = vand.u32 %v1103, 4294901760
    %v2606 = vsub.f32 %v1103, %v2605
    %v2607 = vand.u32 %v2606, 4294901760
    %2608 = vmatmul.f32.gmra.mxu0 %v2607
    %v2609 = vpop.f32.mrf.mxu0
    %v2610 = vadd.f32 %v2566, %v2609
    %v2611 = vand.u32 %v1111, 4294901760
    %v2612 = vsub.f32 %v1111, %v2611
    %v2613 = vand.u32 %v2612, 4294901760
    %2614 = vmatmul.f32.gmra.mxu0 %v2613
    %v2615 = vpop.f32.mrf.mxu0
    %v2616 = vadd.f32 %v2571, %v2615
    %2617 = vdwg.mxu0
    %v2618 = vand.u32 %v1179, 4294901760
    %v2619 = vsub.f32 %v1179, %v2618
    %v2620 = vand.u32 %v2619, 4294901760
    %2621 = vmatpush.msra.mxu0 %v2620
    %v2622 = vand.u32 %v1178, 4294901760
    %v2623 = vsub.f32 %v1178, %v2622
    %v2624 = vand.u32 %v2623, 4294901760
    %2625 = vmatpush.msra.mxu0 %v2624
    %v2626 = vand.u32 %v1177, 4294901760
    %v2627 = vsub.f32 %v1177, %v2626
    %v2628 = vand.u32 %v2627, 4294901760
    %2629 = vmatpush.msra.mxu0 %v2628
    %v2630 = vand.u32 %v1176, 4294901760
    %v2631 = vsub.f32 %v1176, %v2630
    %v2632 = vand.u32 %v2631, 4294901760
    %2633 = vmatpush.msra.mxu0 %v2632
    %v2634 = vand.u32 %v1175, 4294901760
    %v2635 = vsub.f32 %v1175, %v2634
    %v2636 = vand.u32 %v2635, 4294901760
    %2637 = vmatpush.msra.mxu0 %v2636
    %v2638 = vand.u32 %v1174, 4294901760
    %v2639 = vsub.f32 %v1174, %v2638
    %v2640 = vand.u32 %v2639, 4294901760
    %2641 = vmatpush.msra.mxu0 %v2640
    %v2642 = vand.u32 %v1173, 4294901760
    %v2643 = vsub.f32 %v1173, %v2642
    %v2644 = vand.u32 %v2643, 4294901760
    %2645 = vmatpush.msra.mxu0 %v2644
    %v2646 = vand.u32 %v1172, 4294901760
    %v2647 = vsub.f32 %v1172, %v2646
    %v2648 = vand.u32 %v2647, 4294901760
    %2649 = vmatpush.msra.mxu0 %v2648
    %v2650 = vand.u32 %v1171, 4294901760
    %v2651 = vsub.f32 %v1171, %v2650
    %v2652 = vand.u32 %v2651, 4294901760
    %2653 = vmatpush.msra.mxu0 %v2652
    %v2654 = vand.u32 %v1170, 4294901760
    %v2655 = vsub.f32 %v1170, %v2654
    %v2656 = vand.u32 %v2655, 4294901760
    %2657 = vmatpush.msra.mxu0 %v2656
    %v2658 = vand.u32 %v1169, 4294901760
    %v2659 = vsub.f32 %v1169, %v2658
    %v2660 = vand.u32 %v2659, 4294901760
    %2661 = vmatpush.msra.mxu0 %v2660
    %v2662 = vand.u32 %v1168, 4294901760
    %v2663 = vsub.f32 %v1168, %v2662
    %v2664 = vand.u32 %v2663, 4294901760
    %2665 = vmatpush.msra.mxu0 %v2664
    %v2666 = vand.u32 %v1167, 4294901760
    %v2667 = vsub.f32 %v1167, %v2666
    %v2668 = vand.u32 %v2667, 4294901760
    %2669 = vmatpush.msra.mxu0 %v2668
    %v2670 = vand.u32 %v1166, 4294901760
    %v2671 = vsub.f32 %v1166, %v2670
    %v2672 = vand.u32 %v2671, 4294901760
    %2673 = vmatpush.msra.mxu0 %v2672
    %v2674 = vand.u32 %v1165, 4294901760
    %v2675 = vsub.f32 %v1165, %v2674
    %v2676 = vand.u32 %v2675, 4294901760
    %2677 = vmatpush.msra.mxu0 %v2676
    %v2678 = vand.u32 %v1164, 4294901760
    %v2679 = vsub.f32 %v1164, %v2678
    %v2680 = vand.u32 %v2679, 4294901760
    %2681 = vmatpush.msra.mxu0 %v2680
    %v2682 = vand.u32 %v1103, 4294901760
    %2683 = vmatmul.f32.gmra.mxu0 %v2682
    %v2684 = vpop.f32.mrf.mxu0
    %v2685 = vadd.f32 %v2610, %v2684
    %v2686 = vand.u32 %v1111, 4294901760
    %2687 = vmatmul.f32.gmra.mxu0 %v2686
    %v2688 = vpop.f32.mrf.mxu0
    %v2689 = vadd.f32 %v2616, %v2688
    %2690 = vdwg.mxu0
    %v2691 = vand.u32 %v1179, 4294901760
    %2692 = vmatpush.msra.mxu0 %v2691
    %v2693 = vand.u32 %v1178, 4294901760
    %2694 = vmatpush.msra.mxu0 %v2693
    %v2695 = vand.u32 %v1177, 4294901760
    %2696 = vmatpush.msra.mxu0 %v2695
    %v2697 = vand.u32 %v1176, 4294901760
    %2698 = vmatpush.msra.mxu0 %v2697
    %v2699 = vand.u32 %v1175, 4294901760
    %2700 = vmatpush.msra.mxu0 %v2699
    %v2701 = vand.u32 %v1174, 4294901760
    %2702 = vmatpush.msra.mxu0 %v2701
    %v2703 = vand.u32 %v1173, 4294901760
    %2704 = vmatpush.msra.mxu0 %v2703
    %v2705 = vand.u32 %v1172, 4294901760
    %2706 = vmatpush.msra.mxu0 %v2705
    %v2707 = vand.u32 %v1171, 4294901760
    %2708 = vmatpush.msra.mxu0 %v2707
    %v2709 = vand.u32 %v1170, 4294901760
    %2710 = vmatpush.msra.mxu0 %v2709
    %v2711 = vand.u32 %v1169, 4294901760
    %2712 = vmatpush.msra.mxu0 %v2711
    %v2713 = vand.u32 %v1168, 4294901760
    %2714 = vmatpush.msra.mxu0 %v2713
    %v2715 = vand.u32 %v1167, 4294901760
    %2716 = vmatpush.msra.mxu0 %v2715
    %v2717 = vand.u32 %v1166, 4294901760
    %2718 = vmatpush.msra.mxu0 %v2717
    %v2719 = vand.u32 %v1165, 4294901760
    %2720 = vmatpush.msra.mxu0 %v2719
    %v2721 = vand.u32 %v1164, 4294901760
    %2722 = vmatpush.msra.mxu0 %v2721
    %v2723 = vand.u32 %v1103, 4294901760
    %2724 = vmatmul.f32.gmra.mxu0 %v2723
    %v2725 = vpop.f32.mrf.mxu0
    %v2726 = vadd.f32 %v2685, %v2725
    %v2727 = vand.u32 %v1111, 4294901760
    %2728 = vmatmul.f32.gmra.mxu0 %v2727
    %v2729 = vpop.f32.mrf.mxu0
    %v2730 = vadd.f32 %v2689, %v2729
    %2731 = vdwg.mxu0
    %v2732 = vand.u32 %v1195, 4294901760
    %2733 = vmatpush.msra.mxu0 %v2732
    %v2734 = vand.u32 %v1194, 4294901760
    %2735 = vmatpush.msra.mxu0 %v2734
    %v2736 = vand.u32 %v1193, 4294901760
    %2737 = vmatpush.msra.mxu0 %v2736
    %v2738 = vand.u32 %v1192, 4294901760
    %2739 = vmatpush.msra.mxu0 %v2738
    %v2740 = vand.u32 %v1191, 4294901760
    %2741 = vmatpush.msra.mxu0 %v2740
    %v2742 = vand.u32 %v1190, 4294901760
    %2743 = vmatpush.msra.mxu0 %v2742
    %v2744 = vand.u32 %v1189, 4294901760
    %2745 = vmatpush.msra.mxu0 %v2744
    %v2746 = vand.u32 %v1188, 4294901760
    %2747 = vmatpush.msra.mxu0 %v2746
    %v2748 = vand.u32 %v1187, 4294901760
    %2749 = vmatpush.msra.mxu0 %v2748
    %v2750 = vand.u32 %v1186, 4294901760
    %2751 = vmatpush.msra.mxu0 %v2750
    %v2752 = vand.u32 %v1185, 4294901760
    %2753 = vmatpush.msra.mxu0 %v2752
    %v2754 = vand.u32 %v1184, 4294901760
    %2755 = vmatpush.msra.mxu0 %v2754
    %v2756 = vand.u32 %v1183, 4294901760
    %2757 = vmatpush.msra.mxu0 %v2756
    %v2758 = vand.u32 %v1182, 4294901760
    %2759 = vmatpush.msra.mxu0 %v2758
    %v2760 = vand.u32 %v1181, 4294901760
    %2761 = vmatpush.msra.mxu0 %v2760
    %v2762 = vand.u32 %v1180, 4294901760
    %2763 = vmatpush.msra.mxu0 %v2762
    %v2764 = vand.u32 %v1104, 4294901760
    %v2765 = vsub.f32 %v1104, %v2764
    %v2766 = vand.u32 %v2765, 4294901760
    %v2767 = vsub.f32 %v2765, %v2766
    %v2768 = vand.u32 %v2767, 4294901760
    %2769 = vmatmul.f32.gmra.mxu0 %v2768
    %v2770 = vpop.f32.mrf.mxu0
    %v2771 = vadd.f32 %v2726, %v2770
    %v2772 = vand.u32 %v1112, 4294901760
    %v2773 = vsub.f32 %v1112, %v2772
    %v2774 = vand.u32 %v2773, 4294901760
    %v2775 = vsub.f32 %v2773, %v2774
    %v2776 = vand.u32 %v2775, 4294901760
    %2777 = vmatmul.f32.gmra.mxu0 %v2776
    %v2778 = vpop.f32.mrf.mxu0
    %v2779 = vadd.f32 %v2730, %v2778
    %2780 = vdwg.mxu0
    %v2781 = vand.u32 %v1195, 4294901760
    %v2782 = vsub.f32 %v1195, %v2781
    %v2783 = vand.u32 %v2782, 4294901760
    %v2784 = vsub.f32 %v2782, %v2783
    %v2785 = vand.u32 %v2784, 4294901760
    %2786 = vmatpush.msra.mxu0 %v2785
    %v2787 = vand.u32 %v1194, 4294901760
    %v2788 = vsub.f32 %v1194, %v2787
    %v2789 = vand.u32 %v2788, 4294901760
    %v2790 = vsub.f32 %v2788, %v2789
    %v2791 = vand.u32 %v2790, 4294901760
    %2792 = vmatpush.msra.mxu0 %v2791
    %v2793 = vand.u32 %v1193, 4294901760
    %v2794 = vsub.f32 %v1193, %v2793
    %v2795 = vand.u32 %v2794, 4294901760
    %v2796 = vsub.f32 %v2794, %v2795
    %v2797 = vand.u32 %v2796, 4294901760
    %2798 = vmatpush.msra.mxu0 %v2797
    %v2799 = vand.u32 %v1192, 4294901760
    %v2800 = vsub.f32 %v1192, %v2799
    %v2801 = vand.u32 %v2800, 4294901760
    %v2802 = vsub.f32 %v2800, %v2801
    %v2803 = vand.u32 %v2802, 4294901760
    %2804 = vmatpush.msra.mxu0 %v2803
    %v2805 = vand.u32 %v1191, 4294901760
    %v2806 = vsub.f32 %v1191, %v2805
    %v2807 = vand.u32 %v2806, 4294901760
    %v2808 = vsub.f32 %v2806, %v2807
    %v2809 = vand.u32 %v2808, 4294901760
    %2810 = vmatpush.msra.mxu0 %v2809
    %v2811 = vand.u32 %v1190, 4294901760
    %v2812 = vsub.f32 %v1190, %v2811
    %v2813 = vand.u32 %v2812, 4294901760
    %v2814 = vsub.f32 %v2812, %v2813
    %v2815 = vand.u32 %v2814, 4294901760
    %2816 = vmatpush.msra.mxu0 %v2815
    %v2817 = vand.u32 %v1189, 4294901760
    %v2818 = vsub.f32 %v1189, %v2817
    %v2819 = vand.u32 %v2818, 4294901760
    %v2820 = vsub.f32 %v2818, %v2819
    %v2821 = vand.u32 %v2820, 4294901760
    %2822 = vmatpush.msra.mxu0 %v2821
    %v2823 = vand.u32 %v1188, 4294901760
    %v2824 = vsub.f32 %v1188, %v2823
    %v2825 = vand.u32 %v2824, 4294901760
    %v2826 = vsub.f32 %v2824, %v2825
    %v2827 = vand.u32 %v2826, 4294901760
    %2828 = vmatpush.msra.mxu0 %v2827
    %v2829 = vand.u32 %v1187, 4294901760
    %v2830 = vsub.f32 %v1187, %v2829
    %v2831 = vand.u32 %v2830, 4294901760
    %v2832 = vsub.f32 %v2830, %v2831
    %v2833 = vand.u32 %v2832, 4294901760
    %2834 = vmatpush.msra.mxu0 %v2833
    %v2835 = vand.u32 %v1186, 4294901760
    %v2836 = vsub.f32 %v1186, %v2835
    %v2837 = vand.u32 %v2836, 4294901760
    %v2838 = vsub.f32 %v2836, %v2837
    %v2839 = vand.u32 %v2838, 4294901760
    %2840 = vmatpush.msra.mxu0 %v2839
    %v2841 = vand.u32 %v1185, 4294901760
    %v2842 = vsub.f32 %v1185, %v2841
    %v2843 = vand.u32 %v2842, 4294901760
    %v2844 = vsub.f32 %v2842, %v2843
    %v2845 = vand.u32 %v2844, 4294901760
    %2846 = vmatpush.msra.mxu0 %v2845
    %v2847 = vand.u32 %v1184, 4294901760
    %v2848 = vsub.f32 %v1184, %v2847
    %v2849 = vand.u32 %v2848, 4294901760
    %v2850 = vsub.f32 %v2848, %v2849
    %v2851 = vand.u32 %v2850, 4294901760
    %2852 = vmatpush.msra.mxu0 %v2851
    %v2853 = vand.u32 %v1183, 4294901760
    %v2854 = vsub.f32 %v1183, %v2853
    %v2855 = vand.u32 %v2854, 4294901760
    %v2856 = vsub.f32 %v2854, %v2855
    %v2857 = vand.u32 %v2856, 4294901760
    %2858 = vmatpush.msra.mxu0 %v2857
    %v2859 = vand.u32 %v1182, 4294901760
    %v2860 = vsub.f32 %v1182, %v2859
    %v2861 = vand.u32 %v2860, 4294901760
    %v2862 = vsub.f32 %v2860, %v2861
    %v2863 = vand.u32 %v2862, 4294901760
    %2864 = vmatpush.msra.mxu0 %v2863
    %v2865 = vand.u32 %v1181, 4294901760
    %v2866 = vsub.f32 %v1181, %v2865
    %v2867 = vand.u32 %v2866, 4294901760
    %v2868 = vsub.f32 %v2866, %v2867
    %v2869 = vand.u32 %v2868, 4294901760
    %2870 = vmatpush.msra.mxu0 %v2869
    %v2871 = vand.u32 %v1180, 4294901760
    %v2872 = vsub.f32 %v1180, %v2871
    %v2873 = vand.u32 %v2872, 4294901760
    %v2874 = vsub.f32 %v2872, %v2873
    %v2875 = vand.u32 %v2874, 4294901760
    %2876 = vmatpush.msra.mxu0 %v2875
    %v2877 = vand.u32 %v1104, 4294901760
    %2878 = vmatmul.f32.gmra.mxu0 %v2877
    %v2879 = vpop.f32.mrf.mxu0
    %v2880 = vadd.f32 %v2771, %v2879
    %v2881 = vand.u32 %v1112, 4294901760
    %2882 = vmatmul.f32.gmra.mxu0 %v2881
    %v2883 = vpop.f32.mrf.mxu0
    %v2884 = vadd.f32 %v2779, %v2883
    %2885 = vdwg.mxu0
    %v2886 = vand.u32 %v1195, 4294901760
    %v2887 = vsub.f32 %v1195, %v2886
    %2888 = vmatpush.msra.mxu0 %v2887
    %v2889 = vand.u32 %v1194, 4294901760
    %v2890 = vsub.f32 %v1194, %v2889
    %2891 = vmatpush.msra.mxu0 %v2890
    %v2892 = vand.u32 %v1193, 4294901760
    %v2893 = vsub.f32 %v1193, %v2892
    %2894 = vmatpush.msra.mxu0 %v2893
    %v2895 = vand.u32 %v1192, 4294901760
    %v2896 = vsub.f32 %v1192, %v2895
    %2897 = vmatpush.msra.mxu0 %v2896
    %v2898 = vand.u32 %v1191, 4294901760
    %v2899 = vsub.f32 %v1191, %v2898
    %2900 = vmatpush.msra.mxu0 %v2899
    %v2901 = vand.u32 %v1190, 4294901760
    %v2902 = vsub.f32 %v1190, %v2901
    %2903 = vmatpush.msra.mxu0 %v2902
    %v2904 = vand.u32 %v1189, 4294901760
    %v2905 = vsub.f32 %v1189, %v2904
    %2906 = vmatpush.msra.mxu0 %v2905
    %v2907 = vand.u32 %v1188, 4294901760
    %v2908 = vsub.f32 %v1188, %v2907
    %2909 = vmatpush.msra.mxu0 %v2908
    %v2910 = vand.u32 %v1187, 4294901760
    %v2911 = vsub.f32 %v1187, %v2910
    %2912 = vmatpush.msra.mxu0 %v2911
    %v2913 = vand.u32 %v1186, 4294901760
    %v2914 = vsub.f32 %v1186, %v2913
    %2915 = vmatpush.msra.mxu0 %v2914
    %v2916 = vand.u32 %v1185, 4294901760
    %v2917 = vsub.f32 %v1185, %v2916
    %2918 = vmatpush.msra.mxu0 %v2917
    %v2919 = vand.u32 %v1184, 4294901760
    %v2920 = vsub.f32 %v1184, %v2919
    %2921 = vmatpush.msra.mxu0 %v2920
    %v2922 = vand.u32 %v1183, 4294901760
    %v2923 = vsub.f32 %v1183, %v2922
    %2924 = vmatpush.msra.mxu0 %v2923
    %v2925 = vand.u32 %v1182, 4294901760
    %v2926 = vsub.f32 %v1182, %v2925
    %2927 = vmatpush.msra.mxu0 %v2926
    %v2928 = vand.u32 %v1181, 4294901760
    %v2929 = vsub.f32 %v1181, %v2928
    %2930 = vmatpush.msra.mxu0 %v2929
    %v2931 = vand.u32 %v1180, 4294901760
    %v2932 = vsub.f32 %v1180, %v2931
    %2933 = vmatpush.msra.mxu0 %v2932
    %v2934 = vand.u32 %v1104, 4294901760
    %v2935 = vsub.f32 %v1104, %v2934
    %2936 = vmatmul.f32.gmra.mxu0 %v2935
    %v2937 = vpop.f32.mrf.mxu0
    %v2938 = vadd.f32 %v2880, %v2937
    %v2939 = vand.u32 %v1112, 4294901760
    %v2940 = vsub.f32 %v1112, %v2939
    %2941 = vmatmul.f32.gmra.mxu0 %v2940
    %v2942 = vpop.f32.mrf.mxu0
    %v2943 = vadd.f32 %v2884, %v2942
    %2944 = vdwg.mxu0
    %v2945 = vand.u32 %v1195, 4294901760
    %2946 = vmatpush.msra.mxu0 %v2945
    %v2947 = vand.u32 %v1194, 4294901760
    %2948 = vmatpush.msra.mxu0 %v2947
    %v2949 = vand.u32 %v1193, 4294901760
    %2950 = vmatpush.msra.mxu0 %v2949
    %v2951 = vand.u32 %v1192, 4294901760
    %2952 = vmatpush.msra.mxu0 %v2951
    %v2953 = vand.u32 %v1191, 4294901760
    %2954 = vmatpush.msra.mxu0 %v2953
    %v2955 = vand.u32 %v1190, 4294901760
    %2956 = vmatpush.msra.mxu0 %v2955
    %v2957 = vand.u32 %v1189, 4294901760
    %2958 = vmatpush.msra.mxu0 %v2957
    %v2959 = vand.u32 %v1188, 4294901760
    %2960 = vmatpush.msra.mxu0 %v2959
    %v2961 = vand.u32 %v1187, 4294901760
    %2962 = vmatpush.msra.mxu0 %v2961
    %v2963 = vand.u32 %v1186, 4294901760
    %2964 = vmatpush.msra.mxu0 %v2963
    %v2965 = vand.u32 %v1185, 4294901760
    %2966 = vmatpush.msra.mxu0 %v2965
    %v2967 = vand.u32 %v1184, 4294901760
    %2968 = vmatpush.msra.mxu0 %v2967
    %v2969 = vand.u32 %v1183, 4294901760
    %2970 = vmatpush.msra.mxu0 %v2969
    %v2971 = vand.u32 %v1182, 4294901760
    %2972 = vmatpush.msra.mxu0 %v2971
    %v2973 = vand.u32 %v1181, 4294901760
    %2974 = vmatpush.msra.mxu0 %v2973
    %v2975 = vand.u32 %v1180, 4294901760
    %2976 = vmatpush.msra.mxu0 %v2975
    %v2977 = vand.u32 %v1104, 4294901760
    %v2978 = vsub.f32 %v1104, %v2977
    %v2979 = vand.u32 %v2978, 4294901760
    %2980 = vmatmul.f32.gmra.mxu0 %v2979
    %v2981 = vpop.f32.mrf.mxu0
    %v2982 = vadd.f32 %v2938, %v2981
    %v2983 = vand.u32 %v1112, 4294901760
    %v2984 = vsub.f32 %v1112, %v2983
    %v2985 = vand.u32 %v2984, 4294901760
    %2986 = vmatmul.f32.gmra.mxu0 %v2985
    %v2987 = vpop.f32.mrf.mxu0
    %v2988 = vadd.f32 %v2943, %v2987
    %2989 = vdwg.mxu0
    %v2990 = vand.u32 %v1195, 4294901760
    %v2991 = vsub.f32 %v1195, %v2990
    %v2992 = vand.u32 %v2991, 4294901760
    %2993 = vmatpush.msra.mxu0 %v2992
    %v2994 = vand.u32 %v1194, 4294901760
    %v2995 = vsub.f32 %v1194, %v2994
    %v2996 = vand.u32 %v2995, 4294901760
    %2997 = vmatpush.msra.mxu0 %v2996
    %v2998 = vand.u32 %v1193, 4294901760
    %v2999 = vsub.f32 %v1193, %v2998
    %v3000 = vand.u32 %v2999, 4294901760
    %3001 = vmatpush.msra.mxu0 %v3000
    %v3002 = vand.u32 %v1192, 4294901760
    %v3003 = vsub.f32 %v1192, %v3002
    %v3004 = vand.u32 %v3003, 4294901760
    %3005 = vmatpush.msra.mxu0 %v3004
    %v3006 = vand.u32 %v1191, 4294901760
    %v3007 = vsub.f32 %v1191, %v3006
    %v3008 = vand.u32 %v3007, 4294901760
    %3009 = vmatpush.msra.mxu0 %v3008
    %v3010 = vand.u32 %v1190, 4294901760
    %v3011 = vsub.f32 %v1190, %v3010
    %v3012 = vand.u32 %v3011, 4294901760
    %3013 = vmatpush.msra.mxu0 %v3012
    %v3014 = vand.u32 %v1189, 4294901760
    %v3015 = vsub.f32 %v1189, %v3014
    %v3016 = vand.u32 %v3015, 4294901760
    %3017 = vmatpush.msra.mxu0 %v3016
    %v3018 = vand.u32 %v1188, 4294901760
    %v3019 = vsub.f32 %v1188, %v3018
    %v3020 = vand.u32 %v3019, 4294901760
    %3021 = vmatpush.msra.mxu0 %v3020
    %v3022 = vand.u32 %v1187, 4294901760
    %v3023 = vsub.f32 %v1187, %v3022
    %v3024 = vand.u32 %v3023, 4294901760
    %3025 = vmatpush.msra.mxu0 %v3024
    %v3026 = vand.u32 %v1186, 4294901760
    %v3027 = vsub.f32 %v1186, %v3026
    %v3028 = vand.u32 %v3027, 4294901760
    %3029 = vmatpush.msra.mxu0 %v3028
    %v3030 = vand.u32 %v1185, 4294901760
    %v3031 = vsub.f32 %v1185, %v3030
    %v3032 = vand.u32 %v3031, 4294901760
    %3033 = vmatpush.msra.mxu0 %v3032
    %v3034 = vand.u32 %v1184, 4294901760
    %v3035 = vsub.f32 %v1184, %v3034
    %v3036 = vand.u32 %v3035, 4294901760
    %3037 = vmatpush.msra.mxu0 %v3036
    %v3038 = vand.u32 %v1183, 4294901760
    %v3039 = vsub.f32 %v1183, %v3038
    %v3040 = vand.u32 %v3039, 4294901760
    %3041 = vmatpush.msra.mxu0 %v3040
    %v3042 = vand.u32 %v1182, 4294901760
    %v3043 = vsub.f32 %v1182, %v3042
    %v3044 = vand.u32 %v3043, 4294901760
    %3045 = vmatpush.msra.mxu0 %v3044
    %v3046 = vand.u32 %v1181, 4294901760
    %v3047 = vsub.f32 %v1181, %v3046
    %v3048 = vand.u32 %v3047, 4294901760
    %3049 = vmatpush.msra.mxu0 %v3048
    %v3050 = vand.u32 %v1180, 4294901760
    %v3051 = vsub.f32 %v1180, %v3050
    %v3052 = vand.u32 %v3051, 4294901760
    %3053 = vmatpush.msra.mxu0 %v3052
    %v3054 = vand.u32 %v1104, 4294901760
    %3055 = vmatmul.f32.gmra.mxu0 %v3054
    %v3056 = vpop.f32.mrf.mxu0
    %v3057 = vadd.f32 %v2982, %v3056
    %v3058 = vand.u32 %v1112, 4294901760
    %3059 = vmatmul.f32.gmra.mxu0 %v3058
    %v3060 = vpop.f32.mrf.mxu0
    %v3061 = vadd.f32 %v2988, %v3060
    %3062 = vdwg.mxu0
    %v3063 = vand.u32 %v1195, 4294901760
    %3064 = vmatpush.msra.mxu0 %v3063
    %v3065 = vand.u32 %v1194, 4294901760
    %3066 = vmatpush.msra.mxu0 %v3065
    %v3067 = vand.u32 %v1193, 4294901760
    %3068 = vmatpush.msra.mxu0 %v3067
    %v3069 = vand.u32 %v1192, 4294901760
    %3070 = vmatpush.msra.mxu0 %v3069
    %v3071 = vand.u32 %v1191, 4294901760
    %3072 = vmatpush.msra.mxu0 %v3071
    %v3073 = vand.u32 %v1190, 4294901760
    %3074 = vmatpush.msra.mxu0 %v3073
    %v3075 = vand.u32 %v1189, 4294901760
    %3076 = vmatpush.msra.mxu0 %v3075
    %v3077 = vand.u32 %v1188, 4294901760
    %3078 = vmatpush.msra.mxu0 %v3077
    %v3079 = vand.u32 %v1187, 4294901760
    %3080 = vmatpush.msra.mxu0 %v3079
    %v3081 = vand.u32 %v1186, 4294901760
    %3082 = vmatpush.msra.mxu0 %v3081
    %v3083 = vand.u32 %v1185, 4294901760
    %3084 = vmatpush.msra.mxu0 %v3083
    %v3085 = vand.u32 %v1184, 4294901760
    %3086 = vmatpush.msra.mxu0 %v3085
    %v3087 = vand.u32 %v1183, 4294901760
    %3088 = vmatpush.msra.mxu0 %v3087
    %v3089 = vand.u32 %v1182, 4294901760
    %3090 = vmatpush.msra.mxu0 %v3089
    %v3091 = vand.u32 %v1181, 4294901760
    %3092 = vmatpush.msra.mxu0 %v3091
    %v3093 = vand.u32 %v1180, 4294901760
    %3094 = vmatpush.msra.mxu0 %v3093
    %v3095 = vand.u32 %v1104, 4294901760
    %3096 = vmatmul.f32.gmra.mxu0 %v3095
    %v3097 = vpop.f32.mrf.mxu0
    %v3098 = vadd.f32 %v3057, %v3097
    %v3099 = vand.u32 %v1112, 4294901760
    %3100 = vmatmul.f32.gmra.mxu0 %v3099
    %v3101 = vpop.f32.mrf.mxu0
    %v3102 = vadd.f32 %v3061, %v3101
    %3103 = vdwg.mxu0
    %v3104 = vand.u32 %v1211, 4294901760
    %3105 = vmatpush.msra.mxu0 %v3104
    %v3106 = vand.u32 %v1210, 4294901760
    %3107 = vmatpush.msra.mxu0 %v3106
    %v3108 = vand.u32 %v1209, 4294901760
    %3109 = vmatpush.msra.mxu0 %v3108
    %v3110 = vand.u32 %v1208, 4294901760
    %3111 = vmatpush.msra.mxu0 %v3110
    %v3112 = vand.u32 %v1207, 4294901760
    %3113 = vmatpush.msra.mxu0 %v3112
    %v3114 = vand.u32 %v1206, 4294901760
    %3115 = vmatpush.msra.mxu0 %v3114
    %v3116 = vand.u32 %v1205, 4294901760
    %3117 = vmatpush.msra.mxu0 %v3116
    %v3118 = vand.u32 %v1204, 4294901760
    %3119 = vmatpush.msra.mxu0 %v3118
    %v3120 = vand.u32 %v1203, 4294901760
    %3121 = vmatpush.msra.mxu0 %v3120
    %v3122 = vand.u32 %v1202, 4294901760
    %3123 = vmatpush.msra.mxu0 %v3122
    %v3124 = vand.u32 %v1201, 4294901760
    %3125 = vmatpush.msra.mxu0 %v3124
    %v3126 = vand.u32 %v1200, 4294901760
    %3127 = vmatpush.msra.mxu0 %v3126
    %v3128 = vand.u32 %v1199, 4294901760
    %3129 = vmatpush.msra.mxu0 %v3128
    %v3130 = vand.u32 %v1198, 4294901760
    %3131 = vmatpush.msra.mxu0 %v3130
    %v3132 = vand.u32 %v1197, 4294901760
    %3133 = vmatpush.msra.mxu0 %v3132
    %v3134 = vand.u32 %v1196, 4294901760
    %3135 = vmatpush.msra.mxu0 %v3134
    %v3136 = vand.u32 %v1105, 4294901760
    %v3137 = vsub.f32 %v1105, %v3136
    %v3138 = vand.u32 %v3137, 4294901760
    %v3139 = vsub.f32 %v3137, %v3138
    %v3140 = vand.u32 %v3139, 4294901760
    %3141 = vmatmul.f32.gmra.mxu0 %v3140
    %v3142 = vpop.f32.mrf.mxu0
    %v3143 = vadd.f32 %v3098, %v3142
    %v3144 = vand.u32 %v1113, 4294901760
    %v3145 = vsub.f32 %v1113, %v3144
    %v3146 = vand.u32 %v3145, 4294901760
    %v3147 = vsub.f32 %v3145, %v3146
    %v3148 = vand.u32 %v3147, 4294901760
    %3149 = vmatmul.f32.gmra.mxu0 %v3148
    %v3150 = vpop.f32.mrf.mxu0
    %v3151 = vadd.f32 %v3102, %v3150
    %3152 = vdwg.mxu0
    %v3153 = vand.u32 %v1211, 4294901760
    %v3154 = vsub.f32 %v1211, %v3153
    %v3155 = vand.u32 %v3154, 4294901760
    %v3156 = vsub.f32 %v3154, %v3155
    %v3157 = vand.u32 %v3156, 4294901760
    %3158 = vmatpush.msra.mxu0 %v3157
    %v3159 = vand.u32 %v1210, 4294901760
    %v3160 = vsub.f32 %v1210, %v3159
    %v3161 = vand.u32 %v3160, 4294901760
    %v3162 = vsub.f32 %v3160, %v3161
    %v3163 = vand.u32 %v3162, 4294901760
    %3164 = vmatpush.msra.mxu0 %v3163
    %v3165 = vand.u32 %v1209, 4294901760
    %v3166 = vsub.f32 %v1209, %v3165
    %v3167 = vand.u32 %v3166, 4294901760
    %v3168 = vsub.f32 %v3166, %v3167
    %v3169 = vand.u32 %v3168, 4294901760
    %3170 = vmatpush.msra.mxu0 %v3169
    %v3171 = vand.u32 %v1208, 4294901760
    %v3172 = vsub.f32 %v1208, %v3171
    %v3173 = vand.u32 %v3172, 4294901760
    %v3174 = vsub.f32 %v3172, %v3173
    %v3175 = vand.u32 %v3174, 4294901760
    %3176 = vmatpush.msra.mxu0 %v3175
    %v3177 = vand.u32 %v1207, 4294901760
    %v3178 = vsub.f32 %v1207, %v3177
    %v3179 = vand.u32 %v3178, 4294901760
    %v3180 = vsub.f32 %v3178, %v3179
    %v3181 = vand.u32 %v3180, 4294901760
    %3182 = vmatpush.msra.mxu0 %v3181
    %v3183 = vand.u32 %v1206, 4294901760
    %v3184 = vsub.f32 %v1206, %v3183
    %v3185 = vand.u32 %v3184, 4294901760
    %v3186 = vsub.f32 %v3184, %v3185
    %v3187 = vand.u32 %v3186, 4294901760
    %3188 = vmatpush.msra.mxu0 %v3187
    %v3189 = vand.u32 %v1205, 4294901760
    %v3190 = vsub.f32 %v1205, %v3189
    %v3191 = vand.u32 %v3190, 4294901760
    %v3192 = vsub.f32 %v3190, %v3191
    %v3193 = vand.u32 %v3192, 4294901760
    %3194 = vmatpush.msra.mxu0 %v3193
    %v3195 = vand.u32 %v1204, 4294901760
    %v3196 = vsub.f32 %v1204, %v3195
    %v3197 = vand.u32 %v3196, 4294901760
    %v3198 = vsub.f32 %v3196, %v3197
    %v3199 = vand.u32 %v3198, 4294901760
    %3200 = vmatpush.msra.mxu0 %v3199
    %v3201 = vand.u32 %v1203, 4294901760
    %v3202 = vsub.f32 %v1203, %v3201
    %v3203 = vand.u32 %v3202, 4294901760
    %v3204 = vsub.f32 %v3202, %v3203
    %v3205 = vand.u32 %v3204, 4294901760
    %3206 = vmatpush.msra.mxu0 %v3205
    %v3207 = vand.u32 %v1202, 4294901760
    %v3208 = vsub.f32 %v1202, %v3207
    %v3209 = vand.u32 %v3208, 4294901760
    %v3210 = vsub.f32 %v3208, %v3209
    %v3211 = vand.u32 %v3210, 4294901760
    %3212 = vmatpush.msra.mxu0 %v3211
    %v3213 = vand.u32 %v1201, 4294901760
    %v3214 = vsub.f32 %v1201, %v3213
    %v3215 = vand.u32 %v3214, 4294901760
    %v3216 = vsub.f32 %v3214, %v3215
    %v3217 = vand.u32 %v3216, 4294901760
    %3218 = vmatpush.msra.mxu0 %v3217
    %v3219 = vand.u32 %v1200, 4294901760
    %v3220 = vsub.f32 %v1200, %v3219
    %v3221 = vand.u32 %v3220, 4294901760
    %v3222 = vsub.f32 %v3220, %v3221
    %v3223 = vand.u32 %v3222, 4294901760
    %3224 = vmatpush.msra.mxu0 %v3223
    %v3225 = vand.u32 %v1199, 4294901760
    %v3226 = vsub.f32 %v1199, %v3225
    %v3227 = vand.u32 %v3226, 4294901760
    %v3228 = vsub.f32 %v3226, %v3227
    %v3229 = vand.u32 %v3228, 4294901760
    %3230 = vmatpush.msra.mxu0 %v3229
    %v3231 = vand.u32 %v1198, 4294901760
    %v3232 = vsub.f32 %v1198, %v3231
    %v3233 = vand.u32 %v3232, 4294901760
    %v3234 = vsub.f32 %v3232, %v3233
    %v3235 = vand.u32 %v3234, 4294901760
    %3236 = vmatpush.msra.mxu0 %v3235
    %v3237 = vand.u32 %v1197, 4294901760
    %v3238 = vsub.f32 %v1197, %v3237
    %v3239 = vand.u32 %v3238, 4294901760
    %v3240 = vsub.f32 %v3238, %v3239
    %v3241 = vand.u32 %v3240, 4294901760
    %3242 = vmatpush.msra.mxu0 %v3241
    %v3243 = vand.u32 %v1196, 4294901760
    %v3244 = vsub.f32 %v1196, %v3243
    %v3245 = vand.u32 %v3244, 4294901760
    %v3246 = vsub.f32 %v3244, %v3245
    %v3247 = vand.u32 %v3246, 4294901760
    %3248 = vmatpush.msra.mxu0 %v3247
    %v3249 = vand.u32 %v1105, 4294901760
    %3250 = vmatmul.f32.gmra.mxu0 %v3249
    %v3251 = vpop.f32.mrf.mxu0
    %v3252 = vadd.f32 %v3143, %v3251
    %v3253 = vand.u32 %v1113, 4294901760
    %3254 = vmatmul.f32.gmra.mxu0 %v3253
    %v3255 = vpop.f32.mrf.mxu0
    %v3256 = vadd.f32 %v3151, %v3255
    %3257 = vdwg.mxu0
    %v3258 = vand.u32 %v1211, 4294901760
    %v3259 = vsub.f32 %v1211, %v3258
    %3260 = vmatpush.msra.mxu0 %v3259
    %v3261 = vand.u32 %v1210, 4294901760
    %v3262 = vsub.f32 %v1210, %v3261
    %3263 = vmatpush.msra.mxu0 %v3262
    %v3264 = vand.u32 %v1209, 4294901760
    %v3265 = vsub.f32 %v1209, %v3264
    %3266 = vmatpush.msra.mxu0 %v3265
    %v3267 = vand.u32 %v1208, 4294901760
    %v3268 = vsub.f32 %v1208, %v3267
    %3269 = vmatpush.msra.mxu0 %v3268
    %v3270 = vand.u32 %v1207, 4294901760
    %v3271 = vsub.f32 %v1207, %v3270
    %3272 = vmatpush.msra.mxu0 %v3271
    %v3273 = vand.u32 %v1206, 4294901760
    %v3274 = vsub.f32 %v1206, %v3273
    %3275 = vmatpush.msra.mxu0 %v3274
    %v3276 = vand.u32 %v1205, 4294901760
    %v3277 = vsub.f32 %v1205, %v3276
    %3278 = vmatpush.msra.mxu0 %v3277
    %v3279 = vand.u32 %v1204, 4294901760
    %v3280 = vsub.f32 %v1204, %v3279
    %3281 = vmatpush.msra.mxu0 %v3280
    %v3282 = vand.u32 %v1203, 4294901760
    %v3283 = vsub.f32 %v1203, %v3282
    %3284 = vmatpush.msra.mxu0 %v3283
    %v3285 = vand.u32 %v1202, 4294901760
    %v3286 = vsub.f32 %v1202, %v3285
    %3287 = vmatpush.msra.mxu0 %v3286
    %v3288 = vand.u32 %v1201, 4294901760
    %v3289 = vsub.f32 %v1201, %v3288
    %3290 = vmatpush.msra.mxu0 %v3289
    %v3291 = vand.u32 %v1200, 4294901760
    %v3292 = vsub.f32 %v1200, %v3291
    %3293 = vmatpush.msra.mxu0 %v3292
    %v3294 = vand.u32 %v1199, 4294901760
    %v3295 = vsub.f32 %v1199, %v3294
    %3296 = vmatpush.msra.mxu0 %v3295
    %v3297 = vand.u32 %v1198, 4294901760
    %v3298 = vsub.f32 %v1198, %v3297
    %3299 = vmatpush.msra.mxu0 %v3298
    %v3300 = vand.u32 %v1197, 4294901760
    %v3301 = vsub.f32 %v1197, %v3300
    %3302 = vmatpush.msra.mxu0 %v3301
    %v3303 = vand.u32 %v1196, 4294901760
    %v3304 = vsub.f32 %v1196, %v3303
    %3305 = vmatpush.msra.mxu0 %v3304
    %v3306 = vand.u32 %v1105, 4294901760
    %v3307 = vsub.f32 %v1105, %v3306
    %3308 = vmatmul.f32.gmra.mxu0 %v3307
    %v3309 = vpop.f32.mrf.mxu0
    %v3310 = vadd.f32 %v3252, %v3309
    %v3311 = vand.u32 %v1113, 4294901760
    %v3312 = vsub.f32 %v1113, %v3311
    %3313 = vmatmul.f32.gmra.mxu0 %v3312
    %v3314 = vpop.f32.mrf.mxu0
    %v3315 = vadd.f32 %v3256, %v3314
    %3316 = vdwg.mxu0
    %v3317 = vand.u32 %v1211, 4294901760
    %3318 = vmatpush.msra.mxu0 %v3317
    %v3319 = vand.u32 %v1210, 4294901760
    %3320 = vmatpush.msra.mxu0 %v3319
    %v3321 = vand.u32 %v1209, 4294901760
    %3322 = vmatpush.msra.mxu0 %v3321
    %v3323 = vand.u32 %v1208, 4294901760
    %3324 = vmatpush.msra.mxu0 %v3323
    %v3325 = vand.u32 %v1207, 4294901760
    %3326 = vmatpush.msra.mxu0 %v3325
    %v3327 = vand.u32 %v1206, 4294901760
    %3328 = vmatpush.msra.mxu0 %v3327
    %v3329 = vand.u32 %v1205, 4294901760
    %3330 = vmatpush.msra.mxu0 %v3329
    %v3331 = vand.u32 %v1204, 4294901760
    %3332 = vmatpush.msra.mxu0 %v3331
    %v3333 = vand.u32 %v1203, 4294901760
    %3334 = vmatpush.msra.mxu0 %v3333
    %v3335 = vand.u32 %v1202, 4294901760
    %3336 = vmatpush.msra.mxu0 %v3335
    %v3337 = vand.u32 %v1201, 4294901760
    %3338 = vmatpush.msra.mxu0 %v3337
    %v3339 = vand.u32 %v1200, 4294901760
    %3340 = vmatpush.msra.mxu0 %v3339
    %v3341 = vand.u32 %v1199, 4294901760
    %3342 = vmatpush.msra.mxu0 %v3341
    %v3343 = vand.u32 %v1198, 4294901760
    %3344 = vmatpush.msra.mxu0 %v3343
    %v3345 = vand.u32 %v1197, 4294901760
    %3346 = vmatpush.msra.mxu0 %v3345
    %v3347 = vand.u32 %v1196, 4294901760
    %3348 = vmatpush.msra.mxu0 %v3347
    %v3349 = vand.u32 %v1105, 4294901760
    %v3350 = vsub.f32 %v1105, %v3349
    %v3351 = vand.u32 %v3350, 4294901760
    %3352 = vmatmul.f32.gmra.mxu0 %v3351
    %v3353 = vpop.f32.mrf.mxu0
    %v3354 = vadd.f32 %v3310, %v3353
    %v3355 = vand.u32 %v1113, 4294901760
    %v3356 = vsub.f32 %v1113, %v3355
    %v3357 = vand.u32 %v3356, 4294901760
    %3358 = vmatmul.f32.gmra.mxu0 %v3357
    %v3359 = vpop.f32.mrf.mxu0
    %v3360 = vadd.f32 %v3315, %v3359
    %3361 = vdwg.mxu0
    %v3362 = vand.u32 %v1211, 4294901760
    %v3363 = vsub.f32 %v1211, %v3362
    %v3364 = vand.u32 %v3363, 4294901760
    %3365 = vmatpush.msra.mxu0 %v3364
    %v3366 = vand.u32 %v1210, 4294901760
    %v3367 = vsub.f32 %v1210, %v3366
    %v3368 = vand.u32 %v3367, 4294901760
    %3369 = vmatpush.msra.mxu0 %v3368
    %v3370 = vand.u32 %v1209, 4294901760
    %v3371 = vsub.f32 %v1209, %v3370
    %v3372 = vand.u32 %v3371, 4294901760
    %3373 = vmatpush.msra.mxu0 %v3372
    %v3374 = vand.u32 %v1208, 4294901760
    %v3375 = vsub.f32 %v1208, %v3374
    %v3376 = vand.u32 %v3375, 4294901760
    %3377 = vmatpush.msra.mxu0 %v3376
    %v3378 = vand.u32 %v1207, 4294901760
    %v3379 = vsub.f32 %v1207, %v3378
    %v3380 = vand.u32 %v3379, 4294901760
    %3381 = vmatpush.msra.mxu0 %v3380
    %v3382 = vand.u32 %v1206, 4294901760
    %v3383 = vsub.f32 %v1206, %v3382
    %v3384 = vand.u32 %v3383, 4294901760
    %3385 = vmatpush.msra.mxu0 %v3384
    %v3386 = vand.u32 %v1205, 4294901760
    %v3387 = vsub.f32 %v1205, %v3386
    %v3388 = vand.u32 %v3387, 4294901760
    %3389 = vmatpush.msra.mxu0 %v3388
    %v3390 = vand.u32 %v1204, 4294901760
    %v3391 = vsub.f32 %v1204, %v3390
    %v3392 = vand.u32 %v3391, 4294901760
    %3393 = vmatpush.msra.mxu0 %v3392
    %v3394 = vand.u32 %v1203, 4294901760
    %v3395 = vsub.f32 %v1203, %v3394
    %v3396 = vand.u32 %v3395, 4294901760
    %3397 = vmatpush.msra.mxu0 %v3396
    %v3398 = vand.u32 %v1202, 4294901760
    %v3399 = vsub.f32 %v1202, %v3398
    %v3400 = vand.u32 %v3399, 4294901760
    %3401 = vmatpush.msra.mxu0 %v3400
    %v3402 = vand.u32 %v1201, 4294901760
    %v3403 = vsub.f32 %v1201, %v3402
    %v3404 = vand.u32 %v3403, 4294901760
    %3405 = vmatpush.msra.mxu0 %v3404
    %v3406 = vand.u32 %v1200, 4294901760
    %v3407 = vsub.f32 %v1200, %v3406
    %v3408 = vand.u32 %v3407, 4294901760
    %3409 = vmatpush.msra.mxu0 %v3408
    %v3410 = vand.u32 %v1199, 4294901760
    %v3411 = vsub.f32 %v1199, %v3410
    %v3412 = vand.u32 %v3411, 4294901760
    %3413 = vmatpush.msra.mxu0 %v3412
    %v3414 = vand.u32 %v1198, 4294901760
    %v3415 = vsub.f32 %v1198, %v3414
    %v3416 = vand.u32 %v3415, 4294901760
    %3417 = vmatpush.msra.mxu0 %v3416
    %v3418 = vand.u32 %v1197, 4294901760
    %v3419 = vsub.f32 %v1197, %v3418
    %v3420 = vand.u32 %v3419, 4294901760
    %3421 = vmatpush.msra.mxu0 %v3420
    %v3422 = vand.u32 %v1196, 4294901760
    %v3423 = vsub.f32 %v1196, %v3422
    %v3424 = vand.u32 %v3423, 4294901760
    %3425 = vmatpush.msra.mxu0 %v3424
    %v3426 = vand.u32 %v1105, 4294901760
    %3427 = vmatmul.f32.gmra.mxu0 %v3426
    %v3428 = vpop.f32.mrf.mxu0
    %v3429 = vadd.f32 %v3354, %v3428
    %v3430 = vand.u32 %v1113, 4294901760
    %3431 = vmatmul.f32.gmra.mxu0 %v3430
    %v3432 = vpop.f32.mrf.mxu0
    %v3433 = vadd.f32 %v3360, %v3432
    %3434 = vdwg.mxu0
    %v3435 = vand.u32 %v1211, 4294901760
    %3436 = vmatpush.msra.mxu0 %v3435
    %v3437 = vand.u32 %v1210, 4294901760
    %3438 = vmatpush.msra.mxu0 %v3437
    %v3439 = vand.u32 %v1209, 4294901760
    %3440 = vmatpush.msra.mxu0 %v3439
    %v3441 = vand.u32 %v1208, 4294901760
    %3442 = vmatpush.msra.mxu0 %v3441
    %v3443 = vand.u32 %v1207, 4294901760
    %3444 = vmatpush.msra.mxu0 %v3443
    %v3445 = vand.u32 %v1206, 4294901760
    %3446 = vmatpush.msra.mxu0 %v3445
    %v3447 = vand.u32 %v1205, 4294901760
    %3448 = vmatpush.msra.mxu0 %v3447
    %v3449 = vand.u32 %v1204, 4294901760
    %3450 = vmatpush.msra.mxu0 %v3449
    %v3451 = vand.u32 %v1203, 4294901760
    %3452 = vmatpush.msra.mxu0 %v3451
    %v3453 = vand.u32 %v1202, 4294901760
    %3454 = vmatpush.msra.mxu0 %v3453
    %v3455 = vand.u32 %v1201, 4294901760
    %3456 = vmatpush.msra.mxu0 %v3455
    %v3457 = vand.u32 %v1200, 4294901760
    %3458 = vmatpush.msra.mxu0 %v3457
    %v3459 = vand.u32 %v1199, 4294901760
    %3460 = vmatpush.msra.mxu0 %v3459
    %v3461 = vand.u32 %v1198, 4294901760
    %3462 = vmatpush.msra.mxu0 %v3461
    %v3463 = vand.u32 %v1197, 4294901760
    %3464 = vmatpush.msra.mxu0 %v3463
    %v3465 = vand.u32 %v1196, 4294901760
    %3466 = vmatpush.msra.mxu0 %v3465
    %v3467 = vand.u32 %v1105, 4294901760
    %3468 = vmatmul.f32.gmra.mxu0 %v3467
    %v3469 = vpop.f32.mrf.mxu0
    %v3470 = vadd.f32 %v3429, %v3469
    %v3471 = vand.u32 %v1113, 4294901760
    %3472 = vmatmul.f32.gmra.mxu0 %v3471
    %v3473 = vpop.f32.mrf.mxu0
    %v3474 = vadd.f32 %v3433, %v3473
    %3475 = vdwg.mxu0
    %v3476 = vand.u32 %v1227, 4294901760
    %3477 = vmatpush.msra.mxu0 %v3476
    %v3478 = vand.u32 %v1226, 4294901760
    %3479 = vmatpush.msra.mxu0 %v3478
    %v3480 = vand.u32 %v1225, 4294901760
    %3481 = vmatpush.msra.mxu0 %v3480
    %v3482 = vand.u32 %v1224, 4294901760
    %3483 = vmatpush.msra.mxu0 %v3482
    %v3484 = vand.u32 %v1223, 4294901760
    %3485 = vmatpush.msra.mxu0 %v3484
    %v3486 = vand.u32 %v1222, 4294901760
    %3487 = vmatpush.msra.mxu0 %v3486
    %v3488 = vand.u32 %v1221, 4294901760
    %3489 = vmatpush.msra.mxu0 %v3488
    %v3490 = vand.u32 %v1220, 4294901760
    %3491 = vmatpush.msra.mxu0 %v3490
    %v3492 = vand.u32 %v1219, 4294901760
    %3493 = vmatpush.msra.mxu0 %v3492
    %v3494 = vand.u32 %v1218, 4294901760
    %3495 = vmatpush.msra.mxu0 %v3494
    %v3496 = vand.u32 %v1217, 4294901760
    %3497 = vmatpush.msra.mxu0 %v3496
    %v3498 = vand.u32 %v1216, 4294901760
    %3499 = vmatpush.msra.mxu0 %v3498
    %v3500 = vand.u32 %v1215, 4294901760
    %3501 = vmatpush.msra.mxu0 %v3500
    %v3502 = vand.u32 %v1214, 4294901760
    %3503 = vmatpush.msra.mxu0 %v3502
    %v3504 = vand.u32 %v1213, 4294901760
    %3505 = vmatpush.msra.mxu0 %v3504
    %v3506 = vand.u32 %v1212, 4294901760
    %3507 = vmatpush.msra.mxu0 %v3506
    %v3508 = vand.u32 %v1106, 4294901760
    %v3509 = vsub.f32 %v1106, %v3508
    %v3510 = vand.u32 %v3509, 4294901760
    %v3511 = vsub.f32 %v3509, %v3510
    %v3512 = vand.u32 %v3511, 4294901760
    %3513 = vmatmul.f32.gmra.mxu0 %v3512
    %v3514 = vpop.f32.mrf.mxu0
    %v3515 = vadd.f32 %v3470, %v3514
    %v3516 = vand.u32 %v1114, 4294901760
    %v3517 = vsub.f32 %v1114, %v3516
    %v3518 = vand.u32 %v3517, 4294901760
    %v3519 = vsub.f32 %v3517, %v3518
    %v3520 = vand.u32 %v3519, 4294901760
    %3521 = vmatmul.f32.gmra.mxu0 %v3520
    %v3522 = vpop.f32.mrf.mxu0
    %v3523 = vadd.f32 %v3474, %v3522
    %3524 = vdwg.mxu0
    %v3525 = vand.u32 %v1227, 4294901760
    %v3526 = vsub.f32 %v1227, %v3525
    %v3527 = vand.u32 %v3526, 4294901760
    %v3528 = vsub.f32 %v3526, %v3527
    %v3529 = vand.u32 %v3528, 4294901760
    %3530 = vmatpush.msra.mxu0 %v3529
    %v3531 = vand.u32 %v1226, 4294901760
    %v3532 = vsub.f32 %v1226, %v3531
    %v3533 = vand.u32 %v3532, 4294901760
    %v3534 = vsub.f32 %v3532, %v3533
    %v3535 = vand.u32 %v3534, 4294901760
    %3536 = vmatpush.msra.mxu0 %v3535
    %v3537 = vand.u32 %v1225, 4294901760
    %v3538 = vsub.f32 %v1225, %v3537
    %v3539 = vand.u32 %v3538, 4294901760
    %v3540 = vsub.f32 %v3538, %v3539
    %v3541 = vand.u32 %v3540, 4294901760
    %3542 = vmatpush.msra.mxu0 %v3541
    %v3543 = vand.u32 %v1224, 4294901760
    %v3544 = vsub.f32 %v1224, %v3543
    %v3545 = vand.u32 %v3544, 4294901760
    %v3546 = vsub.f32 %v3544, %v3545
    %v3547 = vand.u32 %v3546, 4294901760
    %3548 = vmatpush.msra.mxu0 %v3547
    %v3549 = vand.u32 %v1223, 4294901760
    %v3550 = vsub.f32 %v1223, %v3549
    %v3551 = vand.u32 %v3550, 4294901760
    %v3552 = vsub.f32 %v3550, %v3551
    %v3553 = vand.u32 %v3552, 4294901760
    %3554 = vmatpush.msra.mxu0 %v3553
    %v3555 = vand.u32 %v1222, 4294901760
    %v3556 = vsub.f32 %v1222, %v3555
    %v3557 = vand.u32 %v3556, 4294901760
    %v3558 = vsub.f32 %v3556, %v3557
    %v3559 = vand.u32 %v3558, 4294901760
    %3560 = vmatpush.msra.mxu0 %v3559
    %v3561 = vand.u32 %v1221, 4294901760
    %v3562 = vsub.f32 %v1221, %v3561
    %v3563 = vand.u32 %v3562, 4294901760
    %v3564 = vsub.f32 %v3562, %v3563
    %v3565 = vand.u32 %v3564, 4294901760
    %3566 = vmatpush.msra.mxu0 %v3565
    %v3567 = vand.u32 %v1220, 4294901760
    %v3568 = vsub.f32 %v1220, %v3567
    %v3569 = vand.u32 %v3568, 4294901760
    %v3570 = vsub.f32 %v3568, %v3569
    %v3571 = vand.u32 %v3570, 4294901760
    %3572 = vmatpush.msra.mxu0 %v3571
    %v3573 = vand.u32 %v1219, 4294901760
    %v3574 = vsub.f32 %v1219, %v3573
    %v3575 = vand.u32 %v3574, 4294901760
    %v3576 = vsub.f32 %v3574, %v3575
    %v3577 = vand.u32 %v3576, 4294901760
    %3578 = vmatpush.msra.mxu0 %v3577
    %v3579 = vand.u32 %v1218, 4294901760
    %v3580 = vsub.f32 %v1218, %v3579
    %v3581 = vand.u32 %v3580, 4294901760
    %v3582 = vsub.f32 %v3580, %v3581
    %v3583 = vand.u32 %v3582, 4294901760
    %3584 = vmatpush.msra.mxu0 %v3583
    %v3585 = vand.u32 %v1217, 4294901760
    %v3586 = vsub.f32 %v1217, %v3585
    %v3587 = vand.u32 %v3586, 4294901760
    %v3588 = vsub.f32 %v3586, %v3587
    %v3589 = vand.u32 %v3588, 4294901760
    %3590 = vmatpush.msra.mxu0 %v3589
    %v3591 = vand.u32 %v1216, 4294901760
    %v3592 = vsub.f32 %v1216, %v3591
    %v3593 = vand.u32 %v3592, 4294901760
    %v3594 = vsub.f32 %v3592, %v3593
    %v3595 = vand.u32 %v3594, 4294901760
    %3596 = vmatpush.msra.mxu0 %v3595
    %v3597 = vand.u32 %v1215, 4294901760
    %v3598 = vsub.f32 %v1215, %v3597
    %v3599 = vand.u32 %v3598, 4294901760
    %v3600 = vsub.f32 %v3598, %v3599
    %v3601 = vand.u32 %v3600, 4294901760
    %3602 = vmatpush.msra.mxu0 %v3601
    %v3603 = vand.u32 %v1214, 4294901760
    %v3604 = vsub.f32 %v1214, %v3603
    %v3605 = vand.u32 %v3604, 4294901760
    %v3606 = vsub.f32 %v3604, %v3605
    %v3607 = vand.u32 %v3606, 4294901760
    %3608 = vmatpush.msra.mxu0 %v3607
    %v3609 = vand.u32 %v1213, 4294901760
    %v3610 = vsub.f32 %v1213, %v3609
    %v3611 = vand.u32 %v3610, 4294901760
    %v3612 = vsub.f32 %v3610, %v3611
    %v3613 = vand.u32 %v3612, 4294901760
    %3614 = vmatpush.msra.mxu0 %v3613
    %v3615 = vand.u32 %v1212, 4294901760
    %v3616 = vsub.f32 %v1212, %v3615
    %v3617 = vand.u32 %v3616, 4294901760
    %v3618 = vsub.f32 %v3616, %v3617
    %v3619 = vand.u32 %v3618, 4294901760
    %3620 = vmatpush.msra.mxu0 %v3619
    %v3621 = vand.u32 %v1106, 4294901760
    %3622 = vmatmul.f32.gmra.mxu0 %v3621
    %v3623 = vpop.f32.mrf.mxu0
    %v3624 = vadd.f32 %v3515, %v3623
    %v3625 = vand.u32 %v1114, 4294901760
    %3626 = vmatmul.f32.gmra.mxu0 %v3625
    %v3627 = vpop.f32.mrf.mxu0
    %v3628 = vadd.f32 %v3523, %v3627
    %3629 = vdwg.mxu0
    %v3630 = vand.u32 %v1227, 4294901760
    %v3631 = vsub.f32 %v1227, %v3630
    %3632 = vmatpush.msra.mxu0 %v3631
    %v3633 = vand.u32 %v1226, 4294901760
    %v3634 = vsub.f32 %v1226, %v3633
    %3635 = vmatpush.msra.mxu0 %v3634
    %v3636 = vand.u32 %v1225, 4294901760
    %v3637 = vsub.f32 %v1225, %v3636
    %3638 = vmatpush.msra.mxu0 %v3637
    %v3639 = vand.u32 %v1224, 4294901760
    %v3640 = vsub.f32 %v1224, %v3639
    %3641 = vmatpush.msra.mxu0 %v3640
    %v3642 = vand.u32 %v1223, 4294901760
    %v3643 = vsub.f32 %v1223, %v3642
    %3644 = vmatpush.msra.mxu0 %v3643
    %v3645 = vand.u32 %v1222, 4294901760
    %v3646 = vsub.f32 %v1222, %v3645
    %3647 = vmatpush.msra.mxu0 %v3646
    %v3648 = vand.u32 %v1221, 4294901760
    %v3649 = vsub.f32 %v1221, %v3648
    %3650 = vmatpush.msra.mxu0 %v3649
    %v3651 = vand.u32 %v1220, 4294901760
    %v3652 = vsub.f32 %v1220, %v3651
    %3653 = vmatpush.msra.mxu0 %v3652
    %v3654 = vand.u32 %v1219, 4294901760
    %v3655 = vsub.f32 %v1219, %v3654
    %3656 = vmatpush.msra.mxu0 %v3655
    %v3657 = vand.u32 %v1218, 4294901760
    %v3658 = vsub.f32 %v1218, %v3657
    %3659 = vmatpush.msra.mxu0 %v3658
    %v3660 = vand.u32 %v1217, 4294901760
    %v3661 = vsub.f32 %v1217, %v3660
    %3662 = vmatpush.msra.mxu0 %v3661
    %v3663 = vand.u32 %v1216, 4294901760
    %v3664 = vsub.f32 %v1216, %v3663
    %3665 = vmatpush.msra.mxu0 %v3664
    %v3666 = vand.u32 %v1215, 4294901760
    %v3667 = vsub.f32 %v1215, %v3666
    %3668 = vmatpush.msra.mxu0 %v3667
    %v3669 = vand.u32 %v1214, 4294901760
    %v3670 = vsub.f32 %v1214, %v3669
    %3671 = vmatpush.msra.mxu0 %v3670
    %v3672 = vand.u32 %v1213, 4294901760
    %v3673 = vsub.f32 %v1213, %v3672
    %3674 = vmatpush.msra.mxu0 %v3673
    %v3675 = vand.u32 %v1212, 4294901760
    %v3676 = vsub.f32 %v1212, %v3675
    %3677 = vmatpush.msra.mxu0 %v3676
    %v3678 = vand.u32 %v1106, 4294901760
    %v3679 = vsub.f32 %v1106, %v3678
    %3680 = vmatmul.f32.gmra.mxu0 %v3679
    %v3681 = vpop.f32.mrf.mxu0
    %v3682 = vadd.f32 %v3624, %v3681
    %v3683 = vand.u32 %v1114, 4294901760
    %v3684 = vsub.f32 %v1114, %v3683
    %3685 = vmatmul.f32.gmra.mxu0 %v3684
    %v3686 = vpop.f32.mrf.mxu0
    %v3687 = vadd.f32 %v3628, %v3686
    %3688 = vdwg.mxu0
    %v3689 = vand.u32 %v1227, 4294901760
    %3690 = vmatpush.msra.mxu0 %v3689
    %v3691 = vand.u32 %v1226, 4294901760
    %3692 = vmatpush.msra.mxu0 %v3691
    %v3693 = vand.u32 %v1225, 4294901760
    %3694 = vmatpush.msra.mxu0 %v3693
    %v3695 = vand.u32 %v1224, 4294901760
    %3696 = vmatpush.msra.mxu0 %v3695
    %v3697 = vand.u32 %v1223, 4294901760
    %3698 = vmatpush.msra.mxu0 %v3697
    %v3699 = vand.u32 %v1222, 4294901760
    %3700 = vmatpush.msra.mxu0 %v3699
    %v3701 = vand.u32 %v1221, 4294901760
    %3702 = vmatpush.msra.mxu0 %v3701
    %v3703 = vand.u32 %v1220, 4294901760
    %3704 = vmatpush.msra.mxu0 %v3703
    %v3705 = vand.u32 %v1219, 4294901760
    %3706 = vmatpush.msra.mxu0 %v3705
    %v3707 = vand.u32 %v1218, 4294901760
    %3708 = vmatpush.msra.mxu0 %v3707
    %v3709 = vand.u32 %v1217, 4294901760
    %3710 = vmatpush.msra.mxu0 %v3709
    %v3711 = vand.u32 %v1216, 4294901760
    %3712 = vmatpush.msra.mxu0 %v3711
    %v3713 = vand.u32 %v1215, 4294901760
    %3714 = vmatpush.msra.mxu0 %v3713
    %v3715 = vand.u32 %v1214, 4294901760
    %3716 = vmatpush.msra.mxu0 %v3715
    %v3717 = vand.u32 %v1213, 4294901760
    %3718 = vmatpush.msra.mxu0 %v3717
    %v3719 = vand.u32 %v1212, 4294901760
    %3720 = vmatpush.msra.mxu0 %v3719
    %v3721 = vand.u32 %v1106, 4294901760
    %v3722 = vsub.f32 %v1106, %v3721
    %v3723 = vand.u32 %v3722, 4294901760
    %3724 = vmatmul.f32.gmra.mxu0 %v3723
    %v3725 = vpop.f32.mrf.mxu0
    %v3726 = vadd.f32 %v3682, %v3725
    %v3727 = vand.u32 %v1114, 4294901760
    %v3728 = vsub.f32 %v1114, %v3727
    %v3729 = vand.u32 %v3728, 4294901760
    %3730 = vmatmul.f32.gmra.mxu0 %v3729
    %v3731 = vpop.f32.mrf.mxu0
    %v3732 = vadd.f32 %v3687, %v3731
    %3733 = vdwg.mxu0
    %v3734 = vand.u32 %v1227, 4294901760
    %v3735 = vsub.f32 %v1227, %v3734
    %v3736 = vand.u32 %v3735, 4294901760
    %3737 = vmatpush.msra.mxu0 %v3736
    %v3738 = vand.u32 %v1226, 4294901760
    %v3739 = vsub.f32 %v1226, %v3738
    %v3740 = vand.u32 %v3739, 4294901760
    %3741 = vmatpush.msra.mxu0 %v3740
    %v3742 = vand.u32 %v1225, 4294901760
    %v3743 = vsub.f32 %v1225, %v3742
    %v3744 = vand.u32 %v3743, 4294901760
    %3745 = vmatpush.msra.mxu0 %v3744
    %v3746 = vand.u32 %v1224, 4294901760
    %v3747 = vsub.f32 %v1224, %v3746
    %v3748 = vand.u32 %v3747, 4294901760
    %3749 = vmatpush.msra.mxu0 %v3748
    %v3750 = vand.u32 %v1223, 4294901760
    %v3751 = vsub.f32 %v1223, %v3750
    %v3752 = vand.u32 %v3751, 4294901760
    %3753 = vmatpush.msra.mxu0 %v3752
    %v3754 = vand.u32 %v1222, 4294901760
    %v3755 = vsub.f32 %v1222, %v3754
    %v3756 = vand.u32 %v3755, 4294901760
    %3757 = vmatpush.msra.mxu0 %v3756
    %v3758 = vand.u32 %v1221, 4294901760
    %v3759 = vsub.f32 %v1221, %v3758
    %v3760 = vand.u32 %v3759, 4294901760
    %3761 = vmatpush.msra.mxu0 %v3760
    %v3762 = vand.u32 %v1220, 4294901760
    %v3763 = vsub.f32 %v1220, %v3762
    %v3764 = vand.u32 %v3763, 4294901760
    %3765 = vmatpush.msra.mxu0 %v3764
    %v3766 = vand.u32 %v1219, 4294901760
    %v3767 = vsub.f32 %v1219, %v3766
    %v3768 = vand.u32 %v3767, 4294901760
    %3769 = vmatpush.msra.mxu0 %v3768
    %v3770 = vand.u32 %v1218, 4294901760
    %v3771 = vsub.f32 %v1218, %v3770
    %v3772 = vand.u32 %v3771, 4294901760
    %3773 = vmatpush.msra.mxu0 %v3772
    %v3774 = vand.u32 %v1217, 4294901760
    %v3775 = vsub.f32 %v1217, %v3774
    %v3776 = vand.u32 %v3775, 4294901760
    %3777 = vmatpush.msra.mxu0 %v3776
    %v3778 = vand.u32 %v1216, 4294901760
    %v3779 = vsub.f32 %v1216, %v3778
    %v3780 = vand.u32 %v3779, 4294901760
    %3781 = vmatpush.msra.mxu0 %v3780
    %v3782 = vand.u32 %v1215, 4294901760
    %v3783 = vsub.f32 %v1215, %v3782
    %v3784 = vand.u32 %v3783, 4294901760
    %3785 = vmatpush.msra.mxu0 %v3784
    %v3786 = vand.u32 %v1214, 4294901760
    %v3787 = vsub.f32 %v1214, %v3786
    %v3788 = vand.u32 %v3787, 4294901760
    %3789 = vmatpush.msra.mxu0 %v3788
    %v3790 = vand.u32 %v1213, 4294901760
    %v3791 = vsub.f32 %v1213, %v3790
    %v3792 = vand.u32 %v3791, 4294901760
    %3793 = vmatpush.msra.mxu0 %v3792
    %v3794 = vand.u32 %v1212, 4294901760
    %v3795 = vsub.f32 %v1212, %v3794
    %v3796 = vand.u32 %v3795, 4294901760
    %3797 = vmatpush.msra.mxu0 %v3796
    %v3798 = vand.u32 %v1106, 4294901760
    %3799 = vmatmul.f32.gmra.mxu0 %v3798
    %v3800 = vpop.f32.mrf.mxu0
    %v3801 = vadd.f32 %v3726, %v3800
    %v3802 = vand.u32 %v1114, 4294901760
    %3803 = vmatmul.f32.gmra.mxu0 %v3802
    %v3804 = vpop.f32.mrf.mxu0
    %v3805 = vadd.f32 %v3732, %v3804
    %3806 = vdwg.mxu0
    %v3807 = vand.u32 %v1227, 4294901760
    %3808 = vmatpush.msra.mxu0 %v3807
    %v3809 = vand.u32 %v1226, 4294901760
    %3810 = vmatpush.msra.mxu0 %v3809
    %v3811 = vand.u32 %v1225, 4294901760
    %3812 = vmatpush.msra.mxu0 %v3811
    %v3813 = vand.u32 %v1224, 4294901760
    %3814 = vmatpush.msra.mxu0 %v3813
    %v3815 = vand.u32 %v1223, 4294901760
    %3816 = vmatpush.msra.mxu0 %v3815
    %v3817 = vand.u32 %v1222, 4294901760
    %3818 = vmatpush.msra.mxu0 %v3817
    %v3819 = vand.u32 %v1221, 4294901760
    %3820 = vmatpush.msra.mxu0 %v3819
    %v3821 = vand.u32 %v1220, 4294901760
    %3822 = vmatpush.msra.mxu0 %v3821
    %v3823 = vand.u32 %v1219, 4294901760
    %3824 = vmatpush.msra.mxu0 %v3823
    %v3825 = vand.u32 %v1218, 4294901760
    %3826 = vmatpush.msra.mxu0 %v3825
    %v3827 = vand.u32 %v1217, 4294901760
    %3828 = vmatpush.msra.mxu0 %v3827
    %v3829 = vand.u32 %v1216, 4294901760
    %3830 = vmatpush.msra.mxu0 %v3829
    %v3831 = vand.u32 %v1215, 4294901760
    %3832 = vmatpush.msra.mxu0 %v3831
    %v3833 = vand.u32 %v1214, 4294901760
    %3834 = vmatpush.msra.mxu0 %v3833
    %v3835 = vand.u32 %v1213, 4294901760
    %3836 = vmatpush.msra.mxu0 %v3835
    %v3837 = vand.u32 %v1212, 4294901760
    %3838 = vmatpush.msra.mxu0 %v3837
    %v3839 = vand.u32 %v1106, 4294901760
    %3840 = vmatmul.f32.gmra.mxu0 %v3839
    %v3841 = vpop.f32.mrf.mxu0
    %v3842 = vadd.f32 %v3801, %v3841
    %v3843 = vand.u32 %v1114, 4294901760
    %3844 = vmatmul.f32.gmra.mxu0 %v3843
    %v3845 = vpop.f32.mrf.mxu0
    %v3846 = vadd.f32 %v3805, %v3845
    %3847 = vdwg.mxu0
    %v3848 = vand.u32 %v1243, 4294901760
    %3849 = vmatpush.msra.mxu0 %v3848
    %v3850 = vand.u32 %v1242, 4294901760
    %3851 = vmatpush.msra.mxu0 %v3850
    %v3852 = vand.u32 %v1241, 4294901760
    %3853 = vmatpush.msra.mxu0 %v3852
    %v3854 = vand.u32 %v1240, 4294901760
    %3855 = vmatpush.msra.mxu0 %v3854
    %v3856 = vand.u32 %v1239, 4294901760
    %3857 = vmatpush.msra.mxu0 %v3856
    %v3858 = vand.u32 %v1238, 4294901760
    %3859 = vmatpush.msra.mxu0 %v3858
    %v3860 = vand.u32 %v1237, 4294901760
    %3861 = vmatpush.msra.mxu0 %v3860
    %v3862 = vand.u32 %v1236, 4294901760
    %3863 = vmatpush.msra.mxu0 %v3862
    %v3864 = vand.u32 %v1235, 4294901760
    %3865 = vmatpush.msra.mxu0 %v3864
    %v3866 = vand.u32 %v1234, 4294901760
    %3867 = vmatpush.msra.mxu0 %v3866
    %v3868 = vand.u32 %v1233, 4294901760
    %3869 = vmatpush.msra.mxu0 %v3868
    %v3870 = vand.u32 %v1232, 4294901760
    %3871 = vmatpush.msra.mxu0 %v3870
    %v3872 = vand.u32 %v1231, 4294901760
    %3873 = vmatpush.msra.mxu0 %v3872
    %v3874 = vand.u32 %v1230, 4294901760
    %3875 = vmatpush.msra.mxu0 %v3874
    %v3876 = vand.u32 %v1229, 4294901760
    %3877 = vmatpush.msra.mxu0 %v3876
    %v3878 = vand.u32 %v1228, 4294901760
    %3879 = vmatpush.msra.mxu0 %v3878
    %v3880 = vand.u32 %v1107, 4294901760
    %v3881 = vsub.f32 %v1107, %v3880
    %v3882 = vand.u32 %v3881, 4294901760
    %v3883 = vsub.f32 %v3881, %v3882
    %v3884 = vand.u32 %v3883, 4294901760
    %3885 = vmatmul.f32.gmra.mxu0 %v3884
    %v3886 = vpop.f32.mrf.mxu0
    %v3887 = vadd.f32 %v3842, %v3886
    %v3888 = vand.u32 %v1115, 4294901760
    %v3889 = vsub.f32 %v1115, %v3888
    %v3890 = vand.u32 %v3889, 4294901760
    %v3891 = vsub.f32 %v3889, %v3890
    %v3892 = vand.u32 %v3891, 4294901760
    %3893 = vmatmul.f32.gmra.mxu0 %v3892
    %v3894 = vpop.f32.mrf.mxu0
    %v3895 = vadd.f32 %v3846, %v3894
    %3896 = vdwg.mxu0
    %v3897 = vand.u32 %v1243, 4294901760
    %v3898 = vsub.f32 %v1243, %v3897
    %v3899 = vand.u32 %v3898, 4294901760
    %v3900 = vsub.f32 %v3898, %v3899
    %v3901 = vand.u32 %v3900, 4294901760
    %3902 = vmatpush.msra.mxu0 %v3901
    %v3903 = vand.u32 %v1242, 4294901760
    %v3904 = vsub.f32 %v1242, %v3903
    %v3905 = vand.u32 %v3904, 4294901760
    %v3906 = vsub.f32 %v3904, %v3905
    %v3907 = vand.u32 %v3906, 4294901760
    %3908 = vmatpush.msra.mxu0 %v3907
    %v3909 = vand.u32 %v1241, 4294901760
    %v3910 = vsub.f32 %v1241, %v3909
    %v3911 = vand.u32 %v3910, 4294901760
    %v3912 = vsub.f32 %v3910, %v3911
    %v3913 = vand.u32 %v3912, 4294901760
    %3914 = vmatpush.msra.mxu0 %v3913
    %v3915 = vand.u32 %v1240, 4294901760
    %v3916 = vsub.f32 %v1240, %v3915
    %v3917 = vand.u32 %v3916, 4294901760
    %v3918 = vsub.f32 %v3916, %v3917
    %v3919 = vand.u32 %v3918, 4294901760
    %3920 = vmatpush.msra.mxu0 %v3919
    %v3921 = vand.u32 %v1239, 4294901760
    %v3922 = vsub.f32 %v1239, %v3921
    %v3923 = vand.u32 %v3922, 4294901760
    %v3924 = vsub.f32 %v3922, %v3923
    %v3925 = vand.u32 %v3924, 4294901760
    %3926 = vmatpush.msra.mxu0 %v3925
    %v3927 = vand.u32 %v1238, 4294901760
    %v3928 = vsub.f32 %v1238, %v3927
    %v3929 = vand.u32 %v3928, 4294901760
    %v3930 = vsub.f32 %v3928, %v3929
    %v3931 = vand.u32 %v3930, 4294901760
    %3932 = vmatpush.msra.mxu0 %v3931
    %v3933 = vand.u32 %v1237, 4294901760
    %v3934 = vsub.f32 %v1237, %v3933
    %v3935 = vand.u32 %v3934, 4294901760
    %v3936 = vsub.f32 %v3934, %v3935
    %v3937 = vand.u32 %v3936, 4294901760
    %3938 = vmatpush.msra.mxu0 %v3937
    %v3939 = vand.u32 %v1236, 4294901760
    %v3940 = vsub.f32 %v1236, %v3939
    %v3941 = vand.u32 %v3940, 4294901760
    %v3942 = vsub.f32 %v3940, %v3941
    %v3943 = vand.u32 %v3942, 4294901760
    %3944 = vmatpush.msra.mxu0 %v3943
    %v3945 = vand.u32 %v1235, 4294901760
    %v3946 = vsub.f32 %v1235, %v3945
    %v3947 = vand.u32 %v3946, 4294901760
    %v3948 = vsub.f32 %v3946, %v3947
    %v3949 = vand.u32 %v3948, 4294901760
    %3950 = vmatpush.msra.mxu0 %v3949
    %v3951 = vand.u32 %v1234, 4294901760
    %v3952 = vsub.f32 %v1234, %v3951
    %v3953 = vand.u32 %v3952, 4294901760
    %v3954 = vsub.f32 %v3952, %v3953
    %v3955 = vand.u32 %v3954, 4294901760
    %3956 = vmatpush.msra.mxu0 %v3955
    %v3957 = vand.u32 %v1233, 4294901760
    %v3958 = vsub.f32 %v1233, %v3957
    %v3959 = vand.u32 %v3958, 4294901760
    %v3960 = vsub.f32 %v3958, %v3959
    %v3961 = vand.u32 %v3960, 4294901760
    %3962 = vmatpush.msra.mxu0 %v3961
    %v3963 = vand.u32 %v1232, 4294901760
    %v3964 = vsub.f32 %v1232, %v3963
    %v3965 = vand.u32 %v3964, 4294901760
    %v3966 = vsub.f32 %v3964, %v3965
    %v3967 = vand.u32 %v3966, 4294901760
    %3968 = vmatpush.msra.mxu0 %v3967
    %v3969 = vand.u32 %v1231, 4294901760
    %v3970 = vsub.f32 %v1231, %v3969
    %v3971 = vand.u32 %v3970, 4294901760
    %v3972 = vsub.f32 %v3970, %v3971
    %v3973 = vand.u32 %v3972, 4294901760
    %3974 = vmatpush.msra.mxu0 %v3973
    %v3975 = vand.u32 %v1230, 4294901760
    %v3976 = vsub.f32 %v1230, %v3975
    %v3977 = vand.u32 %v3976, 4294901760
    %v3978 = vsub.f32 %v3976, %v3977
    %v3979 = vand.u32 %v3978, 4294901760
    %3980 = vmatpush.msra.mxu0 %v3979
    %v3981 = vand.u32 %v1229, 4294901760
    %v3982 = vsub.f32 %v1229, %v3981
    %v3983 = vand.u32 %v3982, 4294901760
    %v3984 = vsub.f32 %v3982, %v3983
    %v3985 = vand.u32 %v3984, 4294901760
    %3986 = vmatpush.msra.mxu0 %v3985
    %v3987 = vand.u32 %v1228, 4294901760
    %v3988 = vsub.f32 %v1228, %v3987
    %v3989 = vand.u32 %v3988, 4294901760
    %v3990 = vsub.f32 %v3988, %v3989
    %v3991 = vand.u32 %v3990, 4294901760
    %3992 = vmatpush.msra.mxu0 %v3991
    %v3993 = vand.u32 %v1107, 4294901760
    %3994 = vmatmul.f32.gmra.mxu0 %v3993
    %v3995 = vpop.f32.mrf.mxu0
    %v3996 = vadd.f32 %v3887, %v3995
    %v3997 = vand.u32 %v1115, 4294901760
    %3998 = vmatmul.f32.gmra.mxu0 %v3997
    %v3999 = vpop.f32.mrf.mxu0
    %v4000 = vadd.f32 %v3895, %v3999
    %4001 = vdwg.mxu0
    %v4002 = vand.u32 %v1243, 4294901760
    %v4003 = vsub.f32 %v1243, %v4002
    %4004 = vmatpush.msra.mxu0 %v4003
    %v4005 = vand.u32 %v1242, 4294901760
    %v4006 = vsub.f32 %v1242, %v4005
    %4007 = vmatpush.msra.mxu0 %v4006
    %v4008 = vand.u32 %v1241, 4294901760
    %v4009 = vsub.f32 %v1241, %v4008
    %4010 = vmatpush.msra.mxu0 %v4009
    %v4011 = vand.u32 %v1240, 4294901760
    %v4012 = vsub.f32 %v1240, %v4011
    %4013 = vmatpush.msra.mxu0 %v4012
    %v4014 = vand.u32 %v1239, 4294901760
    %v4015 = vsub.f32 %v1239, %v4014
    %4016 = vmatpush.msra.mxu0 %v4015
    %v4017 = vand.u32 %v1238, 4294901760
    %v4018 = vsub.f32 %v1238, %v4017
    %4019 = vmatpush.msra.mxu0 %v4018
    %v4020 = vand.u32 %v1237, 4294901760
    %v4021 = vsub.f32 %v1237, %v4020
    %4022 = vmatpush.msra.mxu0 %v4021
    %v4023 = vand.u32 %v1236, 4294901760
    %v4024 = vsub.f32 %v1236, %v4023
    %4025 = vmatpush.msra.mxu0 %v4024
    %v4026 = vand.u32 %v1235, 4294901760
    %v4027 = vsub.f32 %v1235, %v4026
    %4028 = vmatpush.msra.mxu0 %v4027
    %v4029 = vand.u32 %v1234, 4294901760
    %v4030 = vsub.f32 %v1234, %v4029
    %4031 = vmatpush.msra.mxu0 %v4030
    %v4032 = vand.u32 %v1233, 4294901760
    %v4033 = vsub.f32 %v1233, %v4032
    %4034 = vmatpush.msra.mxu0 %v4033
    %v4035 = vand.u32 %v1232, 4294901760
    %v4036 = vsub.f32 %v1232, %v4035
    %4037 = vmatpush.msra.mxu0 %v4036
    %v4038 = vand.u32 %v1231, 4294901760
    %v4039 = vsub.f32 %v1231, %v4038
    %4040 = vmatpush.msra.mxu0 %v4039
    %v4041 = vand.u32 %v1230, 4294901760
    %v4042 = vsub.f32 %v1230, %v4041
    %4043 = vmatpush.msra.mxu0 %v4042
    %v4044 = vand.u32 %v1229, 4294901760
    %v4045 = vsub.f32 %v1229, %v4044
    %4046 = vmatpush.msra.mxu0 %v4045
    %v4047 = vand.u32 %v1228, 4294901760
    %v4048 = vsub.f32 %v1228, %v4047
    %4049 = vmatpush.msra.mxu0 %v4048
    %v4050 = vand.u32 %v1107, 4294901760
    %v4051 = vsub.f32 %v1107, %v4050
    %4052 = vmatmul.f32.gmra.mxu0 %v4051
    %v4053 = vpop.f32.mrf.mxu0
    %v4054 = vadd.f32 %v3996, %v4053
    %v4055 = vand.u32 %v1115, 4294901760
    %v4056 = vsub.f32 %v1115, %v4055
    %4057 = vmatmul.f32.gmra.mxu0 %v4056
    %v4058 = vpop.f32.mrf.mxu0
    %v4059 = vadd.f32 %v4000, %v4058
    %4060 = vdwg.mxu0
    %v4061 = vand.u32 %v1243, 4294901760
    %4062 = vmatpush.msra.mxu0 %v4061
    %v4063 = vand.u32 %v1242, 4294901760
    %4064 = vmatpush.msra.mxu0 %v4063
    %v4065 = vand.u32 %v1241, 4294901760
    %4066 = vmatpush.msra.mxu0 %v4065
    %v4067 = vand.u32 %v1240, 4294901760
    %4068 = vmatpush.msra.mxu0 %v4067
    %v4069 = vand.u32 %v1239, 4294901760
    %4070 = vmatpush.msra.mxu0 %v4069
    %v4071 = vand.u32 %v1238, 4294901760
    %4072 = vmatpush.msra.mxu0 %v4071
    %v4073 = vand.u32 %v1237, 4294901760
    %4074 = vmatpush.msra.mxu0 %v4073
    %v4075 = vand.u32 %v1236, 4294901760
    %4076 = vmatpush.msra.mxu0 %v4075
    %v4077 = vand.u32 %v1235, 4294901760
    %4078 = vmatpush.msra.mxu0 %v4077
    %v4079 = vand.u32 %v1234, 4294901760
    %4080 = vmatpush.msra.mxu0 %v4079
    %v4081 = vand.u32 %v1233, 4294901760
    %4082 = vmatpush.msra.mxu0 %v4081
    %v4083 = vand.u32 %v1232, 4294901760
    %4084 = vmatpush.msra.mxu0 %v4083
    %v4085 = vand.u32 %v1231, 4294901760
    %4086 = vmatpush.msra.mxu0 %v4085
    %v4087 = vand.u32 %v1230, 4294901760
    %4088 = vmatpush.msra.mxu0 %v4087
    %v4089 = vand.u32 %v1229, 4294901760
    %4090 = vmatpush.msra.mxu0 %v4089
    %v4091 = vand.u32 %v1228, 4294901760
    %4092 = vmatpush.msra.mxu0 %v4091
    %v4093 = vand.u32 %v1107, 4294901760
    %v4094 = vsub.f32 %v1107, %v4093
    %v4095 = vand.u32 %v4094, 4294901760
    %4096 = vmatmul.f32.gmra.mxu0 %v4095
    %v4097 = vpop.f32.mrf.mxu0
    %v4098 = vadd.f32 %v4054, %v4097
    %v4099 = vand.u32 %v1115, 4294901760
    %v4100 = vsub.f32 %v1115, %v4099
    %v4101 = vand.u32 %v4100, 4294901760
    %4102 = vmatmul.f32.gmra.mxu0 %v4101
    %v4103 = vpop.f32.mrf.mxu0
    %v4104 = vadd.f32 %v4059, %v4103
    %4105 = vdwg.mxu0
    %v4106 = vand.u32 %v1243, 4294901760
    %v4107 = vsub.f32 %v1243, %v4106
    %v4108 = vand.u32 %v4107, 4294901760
    %4109 = vmatpush.msra.mxu0 %v4108
    %v4110 = vand.u32 %v1242, 4294901760
    %v4111 = vsub.f32 %v1242, %v4110
    %v4112 = vand.u32 %v4111, 4294901760
    %4113 = vmatpush.msra.mxu0 %v4112
    %v4114 = vand.u32 %v1241, 4294901760
    %v4115 = vsub.f32 %v1241, %v4114
    %v4116 = vand.u32 %v4115, 4294901760
    %4117 = vmatpush.msra.mxu0 %v4116
    %v4118 = vand.u32 %v1240, 4294901760
    %v4119 = vsub.f32 %v1240, %v4118
    %v4120 = vand.u32 %v4119, 4294901760
    %4121 = vmatpush.msra.mxu0 %v4120
    %v4122 = vand.u32 %v1239, 4294901760
    %v4123 = vsub.f32 %v1239, %v4122
    %v4124 = vand.u32 %v4123, 4294901760
    %4125 = vmatpush.msra.mxu0 %v4124
    %v4126 = vand.u32 %v1238, 4294901760
    %v4127 = vsub.f32 %v1238, %v4126
    %v4128 = vand.u32 %v4127, 4294901760
    %4129 = vmatpush.msra.mxu0 %v4128
    %v4130 = vand.u32 %v1237, 4294901760
    %v4131 = vsub.f32 %v1237, %v4130
    %v4132 = vand.u32 %v4131, 4294901760
    %4133 = vmatpush.msra.mxu0 %v4132
    %v4134 = vand.u32 %v1236, 4294901760
    %v4135 = vsub.f32 %v1236, %v4134
    %v4136 = vand.u32 %v4135, 4294901760
    %4137 = vmatpush.msra.mxu0 %v4136
    %v4138 = vand.u32 %v1235, 4294901760
    %v4139 = vsub.f32 %v1235, %v4138
    %v4140 = vand.u32 %v4139, 4294901760
    %4141 = vmatpush.msra.mxu0 %v4140
    %v4142 = vand.u32 %v1234, 4294901760
    %v4143 = vsub.f32 %v1234, %v4142
    %v4144 = vand.u32 %v4143, 4294901760
    %4145 = vmatpush.msra.mxu0 %v4144
    %v4146 = vand.u32 %v1233, 4294901760
    %v4147 = vsub.f32 %v1233, %v4146
    %v4148 = vand.u32 %v4147, 4294901760
    %4149 = vmatpush.msra.mxu0 %v4148
    %v4150 = vand.u32 %v1232, 4294901760
    %v4151 = vsub.f32 %v1232, %v4150
    %v4152 = vand.u32 %v4151, 4294901760
    %4153 = vmatpush.msra.mxu0 %v4152
    %v4154 = vand.u32 %v1231, 4294901760
    %v4155 = vsub.f32 %v1231, %v4154
    %v4156 = vand.u32 %v4155, 4294901760
    %4157 = vmatpush.msra.mxu0 %v4156
    %v4158 = vand.u32 %v1230, 4294901760
    %v4159 = vsub.f32 %v1230, %v4158
    %v4160 = vand.u32 %v4159, 4294901760
    %4161 = vmatpush.msra.mxu0 %v4160
    %v4162 = vand.u32 %v1229, 4294901760
    %v4163 = vsub.f32 %v1229, %v4162
    %v4164 = vand.u32 %v4163, 4294901760
    %4165 = vmatpush.msra.mxu0 %v4164
    %v4166 = vand.u32 %v1228, 4294901760
    %v4167 = vsub.f32 %v1228, %v4166
    %v4168 = vand.u32 %v4167, 4294901760
    %4169 = vmatpush.msra.mxu0 %v4168
    %v4170 = vand.u32 %v1107, 4294901760
    %4171 = vmatmul.f32.gmra.mxu0 %v4170
    %v4172 = vpop.f32.mrf.mxu0
    %v4173 = vadd.f32 %v4098, %v4172
    %v4174 = vand.u32 %v1115, 4294901760
    %4175 = vmatmul.f32.gmra.mxu0 %v4174
    %v4176 = vpop.f32.mrf.mxu0
    %v4177 = vadd.f32 %v4104, %v4176
    %4178 = vdwg.mxu0
    %v4179 = vand.u32 %v1243, 4294901760
    %4180 = vmatpush.msra.mxu0 %v4179
    %v4181 = vand.u32 %v1242, 4294901760
    %4182 = vmatpush.msra.mxu0 %v4181
    %v4183 = vand.u32 %v1241, 4294901760
    %4184 = vmatpush.msra.mxu0 %v4183
    %v4185 = vand.u32 %v1240, 4294901760
    %4186 = vmatpush.msra.mxu0 %v4185
    %v4187 = vand.u32 %v1239, 4294901760
    %4188 = vmatpush.msra.mxu0 %v4187
    %v4189 = vand.u32 %v1238, 4294901760
    %4190 = vmatpush.msra.mxu0 %v4189
    %v4191 = vand.u32 %v1237, 4294901760
    %4192 = vmatpush.msra.mxu0 %v4191
    %v4193 = vand.u32 %v1236, 4294901760
    %4194 = vmatpush.msra.mxu0 %v4193
    %v4195 = vand.u32 %v1235, 4294901760
    %4196 = vmatpush.msra.mxu0 %v4195
    %v4197 = vand.u32 %v1234, 4294901760
    %4198 = vmatpush.msra.mxu0 %v4197
    %v4199 = vand.u32 %v1233, 4294901760
    %4200 = vmatpush.msra.mxu0 %v4199
    %v4201 = vand.u32 %v1232, 4294901760
    %4202 = vmatpush.msra.mxu0 %v4201
    %v4203 = vand.u32 %v1231, 4294901760
    %4204 = vmatpush.msra.mxu0 %v4203
    %v4205 = vand.u32 %v1230, 4294901760
    %4206 = vmatpush.msra.mxu0 %v4205
    %v4207 = vand.u32 %v1229, 4294901760
    %4208 = vmatpush.msra.mxu0 %v4207
    %v4209 = vand.u32 %v1228, 4294901760
    %4210 = vmatpush.msra.mxu0 %v4209
    %v4211 = vand.u32 %v1107, 4294901760
    %4212 = vmatmul.f32.gmra.mxu0 %v4211
    %v4213 = vpop.f32.mrf.mxu0
    %v4214 = vadd.f32 %v4173, %v4213
    %v4215 = vand.u32 %v1115, 4294901760
    %4216 = vmatmul.f32.gmra.mxu0 %v4215
    %v4217 = vpop.f32.mrf.mxu0
    %v4218 = vadd.f32 %v4177, %v4217
    %4219 = vdwg.mxu0
    %vm4220 = vcmask 130048
    %4221 = vst.msk [vmem:[#allocation7] sm:$0xff] %vm4220, %v4214
    %4222 = vst.msk [vmem:[#allocation7 + $0x8] sm:$0xff] %vm4220, %v4218
    %v4223 = vld [vmem:[%s3] sm:$0xff]
    %v4224 = vld [vmem:[%s3 + $0x8] sm:$0xff]
    %v4225 = vlaneseq
    %v4226 = vand.u32 %v4225, 127
    %4227 = vset.pattern.permute.xlu0 0
    %4228 = vperm.xlu0 %4227, %v4223
    %v4229 = vpop.permute.xlu0 %4228
    %4230 = vset.pattern.permute.xlu0 0
    %4231 = vperm.xlu0 %4230, %v4224
    %v4232 = vpop.permute.xlu0 %4231
    %vm4233 = vcmp.eq.s32.totalorder %v4226, %v4229
    %vm4234 = vcmp.eq.s32.totalorder %v4226, %v4232
    %v4235 = vsel %vm4233, %v4214, 0.0
    %v4236 = vsel %vm4234, %v4218, 0.0
    %v4237 = vsel %vm4220, %v4235, 0.0
    %4238 = vadd.xlane.f32.xlu0 %v4237
    %v4239 = vpop.xlane.xlu0 %4238
    %v4240 = vsel %vm4220, %v4236, 0.0
    %4241 = vadd.xlane.f32.xlu0 %v4240
    %v4242 = vpop.xlane.xlu0 %4241
    %v4243 = vsel %vm4220, %v4214, -inf
    %4244 = vmax.xlane.f32.xlu0 %v4243
    %v4245 = vpop.xlane.xlu0 %4244
    %v4246 = vsel %vm4220, %v4218, -inf
    %4247 = vmax.xlane.f32.xlu0 %v4246
    %v4248 = vpop.xlane.xlu0 %4247
    %v4249 = vsub.f32 %v4214, %v4245
    %v4250 = vsub.f32 %v4218, %v4248
    %v4251 = vmul.f32 %v4249, 1.442695
    %v4252 = vpow.pop %v4251
    %v4253 = vmul.f32 %v4250, 1.442695
    %v4254 = vpow.pop %v4253
    %v4255 = vsel %vm4220, %v4252, 0.0
    %4256 = vadd.xlane.f32.xlu0 %v4255
    %v4257 = vpop.xlane.xlu0 %4256
    %v4258 = vsel %vm4220, %v4254, 0.0
    %4259 = vadd.xlane.f32.xlu0 %v4258
    %v4260 = vpop.xlane.xlu0 %4259
    %v4261 = vlog2.pop %v4257
    %v4262 = vmul.f32 %v4261, 0.6931472
    %v4263 = vlog2.pop %v4260
    %v4264 = vmul.f32 %v4263, 0.6931472
    %v4265 = vadd.f32 %v4245, %v4262
    %v4266 = vadd.f32 %v4248, %v4264
    %v4267 = vsub.f32 %v4265, %v4239
    %v4268 = vsub.f32 %v4266, %v4242
    %v4269 = vadd.f32 %v4267, %v4268
    %v4270 = vrot.slane %v4269, 4
    %v4271 = vadd.f32 %v4269, %v4270
    %v4272 = vrot.slane %v4271, 2
    %v4273 = vadd.f32 %v4271, %v4272
    %v4274 = vrot.slane %v4273, 1
    %v4275 = vadd.f32 %v4273, %v4274
    %v4276 = vmul.f32 %v4275, 0.0625
    %vm4277 = vcmask 0
    %4278 = vst.msk [vmem:[#allocation8] sm:$0x1] %vm4277, %v4276
    // Predicated region
    $region26: #{context_rnn_net_forward.1} parent=1 // pred_check
      _
    $region27: #{context_rnn_net_forward.1} parent=1 // pred_check_branch
      %4280 = sbr.rel (0) target = $region29
    $region28: #{context_rnn_net_forward.1} parent=1 // pred_region
      %4282 = vsyncadd [#allocation5], 0
      %s4283 = sshll.u32 [#allocation7], 4
      %s4284 = int_to_ptr.vmem [resolvable:$true] %s4283
      %s4285 = sshll.u32 %s5, 4
      %s4286 = int_to_ptr.hbm [resolvable:$true] %s4285
      %4291 = dma.vmem_to_hbm [thread:$0]  %s4284, 256, %s4286, [#allocation5], 128, 128, 8
    $region29: #{context_rnn_net_forward.1} parent=1 // pred_fallthru
      _
    // Predicated region
    $region30: #{context_rnn_net_forward.1} parent=1 // pred_check
      _
    $region31: #{context_rnn_net_forward.1} parent=1 // pred_check_branch
      %4293 = sbr.rel (0) target = $region33
    $region32: #{context_rnn_net_forward.1} parent=1 // pred_region
      %4295 = vsyncadd [#allocation9], 0
      %s4297 = sshll.u32 [#allocation8], 4
      %s4298 = int_to_ptr.vmem [resolvable:$true] %s4297
      %s4299 = sshll.u32 %s6, 4
      %s4300 = int_to_ptr.hbm [resolvable:$true] %s4299
      %4302 = dma.vmem_to_hbm [thread:$0]  %s4298, 16, %s4300, [#allocation9]
    $region33: #{context_rnn_net_forward.1} parent=1 // pred_fallthru
      _
    // Predicated region
    $region34: #{context_rnn_net_forward.1} parent=1 // pred_check
      _
    $region35: #{context_rnn_net_forward.1} parent=1 // pred_check_branch
      %4304 = sbr.rel (0) target = $region37
    $region36: #{context_rnn_net_forward.1} parent=1 // pred_region
      %4306 = dma.done [#allocation5], 256
    $region37: #{context_rnn_net_forward.1} parent=1 // pred_fallthru
      _
    // Predicated region
    $region38: #{context_rnn_net_forward.1} parent=1 // pred_check
      _
    $region39: #{context_rnn_net_forward.1} parent=1 // pred_check_branch
      %4308 = sbr.rel (0) target = $region41
    $region40: #{context_rnn_net_forward.1} parent=1 // pred_region
      %4310 = dma.done [#allocation9], 16
    $region41: #{context_rnn_net_forward.1} parent=1 // pred_fallthru
      _
    %4311 = vsyncpa [#allocation5], 1
    %4312 = vsyncpa [#allocation9], 1
    %4313 = vsyncpa [#allocation6], 1

</llo_original>
